<compile_context>
chip_gen: v7x
topology: tpu7x:2x2x1
jax: 0.10.0
libtpu: 0.0.40
codegen_flags: <defaults>
</compile_context>

<pallas_src>
import jax
import jax.numpy as jnp
from jax.experimental import pallas as pl
from jax.experimental.pallas import tpu as pltpu


def linear_kernel(x_ref, w_ref, b_ref, o_ref):
    # Cast to bf16 inside the kernel (no separate convert kernels upstream),
    # single K step: full reduction in one MXU call, f32 accumulation,
    # bias fused in the epilogue.
    x = x_ref[...].astype(jnp.bfloat16)
    w = w_ref[...].astype(jnp.bfloat16)
    acc = jnp.dot(x, w, preferred_element_type=jnp.float32)
    o_ref[...] = (acc + b_ref[...]).astype(o_ref.dtype)
    # Dropout(p=0.0) is the identity -> no-op.
    # TODO(synk): no PRNG/mask path for Dropout with p > 0 (module fixes p=0.0).


def linear_dropout(x, w, b, *, tn=None):
    """x: (..., K), w: (K, N), b: (N,). Returns (..., N) in x.dtype.

    Note: the MXU compute is done in bf16 (f32 accumulation); this is a
    documented precision contract vs. the f32 PyTorch Linear.
    """
    orig_shape = x.shape
    K = orig_shape[-1]
    N = w.shape[1]
    M = 1
    for d in orig_shape[:-1]:
        M *= d

    if tn is None:
        tn = N                               # single grid step: optimal on 1-TC chips
    assert N % tn == 0, "N must be divisible by tn"

    x2d = x.reshape(M, K)                    # metadata-only reshape, no copy
    b2d = b.reshape(1, N).astype(jnp.float32)

    itemsize = lambda a: jnp.dtype(a.dtype).itemsize
    cost = pl.CostEstimate(
        flops=2 * M * K * N,
        transcendentals=0,
        bytes_accessed=(M * K * itemsize(x) + K * N * itemsize(w)
                        + N * 4 + M * N * itemsize(x)),
    )

    out = pl.pallas_call(
        linear_kernel,
        out_shape=jax.ShapeDtypeStruct((M, N), x.dtype),
        grid_spec=pltpu.PrefetchScalarGridSpec(
            num_scalar_prefetch=0,
            grid=(N // tn,),                               # (1,) by default
            in_specs=[
                pl.BlockSpec((M, K), lambda n: (0, 0)),    # full x resident (196x2048 f32 ~1.6 MB)
                pl.BlockSpec((K, tn), lambda n: (0, n)),   # weight column tile (2048x512 f32 ~4 MB)
                pl.BlockSpec((1, tn), lambda n: (0, n)),   # bias tile
            ],
            out_specs=pl.BlockSpec((M, tn), lambda n: (0, n)),
        ),
        compiler_params=pltpu.CompilerParams(
            dimension_semantics=("parallel",),             # no-op at grid=(1,), harmless otherwise
        ),
        cost_estimate=cost,
    )(x2d, w, b2d)

    return out.reshape(*orig_shape[:-1], N)


if __name__ == "__main__":
    key = jax.random.PRNGKey(0)
    kx, kw, kb = jax.random.split(key, 3)

    IN_FEATURES = 2048
    OUT_FEATURES = 512

    # deterministic synthetic parameters (shapes match nn.Linear(2048, 512))
    bound = 1.0 / (IN_FEATURES ** 0.5)
    w = jax.random.uniform(
        kw, (IN_FEATURES, OUT_FEATURES), jnp.float32, -bound, bound
    )
    b = jax.random.uniform(kb, (OUT_FEATURES,), jnp.float32, -bound, bound)

    # input matching the module's forward: [1, 14, 14, 2048]
    x = jax.random.normal(kx, (1, 14, 14, IN_FEATURES), jnp.float32)

    y = linear_dropout(x, w, b)
    y = jax.block_until_ready(y)

    # reference with the same bf16 compute precision (f32 accumulation)
    ref = jnp.dot(
        x.reshape(-1, IN_FEATURES).astype(jnp.bfloat16),
        w.astype(jnp.bfloat16),
        preferred_element_type=jnp.float32,
    ) + b
    ref = ref.reshape(1, 14, 14, OUT_FEATURES)

    assert y.shape == (1, 14, 14, OUT_FEATURES)
    assert y.dtype == x.dtype
    assert jnp.allclose(y, ref, atol=2e-2, rtol=2e-2)

    print("KERNEL_OK")
</pallas_src>

<mosaic_0001>
module attributes {stable_mosaic.version = 11 : i64} {
  func.func @linear_kernel(%arg0: i32, %arg1: memref<196x2048xf32, #tpu.memory_space<vmem>>, %arg2: memref<2048x512xf32, #tpu.memory_space<vmem>>, %arg3: memref<1x512xf32, #tpu.memory_space<vmem>>, %arg4: memref<196x512xf32, #tpu.memory_space<vmem>>) attributes {dimension_semantics = [#tpu.dimension_semantics<parallel>], iteration_bounds = array<i64: 1>, scalar_prefetch = 0 : i64, scratch_operands = 0 : i64, tpu.core_type = #tpu.core_type<tc>, window_params = [{pipeline_mode = #tpu.pipeline_mode<synchronous>, transform_indices = @transform_0, window_bounds = array<i64: 196, 2048>}, {transform_indices = @transform_1, window_bounds = array<i64: 2048, 512>}, {transform_indices = @transform_2, window_bounds = array<i64: 1, 512>}, {transform_indices = @transform_3, window_bounds = array<i64: 196, 512>}]} {
    %c0 = arith.constant 0 : index
    %c0_0 = arith.constant 0 : index
    %0 = vector.load %arg1[%c0, %c0_0] : memref<196x2048xf32, #tpu.memory_space<vmem>>, vector<196x2048xf32>
    %1 = arith.truncf %0 : vector<196x2048xf32> to vector<196x2048xbf16>
    %c0_1 = arith.constant 0 : index
    %c0_2 = arith.constant 0 : index
    %2 = vector.load %arg2[%c0_1, %c0_2] : memref<2048x512xf32, #tpu.memory_space<vmem>>, vector<2048x512xf32>
    %3 = arith.truncf %2 : vector<2048x512xf32> to vector<2048x512xbf16>
    %cst = arith.constant dense<0.000000e+00> : vector<196x512xf32>
    %4 = tpu.matmul %1, %3, %cst {dimension_numbers = #tpu.dot_dimension_numbers<[1], [0], [0], [1], [0, 0, 1, 1], [], []>} : vector<196x2048xbf16>, vector<2048x512xbf16>, vector<196x512xf32> -> vector<196x512xf32>
    %c0_3 = arith.constant 0 : index
    %c0_4 = arith.constant 0 : index
    %5 = vector.load %arg3[%c0_3, %c0_4] : memref<1x512xf32, #tpu.memory_space<vmem>>, vector<1x512xf32>
    %6 = vector.broadcast %5 : vector<1x512xf32> to vector<196x512xf32>
    %7 = arith.addf %4, %6 : vector<196x512xf32>
    %c0_5 = arith.constant 0 : index
    %c0_6 = arith.constant 0 : index
    %8 = vector.load %arg4[%c0_5, %c0_6] : memref<196x512xf32, #tpu.memory_space<vmem>>, vector<196x512xf32>
    tpu.vector_store %arg4[%c0_5, %c0_6], %7 {strides = array<i32>} : memref<196x512xf32, #tpu.memory_space<vmem>>, vector<196x512xf32>,
    return
  }
  func.func @transform_0(%arg0: i32) -> (i32, i32) {
    %c0_i32 = arith.constant 0 : i32
    %c0_i32_0 = arith.constant 0 : i32
    %c0_i32_1 = arith.constant 0 : i32
    return %c0_i32, %c0_i32_0 : i32, i32
  }
  func.func @transform_1(%arg0: i32) -> (i32, i32) {
    %c0_i32 = arith.constant 0 : i32
    %c0_i32_0 = arith.constant 0 : i32
    return %c0_i32, %arg0 : i32, i32
  }
  func.func @transform_2(%arg0: i32) -> (i32, i32) {
    %c0_i32 = arith.constant 0 : i32
    %c0_i32_0 = arith.constant 0 : i32
    return %c0_i32, %arg0 : i32, i32
  }
  func.func @transform_3(%arg0: i32) -> (i32, i32) {
    %c0_i32 = arith.constant 0 : i32
    %c0_i32_0 = arith.constant 0 : i32
    return %c0_i32, %arg0 : i32, i32
  }
}

</mosaic_0001>

<llo_original>
// kernel: tpu_custom_call.1
$region0: #{tpu_custom_call.1}
  #allocation0 [shape = 'u32[]', space=smem, size = 0x4, offset = 0x4, fixed_abs, tag = 'smem constant byte address 0x4 - core index']
  #allocation1 [shape = 'u32[144,128]{1,0:T(1,128)}', space=vmem, size = 0x12000, scoped, tag = 'internal scratch']
  %s0 = inlined_call_operand.hbm [shape: f32[196,2048], index: 0, kind: input, shape index: {}]
  %s1 = inlined_call_operand.hbm [shape: f32[2048,512], index: 1, kind: input, shape index: {}]
  %s2 = inlined_call_operand.hbm [shape: f32[1,512], index: 2, kind: input, shape index: {}]
  %s3 = inlined_call_operand.hbm [shape: f32[196,512], index: 3, kind: output, shape index: {}]
  %s4 = sld [smem:[#allocation0]]
  $region34: #{tpu_custom_call.1} parent=0
    _
  %s6 = ssub.s32 1, %s4
  %s7 = scalar_select 0, %s6, %s4
  $region1: #{tpu_custom_call.1} parent=0
    #allocation2 [shape = 'u8[1638400]{0}', space=vmem, size = 0x190000, scoped, tag = 'input window, operand 0, single buffered']
    #allocation3 [shape = 's32[1]{0}', space=sflag, size = 0x4, scoped, tag = 'scoped memory for tpu_custom_call.1']
    #allocation4 [shape = 's32[1]{0}', space=sflag, size = 0x4, scoped, tag = 'scoped memory for tpu_custom_call.1']
    #allocation5 [shape = 'u8[4194304]{0}', space=vmem, size = 0x400000, scoped, tag = 'input window, operand 1, single buffered']
    #allocation6 [shape = 's32[1]{0}', space=sflag, size = 0x4, scoped, tag = 'scoped memory for tpu_custom_call.1']
    #allocation7 [shape = 'u8[2048]{0}', space=vmem, size = 0x800, scoped, tag = 'input window, operand 2, single buffered']
    #allocation8 [shape = 'u8[409600]{0}', space=vmem, size = 0x64000, scoped, tag = 'output window, operand 0, single buffered']
    %8 = vsyncpa [#allocation3], 0
    %9 = vsyncpa [#allocation6], 0
    %10 = vsyncpa [#allocation4], 0
    // Predicated region
    $region2: #{tpu_custom_call.1} parent=1 // pred_check
      _
    $region3: #{tpu_custom_call.1} parent=1 // pred_check_branch
      %12 = sbr.rel (0) target = $region5
    $region4: #{tpu_custom_call.1} parent=1 // pred_region
      %s14 = ssub.s32 51200, 51200
      %15 = vsyncadd [#allocation3], %s14
      %s16 = sshll.u32 [#allocation2], 4
      %s17 = int_to_ptr.vmem [resolvable:$true] %s16
      %22 = dma.hbm_to_vmem [thread:$0]  %s0, 51200, %s17, [#allocation3], 2048, 2048, 128
    $region5: #{tpu_custom_call.1} parent=1 // pred_fallthru
      _
    // Predicated region
    $region6: #{tpu_custom_call.1} parent=1 // pred_check
      _
    $region7: #{tpu_custom_call.1} parent=1 // pred_check_branch
      %24 = sbr.rel (0) target = $region9
    $region8: #{tpu_custom_call.1} parent=1 // pred_region
      %s26 = ssub.s32 131072, 131072
      %27 = vsyncadd [#allocation6], %s26
      %s28 = sshll.u32 [#allocation5], 4
      %s29 = int_to_ptr.vmem [resolvable:$true] %s28
      %34 = dma.hbm_to_vmem [thread:$0]  %s1, 131072, %s29, [#allocation6], 512, 512, 32
    $region9: #{tpu_custom_call.1} parent=1 // pred_fallthru
      _
    // Predicated region
    $region10: #{tpu_custom_call.1} parent=1 // pred_check
      _
    $region11: #{tpu_custom_call.1} parent=1 // pred_check_branch
      %36 = sbr.rel (0) target = $region13
    $region12: #{tpu_custom_call.1} parent=1 // pred_region
      %s38 = ssub.s32 64, 64
      %39 = vsyncadd [#allocation6], %s38
      %s41 = sshll.u32 [#allocation7], 4
      %s42 = int_to_ptr.vmem [resolvable:$true] %s41
      %44 = dma.hbm_to_vmem [thread:$0]  %s2, 64, %s42, [#allocation6]
    $region13: #{tpu_custom_call.1} parent=1 // pred_fallthru
      _
    // Predicated region
    $region14: #{tpu_custom_call.1} parent=1 // pred_check
      _
    $region15: #{tpu_custom_call.1} parent=1 // pred_check_branch
      %46 = sbr.rel (0) target = $region17
    $region16: #{tpu_custom_call.1} parent=1 // pred_region
      %47 = dma.done [#allocation3], 51200
    $region17: #{tpu_custom_call.1} parent=1 // pred_fallthru
      _
    // Predicated region
    $region18: #{tpu_custom_call.1} parent=1 // pred_check
      _
    $region19: #{tpu_custom_call.1} parent=1 // pred_check_branch
      %49 = sbr.rel (0) target = $region21
    $region20: #{tpu_custom_call.1} parent=1 // pred_region
      %50 = dma.done [#allocation6], 131072
    $region21: #{tpu_custom_call.1} parent=1 // pred_fallthru
      _
    // Predicated region
    $region22: #{tpu_custom_call.1} parent=1 // pred_check
      _
    $region23: #{tpu_custom_call.1} parent=1 // pred_check_branch
      %52 = sbr.rel (0) target = $region25
    $region24: #{tpu_custom_call.1} parent=1 // pred_region
      %53 = dma.done [#allocation6], 64
    $region25: #{tpu_custom_call.1} parent=1 // pred_fallthru
      _
    %v54 = vld [vmem:[#allocation2] sm:$0xff]
    %v55 = vld [vmem:[#allocation2 + $0x8] sm:$0xff]
    %v56 = vld [vmem:[#allocation2 + $0x10] sm:$0xff]
    %v57 = vld [vmem:[#allocation2 + $0x18] sm:$0xff]
    %v58 = vld [vmem:[#allocation2 + $0x20] sm:$0xff]
    %v59 = vld [vmem:[#allocation2 + $0x28] sm:$0xff]
    %v60 = vld [vmem:[#allocation2 + $0x30] sm:$0xff]
    %v61 = vld [vmem:[#allocation2 + $0x38] sm:$0xff]
    %v62 = vld [vmem:[#allocation2 + $0x40] sm:$0xff]
    %v63 = vld [vmem:[#allocation2 + $0x48] sm:$0xff]
    %v64 = vld [vmem:[#allocation2 + $0x50] sm:$0xff]
    %v65 = vld [vmem:[#allocation2 + $0x58] sm:$0xff]
    %v66 = vld [vmem:[#allocation2 + $0x60] sm:$0xff]
    %v67 = vld [vmem:[#allocation2 + $0x68] sm:$0xff]
    %v68 = vld [vmem:[#allocation2 + $0x70] sm:$0xff]
    %v69 = vld [vmem:[#allocation2 + $0x78] sm:$0xff]
    %v70 = vld [vmem:[#allocation2 + $0x80] sm:$0xff]
    %v71 = vld [vmem:[#allocation2 + $0x88] sm:$0xff]
    %v72 = vld [vmem:[#allocation2 + $0x90] sm:$0xff]
    %v73 = vld [vmem:[#allocation2 + $0x98] sm:$0xff]
    %v74 = vld [vmem:[#allocation2 + $0xa0] sm:$0xff]
    %v75 = vld [vmem:[#allocation2 + $0xa8] sm:$0xff]
    %v76 = vld [vmem:[#allocation2 + $0xb0] sm:$0xff]
    %v77 = vld [vmem:[#allocation2 + $0xb8] sm:$0xff]
    %v78 = vld [vmem:[#allocation2 + $0xc0] sm:$0xff]
    %v79 = vld [vmem:[#allocation2 + $0xc8] sm:$0xff]
    %v80 = vld [vmem:[#allocation2 + $0xd0] sm:$0xff]
    %v81 = vld [vmem:[#allocation2 + $0xd8] sm:$0xff]
    %v82 = vld [vmem:[#allocation2 + $0xe0] sm:$0xff]
    %v83 = vld [vmem:[#allocation2 + $0xe8] sm:$0xff]
    %v84 = vld [vmem:[#allocation2 + $0xf0] sm:$0xff]
    %v85 = vld [vmem:[#allocation2 + $0xf8] sm:$0xff]
    %v86 = vld [vmem:[#allocation2 + $0x100] sm:$0xff]
    %v87 = vld [vmem:[#allocation2 + $0x108] sm:$0xff]
    %v88 = vld [vmem:[#allocation2 + $0x110] sm:$0xff]
    %v89 = vld [vmem:[#allocation2 + $0x118] sm:$0xff]
    %v90 = vld [vmem:[#allocation2 + $0x120] sm:$0xff]
    %v91 = vld [vmem:[#allocation2 + $0x128] sm:$0xff]
    %v92 = vld [vmem:[#allocation2 + $0x130] sm:$0xff]
    %v93 = vld [vmem:[#allocation2 + $0x138] sm:$0xff]
    %v94 = vld [vmem:[#allocation2 + $0x140] sm:$0xff]
    %v95 = vld [vmem:[#allocation2 + $0x148] sm:$0xff]
    %v96 = vld [vmem:[#allocation2 + $0x150] sm:$0xff]
    %v97 = vld [vmem:[#allocation2 + $0x158] sm:$0xff]
    %v98 = vld [vmem:[#allocation2 + $0x160] sm:$0xff]
    %v99 = vld [vmem:[#allocation2 + $0x168] sm:$0xff]
    %v100 = vld [vmem:[#allocation2 + $0x170] sm:$0xff]
    %v101 = vld [vmem:[#allocation2 + $0x178] sm:$0xff]
    %v102 = vld [vmem:[#allocation2 + $0x180] sm:$0xff]
    %v103 = vld [vmem:[#allocation2 + $0x188] sm:$0xff]
    %v104 = vld [vmem:[#allocation2 + $0x190] sm:$0xff]
    %v105 = vld [vmem:[#allocation2 + $0x198] sm:$0xff]
    %v106 = vld [vmem:[#allocation2 + $0x1a0] sm:$0xff]
    %v107 = vld [vmem:[#allocation2 + $0x1a8] sm:$0xff]
    %v108 = vld [vmem:[#allocation2 + $0x1b0] sm:$0xff]
    %v109 = vld [vmem:[#allocation2 + $0x1b8] sm:$0xff]
    %v110 = vld [vmem:[#allocation2 + $0x1c0] sm:$0xff]
    %v111 = vld [vmem:[#allocation2 + $0x1c8] sm:$0xff]
    %v112 = vld [vmem:[#allocation2 + $0x1d0] sm:$0xff]
    %v113 = vld [vmem:[#allocation2 + $0x1d8] sm:$0xff]
    %v114 = vld [vmem:[#allocation2 + $0x1e0] sm:$0xff]
    %v115 = vld [vmem:[#allocation2 + $0x1e8] sm:$0xff]
    %v116 = vld [vmem:[#allocation2 + $0x1f0] sm:$0xff]
    %v117 = vld [vmem:[#allocation2 + $0x1f8] sm:$0xff]
    %v118 = vld [vmem:[#allocation2 + $0x200] sm:$0xff]
    %v119 = vld [vmem:[#allocation2 + $0x208] sm:$0xff]
    %v120 = vld [vmem:[#allocation2 + $0x210] sm:$0xff]
    %v121 = vld [vmem:[#allocation2 + $0x218] sm:$0xff]
    %v122 = vld [vmem:[#allocation2 + $0x220] sm:$0xff]
    %v123 = vld [vmem:[#allocation2 + $0x228] sm:$0xff]
    %v124 = vld [vmem:[#allocation2 + $0x230] sm:$0xff]
    %v125 = vld [vmem:[#allocation2 + $0x238] sm:$0xff]
    %v126 = vld [vmem:[#allocation2 + $0x240] sm:$0xff]
    %v127 = vld [vmem:[#allocation2 + $0x248] sm:$0xff]
    %v128 = vld [vmem:[#allocation2 + $0x250] sm:$0xff]
    %v129 = vld [vmem:[#allocation2 + $0x258] sm:$0xff]
    %v130 = vld [vmem:[#allocation2 + $0x260] sm:$0xff]
    %v131 = vld [vmem:[#allocation2 + $0x268] sm:$0xff]
    %v132 = vld [vmem:[#allocation2 + $0x270] sm:$0xff]
    %v133 = vld [vmem:[#allocation2 + $0x278] sm:$0xff]
    %v134 = vld [vmem:[#allocation2 + $0x280] sm:$0xff]
    %v135 = vld [vmem:[#allocation2 + $0x288] sm:$0xff]
    %v136 = vld [vmem:[#allocation2 + $0x290] sm:$0xff]
    %v137 = vld [vmem:[#allocation2 + $0x298] sm:$0xff]
    %v138 = vld [vmem:[#allocation2 + $0x2a0] sm:$0xff]
    %v139 = vld [vmem:[#allocation2 + $0x2a8] sm:$0xff]
    %v140 = vld [vmem:[#allocation2 + $0x2b0] sm:$0xff]
    %v141 = vld [vmem:[#allocation2 + $0x2b8] sm:$0xff]
    %v142 = vld [vmem:[#allocation2 + $0x2c0] sm:$0xff]
    %v143 = vld [vmem:[#allocation2 + $0x2c8] sm:$0xff]
    %v144 = vld [vmem:[#allocation2 + $0x2d0] sm:$0xff]
    %v145 = vld [vmem:[#allocation2 + $0x2d8] sm:$0xff]
    %v146 = vld [vmem:[#allocation2 + $0x2e0] sm:$0xff]
    %v147 = vld [vmem:[#allocation2 + $0x2e8] sm:$0xff]
    %v148 = vld [vmem:[#allocation2 + $0x2f0] sm:$0xff]
    %v149 = vld [vmem:[#allocation2 + $0x2f8] sm:$0xff]
    %v150 = vld [vmem:[#allocation2 + $0x300] sm:$0xff]
    %v151 = vld [vmem:[#allocation2 + $0x308] sm:$0xff]
    %v152 = vld [vmem:[#allocation2 + $0x310] sm:$0xff]
    %v153 = vld [vmem:[#allocation2 + $0x318] sm:$0xff]
    %v154 = vld [vmem:[#allocation2 + $0x320] sm:$0xff]
    %v155 = vld [vmem:[#allocation2 + $0x328] sm:$0xff]
    %v156 = vld [vmem:[#allocation2 + $0x330] sm:$0xff]
    %v157 = vld [vmem:[#allocation2 + $0x338] sm:$0xff]
    %v158 = vld [vmem:[#allocation2 + $0x340] sm:$0xff]
    %v159 = vld [vmem:[#allocation2 + $0x348] sm:$0xff]
    %v160 = vld [vmem:[#allocation2 + $0x350] sm:$0xff]
    %v161 = vld [vmem:[#allocation2 + $0x358] sm:$0xff]
    %v162 = vld [vmem:[#allocation2 + $0x360] sm:$0xff]
    %v163 = vld [vmem:[#allocation2 + $0x368] sm:$0xff]
    %v164 = vld [vmem:[#allocation2 + $0x370] sm:$0xff]
    %v165 = vld [vmem:[#allocation2 + $0x378] sm:$0xff]
    %v166 = vld [vmem:[#allocation2 + $0x380] sm:$0xff]
    %v167 = vld [vmem:[#allocation2 + $0x388] sm:$0xff]
    %v168 = vld [vmem:[#allocation2 + $0x390] sm:$0xff]
    %v169 = vld [vmem:[#allocation2 + $0x398] sm:$0xff]
    %v170 = vld [vmem:[#allocation2 + $0x3a0] sm:$0xff]
    %v171 = vld [vmem:[#allocation2 + $0x3a8] sm:$0xff]
    %v172 = vld [vmem:[#allocation2 + $0x3b0] sm:$0xff]
    %v173 = vld [vmem:[#allocation2 + $0x3b8] sm:$0xff]
    %v174 = vld [vmem:[#allocation2 + $0x3c0] sm:$0xff]
    %v175 = vld [vmem:[#allocation2 + $0x3c8] sm:$0xff]
    %v176 = vld [vmem:[#allocation2 + $0x3d0] sm:$0xff]
    %v177 = vld [vmem:[#allocation2 + $0x3d8] sm:$0xff]
    %v178 = vld [vmem:[#allocation2 + $0x3e0] sm:$0xff]
    %v179 = vld [vmem:[#allocation2 + $0x3e8] sm:$0xff]
    %v180 = vld [vmem:[#allocation2 + $0x3f0] sm:$0xff]
    %v181 = vld [vmem:[#allocation2 + $0x3f8] sm:$0xff]
    %v182 = vld [vmem:[#allocation2 + $0x400] sm:$0xff]
    %v183 = vld [vmem:[#allocation2 + $0x408] sm:$0xff]
    %v184 = vld [vmem:[#allocation2 + $0x410] sm:$0xff]
    %v185 = vld [vmem:[#allocation2 + $0x418] sm:$0xff]
    %v186 = vld [vmem:[#allocation2 + $0x420] sm:$0xff]
    %v187 = vld [vmem:[#allocation2 + $0x428] sm:$0xff]
    %v188 = vld [vmem:[#allocation2 + $0x430] sm:$0xff]
    %v189 = vld [vmem:[#allocation2 + $0x438] sm:$0xff]
    %v190 = vld [vmem:[#allocation2 + $0x440] sm:$0xff]
    %v191 = vld [vmem:[#allocation2 + $0x448] sm:$0xff]
    %v192 = vld [vmem:[#allocation2 + $0x450] sm:$0xff]
    %v193 = vld [vmem:[#allocation2 + $0x458] sm:$0xff]
    %v194 = vld [vmem:[#allocation2 + $0x460] sm:$0xff]
    %v195 = vld [vmem:[#allocation2 + $0x468] sm:$0xff]
    %v196 = vld [vmem:[#allocation2 + $0x470] sm:$0xff]
    %v197 = vld [vmem:[#allocation2 + $0x478] sm:$0xff]
    %v198 = vld [vmem:[#allocation2 + $0x480] sm:$0xff]
    %v199 = vld [vmem:[#allocation2 + $0x488] sm:$0xff]
    %v200 = vld [vmem:[#allocation2 + $0x490] sm:$0xff]
    %v201 = vld [vmem:[#allocation2 + $0x498] sm:$0xff]
    %v202 = vld [vmem:[#allocation2 + $0x4a0] sm:$0xff]
    %v203 = vld [vmem:[#allocation2 + $0x4a8] sm:$0xff]
    %v204 = vld [vmem:[#allocation2 + $0x4b0] sm:$0xff]
    %v205 = vld [vmem:[#allocation2 + $0x4b8] sm:$0xff]
    %v206 = vld [vmem:[#allocation2 + $0x4c0] sm:$0xff]
    %v207 = vld [vmem:[#allocation2 + $0x4c8] sm:$0xff]
    %v208 = vld [vmem:[#allocation2 + $0x4d0] sm:$0xff]
    %v209 = vld [vmem:[#allocation2 + $0x4d8] sm:$0xff]
    %v210 = vld [vmem:[#allocation2 + $0x4e0] sm:$0xff]
    %v211 = vld [vmem:[#allocation2 + $0x4e8] sm:$0xff]
    %v212 = vld [vmem:[#allocation2 + $0x4f0] sm:$0xff]
    %v213 = vld [vmem:[#allocation2 + $0x4f8] sm:$0xff]
    %v214 = vld [vmem:[#allocation2 + $0x500] sm:$0xff]
    %v215 = vld [vmem:[#allocation2 + $0x508] sm:$0xff]
    %v216 = vld [vmem:[#allocation2 + $0x510] sm:$0xff]
    %v217 = vld [vmem:[#allocation2 + $0x518] sm:$0xff]
    %v218 = vld [vmem:[#allocation2 + $0x520] sm:$0xff]
    %v219 = vld [vmem:[#allocation2 + $0x528] sm:$0xff]
    %v220 = vld [vmem:[#allocation2 + $0x530] sm:$0xff]
    %v221 = vld [vmem:[#allocation2 + $0x538] sm:$0xff]
    %v222 = vld [vmem:[#allocation2 + $0x540] sm:$0xff]
    %v223 = vld [vmem:[#allocation2 + $0x548] sm:$0xff]
    %v224 = vld [vmem:[#allocation2 + $0x550] sm:$0xff]
    %v225 = vld [vmem:[#allocation2 + $0x558] sm:$0xff]
    %v226 = vld [vmem:[#allocation2 + $0x560] sm:$0xff]
    %v227 = vld [vmem:[#allocation2 + $0x568] sm:$0xff]
    %v228 = vld [vmem:[#allocation2 + $0x570] sm:$0xff]
    %v229 = vld [vmem:[#allocation2 + $0x578] sm:$0xff]
    %v230 = vld [vmem:[#allocation2 + $0x580] sm:$0xff]
    %v231 = vld [vmem:[#allocation2 + $0x588] sm:$0xff]
    %v232 = vld [vmem:[#allocation2 + $0x590] sm:$0xff]
    %v233 = vld [vmem:[#allocation2 + $0x598] sm:$0xff]
    %v234 = vld [vmem:[#allocation2 + $0x5a0] sm:$0xff]
    %v235 = vld [vmem:[#allocation2 + $0x5a8] sm:$0xff]
    %v236 = vld [vmem:[#allocation2 + $0x5b0] sm:$0xff]
    %v237 = vld [vmem:[#allocation2 + $0x5b8] sm:$0xff]
    %v238 = vld [vmem:[#allocation2 + $0x5c0] sm:$0xff]
    %v239 = vld [vmem:[#allocation2 + $0x5c8] sm:$0xff]
    %v240 = vld [vmem:[#allocation2 + $0x5d0] sm:$0xff]
    %v241 = vld [vmem:[#allocation2 + $0x5d8] sm:$0xff]
    %v242 = vld [vmem:[#allocation2 + $0x5e0] sm:$0xff]
    %v243 = vld [vmem:[#allocation2 + $0x5e8] sm:$0xff]
    %v244 = vld [vmem:[#allocation2 + $0x5f0] sm:$0xff]
    %v245 = vld [vmem:[#allocation2 + $0x5f8] sm:$0xff]
    %v246 = vld [vmem:[#allocation2 + $0x600] sm:$0xff]
    %v247 = vld [vmem:[#allocation2 + $0x608] sm:$0xff]
    %v248 = vld [vmem:[#allocation2 + $0x610] sm:$0xff]
    %v249 = vld [vmem:[#allocation2 + $0x618] sm:$0xff]
    %v250 = vld [vmem:[#allocation2 + $0x620] sm:$0xff]
    %v251 = vld [vmem:[#allocation2 + $0x628] sm:$0xff]
    %v252 = vld [vmem:[#allocation2 + $0x630] sm:$0xff]
    %v253 = vld [vmem:[#allocation2 + $0x638] sm:$0xff]
    %v254 = vld [vmem:[#allocation2 + $0x640] sm:$0xff]
    %v255 = vld [vmem:[#allocation2 + $0x648] sm:$0xff]
    %v256 = vld [vmem:[#allocation2 + $0x650] sm:$0xff]
    %v257 = vld [vmem:[#allocation2 + $0x658] sm:$0xff]
    %v258 = vld [vmem:[#allocation2 + $0x660] sm:$0xff]
    %v259 = vld [vmem:[#allocation2 + $0x668] sm:$0xff]
    %v260 = vld [vmem:[#allocation2 + $0x670] sm:$0xff]
    %v261 = vld [vmem:[#allocation2 + $0x678] sm:$0xff]
    %v262 = vld [vmem:[#allocation2 + $0x680] sm:$0xff]
    %v263 = vld [vmem:[#allocation2 + $0x688] sm:$0xff]
    %v264 = vld [vmem:[#allocation2 + $0x690] sm:$0xff]
    %v265 = vld [vmem:[#allocation2 + $0x698] sm:$0xff]
    %v266 = vld [vmem:[#allocation2 + $0x6a0] sm:$0xff]
    %v267 = vld [vmem:[#allocation2 + $0x6a8] sm:$0xff]
    %v268 = vld [vmem:[#allocation2 + $0x6b0] sm:$0xff]
    %v269 = vld [vmem:[#allocation2 + $0x6b8] sm:$0xff]
    %v270 = vld [vmem:[#allocation2 + $0x6c0] sm:$0xff]
    %v271 = vld [vmem:[#allocation2 + $0x6c8] sm:$0xff]
    %v272 = vld [vmem:[#allocation2 + $0x6d0] sm:$0xff]
    %v273 = vld [vmem:[#allocation2 + $0x6d8] sm:$0xff]
    %v274 = vld [vmem:[#allocation2 + $0x6e0] sm:$0xff]
    %v275 = vld [vmem:[#allocation2 + $0x6e8] sm:$0xff]
    %v276 = vld [vmem:[#allocation2 + $0x6f0] sm:$0xff]
    %v277 = vld [vmem:[#allocation2 + $0x6f8] sm:$0xff]
    %v278 = vld [vmem:[#allocation2 + $0x700] sm:$0xff]
    %v279 = vld [vmem:[#allocation2 + $0x708] sm:$0xff]
    %v280 = vld [vmem:[#allocation2 + $0x710] sm:$0xff]
    %v281 = vld [vmem:[#allocation2 + $0x718] sm:$0xff]
    %v282 = vld [vmem:[#allocation2 + $0x720] sm:$0xff]
    %v283 = vld [vmem:[#allocation2 + $0x728] sm:$0xff]
    %v284 = vld [vmem:[#allocation2 + $0x730] sm:$0xff]
    %v285 = vld [vmem:[#allocation2 + $0x738] sm:$0xff]
    %v286 = vld [vmem:[#allocation2 + $0x740] sm:$0xff]
    %v287 = vld [vmem:[#allocation2 + $0x748] sm:$0xff]
    %v288 = vld [vmem:[#allocation2 + $0x750] sm:$0xff]
    %v289 = vld [vmem:[#allocation2 + $0x758] sm:$0xff]
    %v290 = vld [vmem:[#allocation2 + $0x760] sm:$0xff]
    %v291 = vld [vmem:[#allocation2 + $0x768] sm:$0xff]
    %v292 = vld [vmem:[#allocation2 + $0x770] sm:$0xff]
    %v293 = vld [vmem:[#allocation2 + $0x778] sm:$0xff]
    %v294 = vld [vmem:[#allocation2 + $0x780] sm:$0xff]
    %v295 = vld [vmem:[#allocation2 + $0x788] sm:$0xff]
    %v296 = vld [vmem:[#allocation2 + $0x790] sm:$0xff]
    %v297 = vld [vmem:[#allocation2 + $0x798] sm:$0xff]
    %v298 = vld [vmem:[#allocation2 + $0x7a0] sm:$0xff]
    %v299 = vld [vmem:[#allocation2 + $0x7a8] sm:$0xff]
    %v300 = vld [vmem:[#allocation2 + $0x7b0] sm:$0xff]
    %v301 = vld [vmem:[#allocation2 + $0x7b8] sm:$0xff]
    %v302 = vld [vmem:[#allocation2 + $0x7c0] sm:$0xff]
    %v303 = vld [vmem:[#allocation2 + $0x7c8] sm:$0xff]
    %v304 = vld [vmem:[#allocation2 + $0x7d0] sm:$0xff]
    %v305 = vld [vmem:[#allocation2 + $0x7d8] sm:$0xff]
    %v306 = vld [vmem:[#allocation2 + $0x7e0] sm:$0xff]
    %v307 = vld [vmem:[#allocation2 + $0x7e8] sm:$0xff]
    %v308 = vld [vmem:[#allocation2 + $0x7f0] sm:$0xff]
    %v309 = vld [vmem:[#allocation2 + $0x7f8] sm:$0xff]
    %v310 = vld [vmem:[#allocation2 + $0x800] sm:$0xff]
    %v311 = vld [vmem:[#allocation2 + $0x808] sm:$0xff]
    %v312 = vld [vmem:[#allocation2 + $0x810] sm:$0xff]
    %v313 = vld [vmem:[#allocation2 + $0x818] sm:$0xff]
    %v314 = vld [vmem:[#allocation2 + $0x820] sm:$0xff]
    %v315 = vld [vmem:[#allocation2 + $0x828] sm:$0xff]
    %v316 = vld [vmem:[#allocation2 + $0x830] sm:$0xff]
    %v317 = vld [vmem:[#allocation2 + $0x838] sm:$0xff]
    %v318 = vld [vmem:[#allocation2 + $0x840] sm:$0xff]
    %v319 = vld [vmem:[#allocation2 + $0x848] sm:$0xff]
    %v320 = vld [vmem:[#allocation2 + $0x850] sm:$0xff]
    %v321 = vld [vmem:[#allocation2 + $0x858] sm:$0xff]
    %v322 = vld [vmem:[#allocation2 + $0x860] sm:$0xff]
    %v323 = vld [vmem:[#allocation2 + $0x868] sm:$0xff]
    %v324 = vld [vmem:[#allocation2 + $0x870] sm:$0xff]
    %v325 = vld [vmem:[#allocation2 + $0x878] sm:$0xff]
    %v326 = vld [vmem:[#allocation2 + $0x880] sm:$0xff]
    %v327 = vld [vmem:[#allocation2 + $0x888] sm:$0xff]
    %v328 = vld [vmem:[#allocation2 + $0x890] sm:$0xff]
    %v329 = vld [vmem:[#allocation2 + $0x898] sm:$0xff]
    %v330 = vld [vmem:[#allocation2 + $0x8a0] sm:$0xff]
    %v331 = vld [vmem:[#allocation2 + $0x8a8] sm:$0xff]
    %v332 = vld [vmem:[#allocation2 + $0x8b0] sm:$0xff]
    %v333 = vld [vmem:[#allocation2 + $0x8b8] sm:$0xff]
    %v334 = vld [vmem:[#allocation2 + $0x8c0] sm:$0xff]
    %v335 = vld [vmem:[#allocation2 + $0x8c8] sm:$0xff]
    %v336 = vld [vmem:[#allocation2 + $0x8d0] sm:$0xff]
    %v337 = vld [vmem:[#allocation2 + $0x8d8] sm:$0xff]
    %v338 = vld [vmem:[#allocation2 + $0x8e0] sm:$0xff]
    %v339 = vld [vmem:[#allocation2 + $0x8e8] sm:$0xff]
    %v340 = vld [vmem:[#allocation2 + $0x8f0] sm:$0xff]
    %v341 = vld [vmem:[#allocation2 + $0x8f8] sm:$0xff]
    %v342 = vld [vmem:[#allocation2 + $0x900] sm:$0xff]
    %v343 = vld [vmem:[#allocation2 + $0x908] sm:$0xff]
    %v344 = vld [vmem:[#allocation2 + $0x910] sm:$0xff]
    %v345 = vld [vmem:[#allocation2 + $0x918] sm:$0xff]
    %v346 = vld [vmem:[#allocation2 + $0x920] sm:$0xff]
    %v347 = vld [vmem:[#allocation2 + $0x928] sm:$0xff]
    %v348 = vld [vmem:[#allocation2 + $0x930] sm:$0xff]
    %v349 = vld [vmem:[#allocation2 + $0x938] sm:$0xff]
    %v350 = vld [vmem:[#allocation2 + $0x940] sm:$0xff]
    %v351 = vld [vmem:[#allocation2 + $0x948] sm:$0xff]
    %v352 = vld [vmem:[#allocation2 + $0x950] sm:$0xff]
    %v353 = vld [vmem:[#allocation2 + $0x958] sm:$0xff]
    %v354 = vld [vmem:[#allocation2 + $0x960] sm:$0xff]
    %v355 = vld [vmem:[#allocation2 + $0x968] sm:$0xff]
    %v356 = vld [vmem:[#allocation2 + $0x970] sm:$0xff]
    %v357 = vld [vmem:[#allocation2 + $0x978] sm:$0xff]
    %v358 = vld [vmem:[#allocation2 + $0x980] sm:$0xff]
    %v359 = vld [vmem:[#allocation2 + $0x988] sm:$0xff]
    %v360 = vld [vmem:[#allocation2 + $0x990] sm:$0xff]
    %v361 = vld [vmem:[#allocation2 + $0x998] sm:$0xff]
    %v362 = vld [vmem:[#allocation2 + $0x9a0] sm:$0xff]
    %v363 = vld [vmem:[#allocation2 + $0x9a8] sm:$0xff]
    %v364 = vld [vmem:[#allocation2 + $0x9b0] sm:$0xff]
    %v365 = vld [vmem:[#allocation2 + $0x9b8] sm:$0xff]
    %v366 = vld [vmem:[#allocation2 + $0x9c0] sm:$0xff]
    %v367 = vld [vmem:[#allocation2 + $0x9c8] sm:$0xff]
    %v368 = vld [vmem:[#allocation2 + $0x9d0] sm:$0xff]
    %v369 = vld [vmem:[#allocation2 + $0x9d8] sm:$0xff]
    %v370 = vld [vmem:[#allocation2 + $0x9e0] sm:$0xff]
    %v371 = vld [vmem:[#allocation2 + $0x9e8] sm:$0xff]
    %v372 = vld [vmem:[#allocation2 + $0x9f0] sm:$0xff]
    %v373 = vld [vmem:[#allocation2 + $0x9f8] sm:$0xff]
    %v374 = vld [vmem:[#allocation2 + $0xa00] sm:$0xff]
    %v375 = vld [vmem:[#allocation2 + $0xa08] sm:$0xff]
    %v376 = vld [vmem:[#allocation2 + $0xa10] sm:$0xff]
    %v377 = vld [vmem:[#allocation2 + $0xa18] sm:$0xff]
    %v378 = vld [vmem:[#allocation2 + $0xa20] sm:$0xff]
    %v379 = vld [vmem:[#allocation2 + $0xa28] sm:$0xff]
    %v380 = vld [vmem:[#allocation2 + $0xa30] sm:$0xff]
    %v381 = vld [vmem:[#allocation2 + $0xa38] sm:$0xff]
    %v382 = vld [vmem:[#allocation2 + $0xa40] sm:$0xff]
    %v383 = vld [vmem:[#allocation2 + $0xa48] sm:$0xff]
    %v384 = vld [vmem:[#allocation2 + $0xa50] sm:$0xff]
    %v385 = vld [vmem:[#allocation2 + $0xa58] sm:$0xff]
    %v386 = vld [vmem:[#allocation2 + $0xa60] sm:$0xff]
    %v387 = vld [vmem:[#allocation2 + $0xa68] sm:$0xff]
    %v388 = vld [vmem:[#allocation2 + $0xa70] sm:$0xff]
    %v389 = vld [vmem:[#allocation2 + $0xa78] sm:$0xff]
    %v390 = vld [vmem:[#allocation2 + $0xa80] sm:$0xff]
    %v391 = vld [vmem:[#allocation2 + $0xa88] sm:$0xff]
    %v392 = vld [vmem:[#allocation2 + $0xa90] sm:$0xff]
    %v393 = vld [vmem:[#allocation2 + $0xa98] sm:$0xff]
    %v394 = vld [vmem:[#allocation2 + $0xaa0] sm:$0xff]
    %v395 = vld [vmem:[#allocation2 + $0xaa8] sm:$0xff]
    %v396 = vld [vmem:[#allocation2 + $0xab0] sm:$0xff]
    %v397 = vld [vmem:[#allocation2 + $0xab8] sm:$0xff]
    %v398 = vld [vmem:[#allocation2 + $0xac0] sm:$0xff]
    %v399 = vld [vmem:[#allocation2 + $0xac8] sm:$0xff]
    %v400 = vld [vmem:[#allocation2 + $0xad0] sm:$0xff]
    %v401 = vld [vmem:[#allocation2 + $0xad8] sm:$0xff]
    %v402 = vld [vmem:[#allocation2 + $0xae0] sm:$0xff]
    %v403 = vld [vmem:[#allocation2 + $0xae8] sm:$0xff]
    %v404 = vld [vmem:[#allocation2 + $0xaf0] sm:$0xff]
    %v405 = vld [vmem:[#allocation2 + $0xaf8] sm:$0xff]
    %v406 = vld [vmem:[#allocation2 + $0xb00] sm:$0xff]
    %v407 = vld [vmem:[#allocation2 + $0xb08] sm:$0xff]
    %v408 = vld [vmem:[#allocation2 + $0xb10] sm:$0xff]
    %v409 = vld [vmem:[#allocation2 + $0xb18] sm:$0xff]
    %v410 = vld [vmem:[#allocation2 + $0xb20] sm:$0xff]
    %v411 = vld [vmem:[#allocation2 + $0xb28] sm:$0xff]
    %v412 = vld [vmem:[#allocation2 + $0xb30] sm:$0xff]
    %v413 = vld [vmem:[#allocation2 + $0xb38] sm:$0xff]
    %v414 = vld [vmem:[#allocation2 + $0xb40] sm:$0xff]
    %v415 = vld [vmem:[#allocation2 + $0xb48] sm:$0xff]
    %v416 = vld [vmem:[#allocation2 + $0xb50] sm:$0xff]
    %v417 = vld [vmem:[#allocation2 + $0xb58] sm:$0xff]
    %v418 = vld [vmem:[#allocation2 + $0xb60] sm:$0xff]
    %v419 = vld [vmem:[#allocation2 + $0xb68] sm:$0xff]
    %v420 = vld [vmem:[#allocation2 + $0xb70] sm:$0xff]
    %v421 = vld [vmem:[#allocation2 + $0xb78] sm:$0xff]
    %v422 = vld [vmem:[#allocation2 + $0xb80] sm:$0xff]
    %v423 = vld [vmem:[#allocation2 + $0xb88] sm:$0xff]
    %v424 = vld [vmem:[#allocation2 + $0xb90] sm:$0xff]
    %v425 = vld [vmem:[#allocation2 + $0xb98] sm:$0xff]
    %v426 = vld [vmem:[#allocation2 + $0xba0] sm:$0xff]
    %v427 = vld [vmem:[#allocation2 + $0xba8] sm:$0xff]
    %v428 = vld [vmem:[#allocation2 + $0xbb0] sm:$0xff]
    %v429 = vld [vmem:[#allocation2 + $0xbb8] sm:$0xff]
    %v430 = vld [vmem:[#allocation2 + $0xbc0] sm:$0xff]
    %v431 = vld [vmem:[#allocation2 + $0xbc8] sm:$0xff]
    %v432 = vld [vmem:[#allocation2 + $0xbd0] sm:$0xff]
    %v433 = vld [vmem:[#allocation2 + $0xbd8] sm:$0xff]
    %v434 = vld [vmem:[#allocation2 + $0xbe0] sm:$0xff]
    %v435 = vld [vmem:[#allocation2 + $0xbe8] sm:$0xff]
    %v436 = vld [vmem:[#allocation2 + $0xbf0] sm:$0xff]
    %v437 = vld [vmem:[#allocation2 + $0xbf8] sm:$0xff]
    %v438 = vld [vmem:[#allocation2 + $0xc00] sm:$0xf]
    %v439 = vld [vmem:[#allocation2 + $0xc08] sm:$0xf]
    %v440 = vld [vmem:[#allocation2 + $0xc10] sm:$0xf]
    %v441 = vld [vmem:[#allocation2 + $0xc18] sm:$0xf]
    %v442 = vld [vmem:[#allocation2 + $0xc20] sm:$0xf]
    %v443 = vld [vmem:[#allocation2 + $0xc28] sm:$0xf]
    %v444 = vld [vmem:[#allocation2 + $0xc30] sm:$0xf]
    %v445 = vld [vmem:[#allocation2 + $0xc38] sm:$0xf]
    %v446 = vld [vmem:[#allocation2 + $0xc40] sm:$0xf]
    %v447 = vld [vmem:[#allocation2 + $0xc48] sm:$0xf]
    %v448 = vld [vmem:[#allocation2 + $0xc50] sm:$0xf]
    %v449 = vld [vmem:[#allocation2 + $0xc58] sm:$0xf]
    %v450 = vld [vmem:[#allocation2 + $0xc60] sm:$0xf]
    %v451 = vld [vmem:[#allocation2 + $0xc68] sm:$0xf]
    %v452 = vld [vmem:[#allocation2 + $0xc70] sm:$0xf]
    %v453 = vld [vmem:[#allocation2 + $0xc78] sm:$0xf]
    %v454 = vpack.c.bf16 %v70, %v54
    %v455 = vpack.c.bf16 %v71, %v55
    %v456 = vpack.c.bf16 %v72, %v56
    %v457 = vpack.c.bf16 %v73, %v57
    %v458 = vpack.c.bf16 %v74, %v58
    %v459 = vpack.c.bf16 %v75, %v59
    %v460 = vpack.c.bf16 %v76, %v60
    %v461 = vpack.c.bf16 %v77, %v61
    %v462 = vpack.c.bf16 %v78, %v62
    %v463 = vpack.c.bf16 %v79, %v63
    %v464 = vpack.c.bf16 %v80, %v64
    %v465 = vpack.c.bf16 %v81, %v65
    %v466 = vpack.c.bf16 %v82, %v66
    %v467 = vpack.c.bf16 %v83, %v67
    %v468 = vpack.c.bf16 %v84, %v68
    %v469 = vpack.c.bf16 %v85, %v69
    %v470 = vpack.c.bf16 %v102, %v86
    %v471 = vpack.c.bf16 %v103, %v87
    %v472 = vpack.c.bf16 %v104, %v88
    %v473 = vpack.c.bf16 %v105, %v89
    %v474 = vpack.c.bf16 %v106, %v90
    %v475 = vpack.c.bf16 %v107, %v91
    %v476 = vpack.c.bf16 %v108, %v92
    %v477 = vpack.c.bf16 %v109, %v93
    %v478 = vpack.c.bf16 %v110, %v94
    %v479 = vpack.c.bf16 %v111, %v95
    %v480 = vpack.c.bf16 %v112, %v96
    %v481 = vpack.c.bf16 %v113, %v97
    %v482 = vpack.c.bf16 %v114, %v98
    %v483 = vpack.c.bf16 %v115, %v99
    %v484 = vpack.c.bf16 %v116, %v100
    %v485 = vpack.c.bf16 %v117, %v101
    %v486 = vpack.c.bf16 %v134, %v118
    %v487 = vpack.c.bf16 %v135, %v119
    %v488 = vpack.c.bf16 %v136, %v120
    %v489 = vpack.c.bf16 %v137, %v121
    %v490 = vpack.c.bf16 %v138, %v122
    %v491 = vpack.c.bf16 %v139, %v123
    %v492 = vpack.c.bf16 %v140, %v124
    %v493 = vpack.c.bf16 %v141, %v125
    %v494 = vpack.c.bf16 %v142, %v126
    %v495 = vpack.c.bf16 %v143, %v127
    %v496 = vpack.c.bf16 %v144, %v128
    %v497 = vpack.c.bf16 %v145, %v129
    %v498 = vpack.c.bf16 %v146, %v130
    %v499 = vpack.c.bf16 %v147, %v131
    %v500 = vpack.c.bf16 %v148, %v132
    %v501 = vpack.c.bf16 %v149, %v133
    %v502 = vpack.c.bf16 %v166, %v150
    %v503 = vpack.c.bf16 %v167, %v151
    %v504 = vpack.c.bf16 %v168, %v152
    %v505 = vpack.c.bf16 %v169, %v153
    %v506 = vpack.c.bf16 %v170, %v154
    %v507 = vpack.c.bf16 %v171, %v155
    %v508 = vpack.c.bf16 %v172, %v156
    %v509 = vpack.c.bf16 %v173, %v157
    %v510 = vpack.c.bf16 %v174, %v158
    %v511 = vpack.c.bf16 %v175, %v159
    %v512 = vpack.c.bf16 %v176, %v160
    %v513 = vpack.c.bf16 %v177, %v161
    %v514 = vpack.c.bf16 %v178, %v162
    %v515 = vpack.c.bf16 %v179, %v163
    %v516 = vpack.c.bf16 %v180, %v164
    %v517 = vpack.c.bf16 %v181, %v165
    %v518 = vpack.c.bf16 %v198, %v182
    %v519 = vpack.c.bf16 %v199, %v183
    %v520 = vpack.c.bf16 %v200, %v184
    %v521 = vpack.c.bf16 %v201, %v185
    %v522 = vpack.c.bf16 %v202, %v186
    %v523 = vpack.c.bf16 %v203, %v187
    %v524 = vpack.c.bf16 %v204, %v188
    %v525 = vpack.c.bf16 %v205, %v189
    %v526 = vpack.c.bf16 %v206, %v190
    %v527 = vpack.c.bf16 %v207, %v191
    %v528 = vpack.c.bf16 %v208, %v192
    %v529 = vpack.c.bf16 %v209, %v193
    %v530 = vpack.c.bf16 %v210, %v194
    %v531 = vpack.c.bf16 %v211, %v195
    %v532 = vpack.c.bf16 %v212, %v196
    %v533 = vpack.c.bf16 %v213, %v197
    %v534 = vpack.c.bf16 %v230, %v214
    %v535 = vpack.c.bf16 %v231, %v215
    %v536 = vpack.c.bf16 %v232, %v216
    %v537 = vpack.c.bf16 %v233, %v217
    %v538 = vpack.c.bf16 %v234, %v218
    %v539 = vpack.c.bf16 %v235, %v219
    %v540 = vpack.c.bf16 %v236, %v220
    %v541 = vpack.c.bf16 %v237, %v221
    %v542 = vpack.c.bf16 %v238, %v222
    %v543 = vpack.c.bf16 %v239, %v223
    %v544 = vpack.c.bf16 %v240, %v224
    %v545 = vpack.c.bf16 %v241, %v225
    %v546 = vpack.c.bf16 %v242, %v226
    %v547 = vpack.c.bf16 %v243, %v227
    %v548 = vpack.c.bf16 %v244, %v228
    %v549 = vpack.c.bf16 %v245, %v229
    %v550 = vpack.c.bf16 %v262, %v246
    %v551 = vpack.c.bf16 %v263, %v247
    %v552 = vpack.c.bf16 %v264, %v248
    %v553 = vpack.c.bf16 %v265, %v249
    %v554 = vpack.c.bf16 %v266, %v250
    %v555 = vpack.c.bf16 %v267, %v251
    %v556 = vpack.c.bf16 %v268, %v252
    %v557 = vpack.c.bf16 %v269, %v253
    %v558 = vpack.c.bf16 %v270, %v254
    %v559 = vpack.c.bf16 %v271, %v255
    %v560 = vpack.c.bf16 %v272, %v256
    %v561 = vpack.c.bf16 %v273, %v257
    %v562 = vpack.c.bf16 %v274, %v258
    %v563 = vpack.c.bf16 %v275, %v259
    %v564 = vpack.c.bf16 %v276, %v260
    %v565 = vpack.c.bf16 %v277, %v261
    %v566 = vpack.c.bf16 %v294, %v278
    %v567 = vpack.c.bf16 %v295, %v279
    %v568 = vpack.c.bf16 %v296, %v280
    %v569 = vpack.c.bf16 %v297, %v281
    %v570 = vpack.c.bf16 %v298, %v282
    %v571 = vpack.c.bf16 %v299, %v283
    %v572 = vpack.c.bf16 %v300, %v284
    %v573 = vpack.c.bf16 %v301, %v285
    %v574 = vpack.c.bf16 %v302, %v286
    %v575 = vpack.c.bf16 %v303, %v287
    %v576 = vpack.c.bf16 %v304, %v288
    %v577 = vpack.c.bf16 %v305, %v289
    %v578 = vpack.c.bf16 %v306, %v290
    %v579 = vpack.c.bf16 %v307, %v291
    %v580 = vpack.c.bf16 %v308, %v292
    %v581 = vpack.c.bf16 %v309, %v293
    %v582 = vpack.c.bf16 %v326, %v310
    %v583 = vpack.c.bf16 %v327, %v311
    %v584 = vpack.c.bf16 %v328, %v312
    %v585 = vpack.c.bf16 %v329, %v313
    %v586 = vpack.c.bf16 %v330, %v314
    %v587 = vpack.c.bf16 %v331, %v315
    %v588 = vpack.c.bf16 %v332, %v316
    %v589 = vpack.c.bf16 %v333, %v317
    %v590 = vpack.c.bf16 %v334, %v318
    %v591 = vpack.c.bf16 %v335, %v319
    %v592 = vpack.c.bf16 %v336, %v320
    %v593 = vpack.c.bf16 %v337, %v321
    %v594 = vpack.c.bf16 %v338, %v322
    %v595 = vpack.c.bf16 %v339, %v323
    %v596 = vpack.c.bf16 %v340, %v324
    %v597 = vpack.c.bf16 %v341, %v325
    %v598 = vpack.c.bf16 %v358, %v342
    %v599 = vpack.c.bf16 %v359, %v343
    %v600 = vpack.c.bf16 %v360, %v344
    %v601 = vpack.c.bf16 %v361, %v345
    %v602 = vpack.c.bf16 %v362, %v346
    %v603 = vpack.c.bf16 %v363, %v347
    %v604 = vpack.c.bf16 %v364, %v348
    %v605 = vpack.c.bf16 %v365, %v349
    %v606 = vpack.c.bf16 %v366, %v350
    %v607 = vpack.c.bf16 %v367, %v351
    %v608 = vpack.c.bf16 %v368, %v352
    %v609 = vpack.c.bf16 %v369, %v353
    %v610 = vpack.c.bf16 %v370, %v354
    %v611 = vpack.c.bf16 %v371, %v355
    %v612 = vpack.c.bf16 %v372, %v356
    %v613 = vpack.c.bf16 %v373, %v357
    %v614 = vpack.c.bf16 %v390, %v374
    %v615 = vpack.c.bf16 %v391, %v375
    %v616 = vpack.c.bf16 %v392, %v376
    %v617 = vpack.c.bf16 %v393, %v377
    %v618 = vpack.c.bf16 %v394, %v378
    %v619 = vpack.c.bf16 %v395, %v379
    %v620 = vpack.c.bf16 %v396, %v380
    %v621 = vpack.c.bf16 %v397, %v381
    %v622 = vpack.c.bf16 %v398, %v382
    %v623 = vpack.c.bf16 %v399, %v383
    %v624 = vpack.c.bf16 %v400, %v384
    %v625 = vpack.c.bf16 %v401, %v385
    %v626 = vpack.c.bf16 %v402, %v386
    %v627 = vpack.c.bf16 %v403, %v387
    %v628 = vpack.c.bf16 %v404, %v388
    %v629 = vpack.c.bf16 %v405, %v389
    %v630 = vpack.c.bf16 %v422, %v406
    %v631 = vpack.c.bf16 %v423, %v407
    %v632 = vpack.c.bf16 %v424, %v408
    %v633 = vpack.c.bf16 %v425, %v409
    %v634 = vpack.c.bf16 %v426, %v410
    %v635 = vpack.c.bf16 %v427, %v411
    %v636 = vpack.c.bf16 %v428, %v412
    %v637 = vpack.c.bf16 %v429, %v413
    %v638 = vpack.c.bf16 %v430, %v414
    %v639 = vpack.c.bf16 %v431, %v415
    %v640 = vpack.c.bf16 %v432, %v416
    %v641 = vpack.c.bf16 %v433, %v417
    %v642 = vpack.c.bf16 %v434, %v418
    %v643 = vpack.c.bf16 %v435, %v419
    %v644 = vpack.c.bf16 %v436, %v420
    %v645 = vpack.c.bf16 %v437, %v421
    %v646 = vpack.c.bf16 %v438, %v438
    %v647 = vpack.c.bf16 %v439, %v439
    %v648 = vpack.c.bf16 %v440, %v440
    %v649 = vpack.c.bf16 %v441, %v441
    %v650 = vpack.c.bf16 %v442, %v442
    %v651 = vpack.c.bf16 %v443, %v443
    %v652 = vpack.c.bf16 %v444, %v444
    %v653 = vpack.c.bf16 %v445, %v445
    %v654 = vpack.c.bf16 %v446, %v446
    %v655 = vpack.c.bf16 %v447, %v447
    %v656 = vpack.c.bf16 %v448, %v448
    %v657 = vpack.c.bf16 %v449, %v449
    %v658 = vpack.c.bf16 %v450, %v450
    %v659 = vpack.c.bf16 %v451, %v451
    %v660 = vpack.c.bf16 %v452, %v452
    %v661 = vpack.c.bf16 %v453, %v453
    %v662 = vld [vmem:[#allocation5] sm:$0xff]
    %v663 = vld [vmem:[#allocation5 + $0x8] sm:$0xff]
    %v664 = vld [vmem:[#allocation5 + $0x10] sm:$0xff]
    %v665 = vld [vmem:[#allocation5 + $0x18] sm:$0xff]
    %v666 = vld [vmem:[#allocation5 + $0x20] sm:$0xff]
    %v667 = vld [vmem:[#allocation5 + $0x28] sm:$0xff]
    %v668 = vld [vmem:[#allocation5 + $0x30] sm:$0xff]
    %v669 = vld [vmem:[#allocation5 + $0x38] sm:$0xff]
    %v670 = vld [vmem:[#allocation5 + $0x40] sm:$0xff]
    %v671 = vld [vmem:[#allocation5 + $0x48] sm:$0xff]
    %v672 = vld [vmem:[#allocation5 + $0x50] sm:$0xff]
    %v673 = vld [vmem:[#allocation5 + $0x58] sm:$0xff]
    %v674 = vld [vmem:[#allocation5 + $0x60] sm:$0xff]
    %v675 = vld [vmem:[#allocation5 + $0x68] sm:$0xff]
    %v676 = vld [vmem:[#allocation5 + $0x70] sm:$0xff]
    %v677 = vld [vmem:[#allocation5 + $0x78] sm:$0xff]
    %v678 = vld [vmem:[#allocation5 + $0x80] sm:$0xff]
    %v679 = vld [vmem:[#allocation5 + $0x88] sm:$0xff]
    %v680 = vld [vmem:[#allocation5 + $0x90] sm:$0xff]
    %v681 = vld [vmem:[#allocation5 + $0x98] sm:$0xff]
    %v682 = vld [vmem:[#allocation5 + $0xa0] sm:$0xff]
    %v683 = vld [vmem:[#allocation5 + $0xa8] sm:$0xff]
    %v684 = vld [vmem:[#allocation5 + $0xb0] sm:$0xff]
    %v685 = vld [vmem:[#allocation5 + $0xb8] sm:$0xff]
    %v686 = vld [vmem:[#allocation5 + $0xc0] sm:$0xff]
    %v687 = vld [vmem:[#allocation5 + $0xc8] sm:$0xff]
    %v688 = vld [vmem:[#allocation5 + $0xd0] sm:$0xff]
    %v689 = vld [vmem:[#allocation5 + $0xd8] sm:$0xff]
    %v690 = vld [vmem:[#allocation5 + $0xe0] sm:$0xff]
    %v691 = vld [vmem:[#allocation5 + $0xe8] sm:$0xff]
    %v692 = vld [vmem:[#allocation5 + $0xf0] sm:$0xff]
    %v693 = vld [vmem:[#allocation5 + $0xf8] sm:$0xff]
    %v694 = vld [vmem:[#allocation5 + $0x100] sm:$0xff]
    %v695 = vld [vmem:[#allocation5 + $0x108] sm:$0xff]
    %v696 = vld [vmem:[#allocation5 + $0x110] sm:$0xff]
    %v697 = vld [vmem:[#allocation5 + $0x118] sm:$0xff]
    %v698 = vld [vmem:[#allocation5 + $0x120] sm:$0xff]
    %v699 = vld [vmem:[#allocation5 + $0x128] sm:$0xff]
    %v700 = vld [vmem:[#allocation5 + $0x130] sm:$0xff]
    %v701 = vld [vmem:[#allocation5 + $0x138] sm:$0xff]
    %v702 = vld [vmem:[#allocation5 + $0x140] sm:$0xff]
    %v703 = vld [vmem:[#allocation5 + $0x148] sm:$0xff]
    %v704 = vld [vmem:[#allocation5 + $0x150] sm:$0xff]
    %v705 = vld [vmem:[#allocation5 + $0x158] sm:$0xff]
    %v706 = vld [vmem:[#allocation5 + $0x160] sm:$0xff]
    %v707 = vld [vmem:[#allocation5 + $0x168] sm:$0xff]
    %v708 = vld [vmem:[#allocation5 + $0x170] sm:$0xff]
    %v709 = vld [vmem:[#allocation5 + $0x178] sm:$0xff]
    %v710 = vld [vmem:[#allocation5 + $0x180] sm:$0xff]
    %v711 = vld [vmem:[#allocation5 + $0x188] sm:$0xff]
    %v712 = vld [vmem:[#allocation5 + $0x190] sm:$0xff]
    %v713 = vld [vmem:[#allocation5 + $0x198] sm:$0xff]
    %v714 = vld [vmem:[#allocation5 + $0x1a0] sm:$0xff]
    %v715 = vld [vmem:[#allocation5 + $0x1a8] sm:$0xff]
    %v716 = vld [vmem:[#allocation5 + $0x1b0] sm:$0xff]
    %v717 = vld [vmem:[#allocation5 + $0x1b8] sm:$0xff]
    %v718 = vld [vmem:[#allocation5 + $0x1c0] sm:$0xff]
    %v719 = vld [vmem:[#allocation5 + $0x1c8] sm:$0xff]
    %v720 = vld [vmem:[#allocation5 + $0x1d0] sm:$0xff]
    %v721 = vld [vmem:[#allocation5 + $0x1d8] sm:$0xff]
    %v722 = vld [vmem:[#allocation5 + $0x1e0] sm:$0xff]
    %v723 = vld [vmem:[#allocation5 + $0x1e8] sm:$0xff]
    %v724 = vld [vmem:[#allocation5 + $0x1f0] sm:$0xff]
    %v725 = vld [vmem:[#allocation5 + $0x1f8] sm:$0xff]
    %v726 = vld [vmem:[#allocation5 + $0x200] sm:$0xff]
    %v727 = vld [vmem:[#allocation5 + $0x208] sm:$0xff]
    %v728 = vld [vmem:[#allocation5 + $0x210] sm:$0xff]
    %v729 = vld [vmem:[#allocation5 + $0x218] sm:$0xff]
    %v730 = vld [vmem:[#allocation5 + $0x220] sm:$0xff]
    %v731 = vld [vmem:[#allocation5 + $0x228] sm:$0xff]
    %v732 = vld [vmem:[#allocation5 + $0x230] sm:$0xff]
    %v733 = vld [vmem:[#allocation5 + $0x238] sm:$0xff]
    %v734 = vld [vmem:[#allocation5 + $0x240] sm:$0xff]
    %v735 = vld [vmem:[#allocation5 + $0x248] sm:$0xff]
    %v736 = vld [vmem:[#allocation5 + $0x250] sm:$0xff]
    %v737 = vld [vmem:[#allocation5 + $0x258] sm:$0xff]
    %v738 = vld [vmem:[#allocation5 + $0x260] sm:$0xff]
    %v739 = vld [vmem:[#allocation5 + $0x268] sm:$0xff]
    %v740 = vld [vmem:[#allocation5 + $0x270] sm:$0xff]
    %v741 = vld [vmem:[#allocation5 + $0x278] sm:$0xff]
    %v742 = vld [vmem:[#allocation5 + $0x280] sm:$0xff]
    %v743 = vld [vmem:[#allocation5 + $0x288] sm:$0xff]
    %v744 = vld [vmem:[#allocation5 + $0x290] sm:$0xff]
    %v745 = vld [vmem:[#allocation5 + $0x298] sm:$0xff]
    %v746 = vld [vmem:[#allocation5 + $0x2a0] sm:$0xff]
    %v747 = vld [vmem:[#allocation5 + $0x2a8] sm:$0xff]
    %v748 = vld [vmem:[#allocation5 + $0x2b0] sm:$0xff]
    %v749 = vld [vmem:[#allocation5 + $0x2b8] sm:$0xff]
    %v750 = vld [vmem:[#allocation5 + $0x2c0] sm:$0xff]
    %v751 = vld [vmem:[#allocation5 + $0x2c8] sm:$0xff]
    %v752 = vld [vmem:[#allocation5 + $0x2d0] sm:$0xff]
    %v753 = vld [vmem:[#allocation5 + $0x2d8] sm:$0xff]
    %v754 = vld [vmem:[#allocation5 + $0x2e0] sm:$0xff]
    %v755 = vld [vmem:[#allocation5 + $0x2e8] sm:$0xff]
    %v756 = vld [vmem:[#allocation5 + $0x2f0] sm:$0xff]
    %v757 = vld [vmem:[#allocation5 + $0x2f8] sm:$0xff]
    %v758 = vld [vmem:[#allocation5 + $0x300] sm:$0xff]
    %v759 = vld [vmem:[#allocation5 + $0x308] sm:$0xff]
    %v760 = vld [vmem:[#allocation5 + $0x310] sm:$0xff]
    %v761 = vld [vmem:[#allocation5 + $0x318] sm:$0xff]
    %v762 = vld [vmem:[#allocation5 + $0x320] sm:$0xff]
    %v763 = vld [vmem:[#allocation5 + $0x328] sm:$0xff]
    %v764 = vld [vmem:[#allocation5 + $0x330] sm:$0xff]
    %v765 = vld [vmem:[#allocation5 + $0x338] sm:$0xff]
    %v766 = vld [vmem:[#allocation5 + $0x340] sm:$0xff]
    %v767 = vld [vmem:[#allocation5 + $0x348] sm:$0xff]
    %v768 = vld [vmem:[#allocation5 + $0x350] sm:$0xff]
    %v769 = vld [vmem:[#allocation5 + $0x358] sm:$0xff]
    %v770 = vld [vmem:[#allocation5 + $0x360] sm:$0xff]
    %v771 = vld [vmem:[#allocation5 + $0x368] sm:$0xff]
    %v772 = vld [vmem:[#allocation5 + $0x370] sm:$0xff]
    %v773 = vld [vmem:[#allocation5 + $0x378] sm:$0xff]
    %v774 = vld [vmem:[#allocation5 + $0x380] sm:$0xff]
    %v775 = vld [vmem:[#allocation5 + $0x388] sm:$0xff]
    %v776 = vld [vmem:[#allocation5 + $0x390] sm:$0xff]
    %v777 = vld [vmem:[#allocation5 + $0x398] sm:$0xff]
    %v778 = vld [vmem:[#allocation5 + $0x3a0] sm:$0xff]
    %v779 = vld [vmem:[#allocation5 + $0x3a8] sm:$0xff]
    %v780 = vld [vmem:[#allocation5 + $0x3b0] sm:$0xff]
    %v781 = vld [vmem:[#allocation5 + $0x3b8] sm:$0xff]
    %v782 = vld [vmem:[#allocation5 + $0x3c0] sm:$0xff]
    %v783 = vld [vmem:[#allocation5 + $0x3c8] sm:$0xff]
    %v784 = vld [vmem:[#allocation5 + $0x3d0] sm:$0xff]
    %v785 = vld [vmem:[#allocation5 + $0x3d8] sm:$0xff]
    %v786 = vld [vmem:[#allocation5 + $0x3e0] sm:$0xff]
    %v787 = vld [vmem:[#allocation5 + $0x3e8] sm:$0xff]
    %v788 = vld [vmem:[#allocation5 + $0x3f0] sm:$0xff]
    %v789 = vld [vmem:[#allocation5 + $0x3f8] sm:$0xff]
    %v790 = vld [vmem:[#allocation5 + $0x400] sm:$0xff]
    %v791 = vld [vmem:[#allocation5 + $0x408] sm:$0xff]
    %v792 = vld [vmem:[#allocation5 + $0x410] sm:$0xff]
    %v793 = vld [vmem:[#allocation5 + $0x418] sm:$0xff]
    %v794 = vld [vmem:[#allocation5 + $0x420] sm:$0xff]
    %v795 = vld [vmem:[#allocation5 + $0x428] sm:$0xff]
    %v796 = vld [vmem:[#allocation5 + $0x430] sm:$0xff]
    %v797 = vld [vmem:[#allocation5 + $0x438] sm:$0xff]
    %v798 = vld [vmem:[#allocation5 + $0x440] sm:$0xff]
    %v799 = vld [vmem:[#allocation5 + $0x448] sm:$0xff]
    %v800 = vld [vmem:[#allocation5 + $0x450] sm:$0xff]
    %v801 = vld [vmem:[#allocation5 + $0x458] sm:$0xff]
    %v802 = vld [vmem:[#allocation5 + $0x460] sm:$0xff]
    %v803 = vld [vmem:[#allocation5 + $0x468] sm:$0xff]
    %v804 = vld [vmem:[#allocation5 + $0x470] sm:$0xff]
    %v805 = vld [vmem:[#allocation5 + $0x478] sm:$0xff]
    %v806 = vld [vmem:[#allocation5 + $0x480] sm:$0xff]
    %v807 = vld [vmem:[#allocation5 + $0x488] sm:$0xff]
    %v808 = vld [vmem:[#allocation5 + $0x490] sm:$0xff]
    %v809 = vld [vmem:[#allocation5 + $0x498] sm:$0xff]
    %v810 = vld [vmem:[#allocation5 + $0x4a0] sm:$0xff]
    %v811 = vld [vmem:[#allocation5 + $0x4a8] sm:$0xff]
    %v812 = vld [vmem:[#allocation5 + $0x4b0] sm:$0xff]
    %v813 = vld [vmem:[#allocation5 + $0x4b8] sm:$0xff]
    %v814 = vld [vmem:[#allocation5 + $0x4c0] sm:$0xff]
    %v815 = vld [vmem:[#allocation5 + $0x4c8] sm:$0xff]
    %v816 = vld [vmem:[#allocation5 + $0x4d0] sm:$0xff]
    %v817 = vld [vmem:[#allocation5 + $0x4d8] sm:$0xff]
    %v818 = vld [vmem:[#allocation5 + $0x4e0] sm:$0xff]
    %v819 = vld [vmem:[#allocation5 + $0x4e8] sm:$0xff]
    %v820 = vld [vmem:[#allocation5 + $0x4f0] sm:$0xff]
    %v821 = vld [vmem:[#allocation5 + $0x4f8] sm:$0xff]
    %v822 = vld [vmem:[#allocation5 + $0x500] sm:$0xff]
    %v823 = vld [vmem:[#allocation5 + $0x508] sm:$0xff]
    %v824 = vld [vmem:[#allocation5 + $0x510] sm:$0xff]
    %v825 = vld [vmem:[#allocation5 + $0x518] sm:$0xff]
    %v826 = vld [vmem:[#allocation5 + $0x520] sm:$0xff]
    %v827 = vld [vmem:[#allocation5 + $0x528] sm:$0xff]
    %v828 = vld [vmem:[#allocation5 + $0x530] sm:$0xff]
    %v829 = vld [vmem:[#allocation5 + $0x538] sm:$0xff]
    %v830 = vld [vmem:[#allocation5 + $0x540] sm:$0xff]
    %v831 = vld [vmem:[#allocation5 + $0x548] sm:$0xff]
    %v832 = vld [vmem:[#allocation5 + $0x550] sm:$0xff]
    %v833 = vld [vmem:[#allocation5 + $0x558] sm:$0xff]
    %v834 = vld [vmem:[#allocation5 + $0x560] sm:$0xff]
    %v835 = vld [vmem:[#allocation5 + $0x568] sm:$0xff]
    %v836 = vld [vmem:[#allocation5 + $0x570] sm:$0xff]
    %v837 = vld [vmem:[#allocation5 + $0x578] sm:$0xff]
    %v838 = vld [vmem:[#allocation5 + $0x580] sm:$0xff]
    %v839 = vld [vmem:[#allocation5 + $0x588] sm:$0xff]
    %v840 = vld [vmem:[#allocation5 + $0x590] sm:$0xff]
    %v841 = vld [vmem:[#allocation5 + $0x598] sm:$0xff]
    %v842 = vld [vmem:[#allocation5 + $0x5a0] sm:$0xff]
    %v843 = vld [vmem:[#allocation5 + $0x5a8] sm:$0xff]
    %v844 = vld [vmem:[#allocation5 + $0x5b0] sm:$0xff]
    %v845 = vld [vmem:[#allocation5 + $0x5b8] sm:$0xff]
    %v846 = vld [vmem:[#allocation5 + $0x5c0] sm:$0xff]
    %v847 = vld [vmem:[#allocation5 + $0x5c8] sm:$0xff]
    %v848 = vld [vmem:[#allocation5 + $0x5d0] sm:$0xff]
    %v849 = vld [vmem:[#allocation5 + $0x5d8] sm:$0xff]
    %v850 = vld [vmem:[#allocation5 + $0x5e0] sm:$0xff]
    %v851 = vld [vmem:[#allocation5 + $0x5e8] sm:$0xff]
    %v852 = vld [vmem:[#allocation5 + $0x5f0] sm:$0xff]
    %v853 = vld [vmem:[#allocation5 + $0x5f8] sm:$0xff]
    %v854 = vld [vmem:[#allocation5 + $0x600] sm:$0xff]
    %v855 = vld [vmem:[#allocation5 + $0x608] sm:$0xff]
    %v856 = vld [vmem:[#allocation5 + $0x610] sm:$0xff]
    %v857 = vld [vmem:[#allocation5 + $0x618] sm:$0xff]
    %v858 = vld [vmem:[#allocation5 + $0x620] sm:$0xff]
    %v859 = vld [vmem:[#allocation5 + $0x628] sm:$0xff]
    %v860 = vld [vmem:[#allocation5 + $0x630] sm:$0xff]
    %v861 = vld [vmem:[#allocation5 + $0x638] sm:$0xff]
    %v862 = vld [vmem:[#allocation5 + $0x640] sm:$0xff]
    %v863 = vld [vmem:[#allocation5 + $0x648] sm:$0xff]
    %v864 = vld [vmem:[#allocation5 + $0x650] sm:$0xff]
    %v865 = vld [vmem:[#allocation5 + $0x658] sm:$0xff]
    %v866 = vld [vmem:[#allocation5 + $0x660] sm:$0xff]
    %v867 = vld [vmem:[#allocation5 + $0x668] sm:$0xff]
    %v868 = vld [vmem:[#allocation5 + $0x670] sm:$0xff]
    %v869 = vld [vmem:[#allocation5 + $0x678] sm:$0xff]
    %v870 = vld [vmem:[#allocation5 + $0x680] sm:$0xff]
    %v871 = vld [vmem:[#allocation5 + $0x688] sm:$0xff]
    %v872 = vld [vmem:[#allocation5 + $0x690] sm:$0xff]
    %v873 = vld [vmem:[#allocation5 + $0x698] sm:$0xff]
    %v874 = vld [vmem:[#allocation5 + $0x6a0] sm:$0xff]
    %v875 = vld [vmem:[#allocation5 + $0x6a8] sm:$0xff]
    %v876 = vld [vmem:[#allocation5 + $0x6b0] sm:$0xff]
    %v877 = vld [vmem:[#allocation5 + $0x6b8] sm:$0xff]
    %v878 = vld [vmem:[#allocation5 + $0x6c0] sm:$0xff]
    %v879 = vld [vmem:[#allocation5 + $0x6c8] sm:$0xff]
    %v880 = vld [vmem:[#allocation5 + $0x6d0] sm:$0xff]
    %v881 = vld [vmem:[#allocation5 + $0x6d8] sm:$0xff]
    %v882 = vld [vmem:[#allocation5 + $0x6e0] sm:$0xff]
    %v883 = vld [vmem:[#allocation5 + $0x6e8] sm:$0xff]
    %v884 = vld [vmem:[#allocation5 + $0x6f0] sm:$0xff]
    %v885 = vld [vmem:[#allocation5 + $0x6f8] sm:$0xff]
    %v886 = vld [vmem:[#allocation5 + $0x700] sm:$0xff]
    %v887 = vld [vmem:[#allocation5 + $0x708] sm:$0xff]
    %v888 = vld [vmem:[#allocation5 + $0x710] sm:$0xff]
    %v889 = vld [vmem:[#allocation5 + $0x718] sm:$0xff]
    %v890 = vld [vmem:[#allocation5 + $0x720] sm:$0xff]
    %v891 = vld [vmem:[#allocation5 + $0x728] sm:$0xff]
    %v892 = vld [vmem:[#allocation5 + $0x730] sm:$0xff]
    %v893 = vld [vmem:[#allocation5 + $0x738] sm:$0xff]
    %v894 = vld [vmem:[#allocation5 + $0x740] sm:$0xff]
    %v895 = vld [vmem:[#allocation5 + $0x748] sm:$0xff]
    %v896 = vld [vmem:[#allocation5 + $0x750] sm:$0xff]
    %v897 = vld [vmem:[#allocation5 + $0x758] sm:$0xff]
    %v898 = vld [vmem:[#allocation5 + $0x760] sm:$0xff]
    %v899 = vld [vmem:[#allocation5 + $0x768] sm:$0xff]
    %v900 = vld [vmem:[#allocation5 + $0x770] sm:$0xff]
    %v901 = vld [vmem:[#allocation5 + $0x778] sm:$0xff]
    %v902 = vld [vmem:[#allocation5 + $0x780] sm:$0xff]
    %v903 = vld [vmem:[#allocation5 + $0x788] sm:$0xff]
    %v904 = vld [vmem:[#allocation5 + $0x790] sm:$0xff]
    %v905 = vld [vmem:[#allocation5 + $0x798] sm:$0xff]
    %v906 = vld [vmem:[#allocation5 + $0x7a0] sm:$0xff]
    %v907 = vld [vmem:[#allocation5 + $0x7a8] sm:$0xff]
    %v908 = vld [vmem:[#allocation5 + $0x7b0] sm:$0xff]
    %v909 = vld [vmem:[#allocation5 + $0x7b8] sm:$0xff]
    %v910 = vld [vmem:[#allocation5 + $0x7c0] sm:$0xff]
    %v911 = vld [vmem:[#allocation5 + $0x7c8] sm:$0xff]
    %v912 = vld [vmem:[#allocation5 + $0x7d0] sm:$0xff]
    %v913 = vld [vmem:[#allocation5 + $0x7d8] sm:$0xff]
    %v914 = vld [vmem:[#allocation5 + $0x7e0] sm:$0xff]
    %v915 = vld [vmem:[#allocation5 + $0x7e8] sm:$0xff]
    %v916 = vld [vmem:[#allocation5 + $0x7f0] sm:$0xff]
    %v917 = vld [vmem:[#allocation5 + $0x7f8] sm:$0xff]
    %v918 = vld [vmem:[#allocation5 + $0x800] sm:$0xff]
    %v919 = vld [vmem:[#allocation5 + $0x808] sm:$0xff]
    %v920 = vld [vmem:[#allocation5 + $0x810] sm:$0xff]
    %v921 = vld [vmem:[#allocation5 + $0x818] sm:$0xff]
    %v922 = vld [vmem:[#allocation5 + $0x820] sm:$0xff]
    %v923 = vld [vmem:[#allocation5 + $0x828] sm:$0xff]
    %v924 = vld [vmem:[#allocation5 + $0x830] sm:$0xff]
    %v925 = vld [vmem:[#allocation5 + $0x838] sm:$0xff]
    %v926 = vld [vmem:[#allocation5 + $0x840] sm:$0xff]
    %v927 = vld [vmem:[#allocation5 + $0x848] sm:$0xff]
    %v928 = vld [vmem:[#allocation5 + $0x850] sm:$0xff]
    %v929 = vld [vmem:[#allocation5 + $0x858] sm:$0xff]
    %v930 = vld [vmem:[#allocation5 + $0x860] sm:$0xff]
    %v931 = vld [vmem:[#allocation5 + $0x868] sm:$0xff]
    %v932 = vld [vmem:[#allocation5 + $0x870] sm:$0xff]
    %v933 = vld [vmem:[#allocation5 + $0x878] sm:$0xff]
    %v934 = vld [vmem:[#allocation5 + $0x880] sm:$0xff]
    %v935 = vld [vmem:[#allocation5 + $0x888] sm:$0xff]
    %v936 = vld [vmem:[#allocation5 + $0x890] sm:$0xff]
    %v937 = vld [vmem:[#allocation5 + $0x898] sm:$0xff]
    %v938 = vld [vmem:[#allocation5 + $0x8a0] sm:$0xff]
    %v939 = vld [vmem:[#allocation5 + $0x8a8] sm:$0xff]
    %v940 = vld [vmem:[#allocation5 + $0x8b0] sm:$0xff]
    %v941 = vld [vmem:[#allocation5 + $0x8b8] sm:$0xff]
    %v942 = vld [vmem:[#allocation5 + $0x8c0] sm:$0xff]
    %v943 = vld [vmem:[#allocation5 + $0x8c8] sm:$0xff]
    %v944 = vld [vmem:[#allocation5 + $0x8d0] sm:$0xff]
    %v945 = vld [vmem:[#allocation5 + $0x8d8] sm:$0xff]
    %v946 = vld [vmem:[#allocation5 + $0x8e0] sm:$0xff]
    %v947 = vld [vmem:[#allocation5 + $0x8e8] sm:$0xff]
    %v948 = vld [vmem:[#allocation5 + $0x8f0] sm:$0xff]
    %v949 = vld [vmem:[#allocation5 + $0x8f8] sm:$0xff]
    %v950 = vld [vmem:[#allocation5 + $0x900] sm:$0xff]
    %v951 = vld [vmem:[#allocation5 + $0x908] sm:$0xff]
    %v952 = vld [vmem:[#allocation5 + $0x910] sm:$0xff]
    %v953 = vld [vmem:[#allocation5 + $0x918] sm:$0xff]
    %v954 = vld [vmem:[#allocation5 + $0x920] sm:$0xff]
    %v955 = vld [vmem:[#allocation5 + $0x928] sm:$0xff]
    %v956 = vld [vmem:[#allocation5 + $0x930] sm:$0xff]
    %v957 = vld [vmem:[#allocation5 + $0x938] sm:$0xff]
    %v958 = vld [vmem:[#allocation5 + $0x940] sm:$0xff]
    %v959 = vld [vmem:[#allocation5 + $0x948] sm:$0xff]
    %v960 = vld [vmem:[#allocation5 + $0x950] sm:$0xff]
    %v961 = vld [vmem:[#allocation5 + $0x958] sm:$0xff]
    %v962 = vld [vmem:[#allocation5 + $0x960] sm:$0xff]
    %v963 = vld [vmem:[#allocation5 + $0x968] sm:$0xff]
    %v964 = vld [vmem:[#allocation5 + $0x970] sm:$0xff]
    %v965 = vld [vmem:[#allocation5 + $0x978] sm:$0xff]
    %v966 = vld [vmem:[#allocation5 + $0x980] sm:$0xff]
    %v967 = vld [vmem:[#allocation5 + $0x988] sm:$0xff]
    %v968 = vld [vmem:[#allocation5 + $0x990] sm:$0xff]
    %v969 = vld [vmem:[#allocation5 + $0x998] sm:$0xff]
    %v970 = vld [vmem:[#allocation5 + $0x9a0] sm:$0xff]
    %v971 = vld [vmem:[#allocation5 + $0x9a8] sm:$0xff]
    %v972 = vld [vmem:[#allocation5 + $0x9b0] sm:$0xff]
    %v973 = vld [vmem:[#allocation5 + $0x9b8] sm:$0xff]
    %v974 = vld [vmem:[#allocation5 + $0x9c0] sm:$0xff]
    %v975 = vld [vmem:[#allocation5 + $0x9c8] sm:$0xff]
    %v976 = vld [vmem:[#allocation5 + $0x9d0] sm:$0xff]
    %v977 = vld [vmem:[#allocation5 + $0x9d8] sm:$0xff]
    %v978 = vld [vmem:[#allocation5 + $0x9e0] sm:$0xff]
    %v979 = vld [vmem:[#allocation5 + $0x9e8] sm:$0xff]
    %v980 = vld [vmem:[#allocation5 + $0x9f0] sm:$0xff]
    %v981 = vld [vmem:[#allocation5 + $0x9f8] sm:$0xff]
    %v982 = vld [vmem:[#allocation5 + $0xa00] sm:$0xff]
    %v983 = vld [vmem:[#allocation5 + $0xa08] sm:$0xff]
    %v984 = vld [vmem:[#allocation5 + $0xa10] sm:$0xff]
    %v985 = vld [vmem:[#allocation5 + $0xa18] sm:$0xff]
    %v986 = vld [vmem:[#allocation5 + $0xa20] sm:$0xff]
    %v987 = vld [vmem:[#allocation5 + $0xa28] sm:$0xff]
    %v988 = vld [vmem:[#allocation5 + $0xa30] sm:$0xff]
    %v989 = vld [vmem:[#allocation5 + $0xa38] sm:$0xff]
    %v990 = vld [vmem:[#allocation5 + $0xa40] sm:$0xff]
    %v991 = vld [vmem:[#allocation5 + $0xa48] sm:$0xff]
    %v992 = vld [vmem:[#allocation5 + $0xa50] sm:$0xff]
    %v993 = vld [vmem:[#allocation5 + $0xa58] sm:$0xff]
    %v994 = vld [vmem:[#allocation5 + $0xa60] sm:$0xff]
    %v995 = vld [vmem:[#allocation5 + $0xa68] sm:$0xff]
    %v996 = vld [vmem:[#allocation5 + $0xa70] sm:$0xff]
    %v997 = vld [vmem:[#allocation5 + $0xa78] sm:$0xff]
    %v998 = vld [vmem:[#allocation5 + $0xa80] sm:$0xff]
    %v999 = vld [vmem:[#allocation5 + $0xa88] sm:$0xff]
    %v1000 = vld [vmem:[#allocation5 + $0xa90] sm:$0xff]
    %v1001 = vld [vmem:[#allocation5 + $0xa98] sm:$0xff]
    %v1002 = vld [vmem:[#allocation5 + $0xaa0] sm:$0xff]
    %v1003 = vld [vmem:[#allocation5 + $0xaa8] sm:$0xff]
    %v1004 = vld [vmem:[#allocation5 + $0xab0] sm:$0xff]
    %v1005 = vld [vmem:[#allocation5 + $0xab8] sm:$0xff]
    %v1006 = vld [vmem:[#allocation5 + $0xac0] sm:$0xff]
    %v1007 = vld [vmem:[#allocation5 + $0xac8] sm:$0xff]
    %v1008 = vld [vmem:[#allocation5 + $0xad0] sm:$0xff]
    %v1009 = vld [vmem:[#allocation5 + $0xad8] sm:$0xff]
    %v1010 = vld [vmem:[#allocation5 + $0xae0] sm:$0xff]
    %v1011 = vld [vmem:[#allocation5 + $0xae8] sm:$0xff]
    %v1012 = vld [vmem:[#allocation5 + $0xaf0] sm:$0xff]
    %v1013 = vld [vmem:[#allocation5 + $0xaf8] sm:$0xff]
    %v1014 = vld [vmem:[#allocation5 + $0xb00] sm:$0xff]
    %v1015 = vld [vmem:[#allocation5 + $0xb08] sm:$0xff]
    %v1016 = vld [vmem:[#allocation5 + $0xb10] sm:$0xff]
    %v1017 = vld [vmem:[#allocation5 + $0xb18] sm:$0xff]
    %v1018 = vld [vmem:[#allocation5 + $0xb20] sm:$0xff]
    %v1019 = vld [vmem:[#allocation5 + $0xb28] sm:$0xff]
    %v1020 = vld [vmem:[#allocation5 + $0xb30] sm:$0xff]
    %v1021 = vld [vmem:[#allocation5 + $0xb38] sm:$0xff]
    %v1022 = vld [vmem:[#allocation5 + $0xb40] sm:$0xff]
    %v1023 = vld [vmem:[#allocation5 + $0xb48] sm:$0xff]
    %v1024 = vld [vmem:[#allocation5 + $0xb50] sm:$0xff]
    %v1025 = vld [vmem:[#allocation5 + $0xb58] sm:$0xff]
    %v1026 = vld [vmem:[#allocation5 + $0xb60] sm:$0xff]
    %v1027 = vld [vmem:[#allocation5 + $0xb68] sm:$0xff]
    %v1028 = vld [vmem:[#allocation5 + $0xb70] sm:$0xff]
    %v1029 = vld [vmem:[#allocation5 + $0xb78] sm:$0xff]
    %v1030 = vld [vmem:[#allocation5 + $0xb80] sm:$0xff]
    %v1031 = vld [vmem:[#allocation5 + $0xb88] sm:$0xff]
    %v1032 = vld [vmem:[#allocation5 + $0xb90] sm:$0xff]
    %v1033 = vld [vmem:[#allocation5 + $0xb98] sm:$0xff]
    %v1034 = vld [vmem:[#allocation5 + $0xba0] sm:$0xff]
    %v1035 = vld [vmem:[#allocation5 + $0xba8] sm:$0xff]
    %v1036 = vld [vmem:[#allocation5 + $0xbb0] sm:$0xff]
    %v1037 = vld [vmem:[#allocation5 + $0xbb8] sm:$0xff]
    %v1038 = vld [vmem:[#allocation5 + $0xbc0] sm:$0xff]
    %v1039 = vld [vmem:[#allocation5 + $0xbc8] sm:$0xff]
    %v1040 = vld [vmem:[#allocation5 + $0xbd0] sm:$0xff]
    %v1041 = vld [vmem:[#allocation5 + $0xbd8] sm:$0xff]
    %v1042 = vld [vmem:[#allocation5 + $0xbe0] sm:$0xff]
    %v1043 = vld [vmem:[#allocation5 + $0xbe8] sm:$0xff]
    %v1044 = vld [vmem:[#allocation5 + $0xbf0] sm:$0xff]
    %v1045 = vld [vmem:[#allocation5 + $0xbf8] sm:$0xff]
    %v1046 = vld [vmem:[#allocation5 + $0xc00] sm:$0xff]
    %v1047 = vld [vmem:[#allocation5 + $0xc08] sm:$0xff]
    %v1048 = vld [vmem:[#allocation5 + $0xc10] sm:$0xff]
    %v1049 = vld [vmem:[#allocation5 + $0xc18] sm:$0xff]
    %v1050 = vld [vmem:[#allocation5 + $0xc20] sm:$0xff]
    %v1051 = vld [vmem:[#allocation5 + $0xc28] sm:$0xff]
    %v1052 = vld [vmem:[#allocation5 + $0xc30] sm:$0xff]
    %v1053 = vld [vmem:[#allocation5 + $0xc38] sm:$0xff]
    %v1054 = vld [vmem:[#allocation5 + $0xc40] sm:$0xff]
    %v1055 = vld [vmem:[#allocation5 + $0xc48] sm:$0xff]
    %v1056 = vld [vmem:[#allocation5 + $0xc50] sm:$0xff]
    %v1057 = vld [vmem:[#allocation5 + $0xc58] sm:$0xff]
    %v1058 = vld [vmem:[#allocation5 + $0xc60] sm:$0xff]
    %v1059 = vld [vmem:[#allocation5 + $0xc68] sm:$0xff]
    %v1060 = vld [vmem:[#allocation5 + $0xc70] sm:$0xff]
    %v1061 = vld [vmem:[#allocation5 + $0xc78] sm:$0xff]
    %v1062 = vld [vmem:[#allocation5 + $0xc80] sm:$0xff]
    %v1063 = vld [vmem:[#allocation5 + $0xc88] sm:$0xff]
    %v1064 = vld [vmem:[#allocation5 + $0xc90] sm:$0xff]
    %v1065 = vld [vmem:[#allocation5 + $0xc98] sm:$0xff]
    %v1066 = vld [vmem:[#allocation5 + $0xca0] sm:$0xff]
    %v1067 = vld [vmem:[#allocation5 + $0xca8] sm:$0xff]
    %v1068 = vld [vmem:[#allocation5 + $0xcb0] sm:$0xff]
    %v1069 = vld [vmem:[#allocation5 + $0xcb8] sm:$0xff]
    %v1070 = vld [vmem:[#allocation5 + $0xcc0] sm:$0xff]
    %v1071 = vld [vmem:[#allocation5 + $0xcc8] sm:$0xff]
    %v1072 = vld [vmem:[#allocation5 + $0xcd0] sm:$0xff]
    %v1073 = vld [vmem:[#allocation5 + $0xcd8] sm:$0xff]
    %v1074 = vld [vmem:[#allocation5 + $0xce0] sm:$0xff]
    %v1075 = vld [vmem:[#allocation5 + $0xce8] sm:$0xff]
    %v1076 = vld [vmem:[#allocation5 + $0xcf0] sm:$0xff]
    %v1077 = vld [vmem:[#allocation5 + $0xcf8] sm:$0xff]
    %v1078 = vld [vmem:[#allocation5 + $0xd00] sm:$0xff]
    %v1079 = vld [vmem:[#allocation5 + $0xd08] sm:$0xff]
    %v1080 = vld [vmem:[#allocation5 + $0xd10] sm:$0xff]
    %v1081 = vld [vmem:[#allocation5 + $0xd18] sm:$0xff]
    %v1082 = vld [vmem:[#allocation5 + $0xd20] sm:$0xff]
    %v1083 = vld [vmem:[#allocation5 + $0xd28] sm:$0xff]
    %v1084 = vld [vmem:[#allocation5 + $0xd30] sm:$0xff]
    %v1085 = vld [vmem:[#allocation5 + $0xd38] sm:$0xff]
    %v1086 = vld [vmem:[#allocation5 + $0xd40] sm:$0xff]
    %v1087 = vld [vmem:[#allocation5 + $0xd48] sm:$0xff]
    %v1088 = vld [vmem:[#allocation5 + $0xd50] sm:$0xff]
    %v1089 = vld [vmem:[#allocation5 + $0xd58] sm:$0xff]
    %v1090 = vld [vmem:[#allocation5 + $0xd60] sm:$0xff]
    %v1091 = vld [vmem:[#allocation5 + $0xd68] sm:$0xff]
    %v1092 = vld [vmem:[#allocation5 + $0xd70] sm:$0xff]
    %v1093 = vld [vmem:[#allocation5 + $0xd78] sm:$0xff]
    %v1094 = vld [vmem:[#allocation5 + $0xd80] sm:$0xff]
    %v1095 = vld [vmem:[#allocation5 + $0xd88] sm:$0xff]
    %v1096 = vld [vmem:[#allocation5 + $0xd90] sm:$0xff]
    %v1097 = vld [vmem:[#allocation5 + $0xd98] sm:$0xff]
    %v1098 = vld [vmem:[#allocation5 + $0xda0] sm:$0xff]
    %v1099 = vld [vmem:[#allocation5 + $0xda8] sm:$0xff]
    %v1100 = vld [vmem:[#allocation5 + $0xdb0] sm:$0xff]
    %v1101 = vld [vmem:[#allocation5 + $0xdb8] sm:$0xff]
    %v1102 = vld [vmem:[#allocation5 + $0xdc0] sm:$0xff]
    %v1103 = vld [vmem:[#allocation5 + $0xdc8] sm:$0xff]
    %v1104 = vld [vmem:[#allocation5 + $0xdd0] sm:$0xff]
    %v1105 = vld [vmem:[#allocation5 + $0xdd8] sm:$0xff]
    %v1106 = vld [vmem:[#allocation5 + $0xde0] sm:$0xff]
    %v1107 = vld [vmem:[#allocation5 + $0xde8] sm:$0xff]
    %v1108 = vld [vmem:[#allocation5 + $0xdf0] sm:$0xff]
    %v1109 = vld [vmem:[#allocation5 + $0xdf8] sm:$0xff]
    %v1110 = vld [vmem:[#allocation5 + $0xe00] sm:$0xff]
    %v1111 = vld [vmem:[#allocation5 + $0xe08] sm:$0xff]
    %v1112 = vld [vmem:[#allocation5 + $0xe10] sm:$0xff]
    %v1113 = vld [vmem:[#allocation5 + $0xe18] sm:$0xff]
    %v1114 = vld [vmem:[#allocation5 + $0xe20] sm:$0xff]
    %v1115 = vld [vmem:[#allocation5 + $0xe28] sm:$0xff]
    %v1116 = vld [vmem:[#allocation5 + $0xe30] sm:$0xff]
    %v1117 = vld [vmem:[#allocation5 + $0xe38] sm:$0xff]
    %v1118 = vld [vmem:[#allocation5 + $0xe40] sm:$0xff]
    %v1119 = vld [vmem:[#allocation5 + $0xe48] sm:$0xff]
    %v1120 = vld [vmem:[#allocation5 + $0xe50] sm:$0xff]
    %v1121 = vld [vmem:[#allocation5 + $0xe58] sm:$0xff]
    %v1122 = vld [vmem:[#allocation5 + $0xe60] sm:$0xff]
    %v1123 = vld [vmem:[#allocation5 + $0xe68] sm:$0xff]
    %v1124 = vld [vmem:[#allocation5 + $0xe70] sm:$0xff]
    %v1125 = vld [vmem:[#allocation5 + $0xe78] sm:$0xff]
    %v1126 = vld [vmem:[#allocation5 + $0xe80] sm:$0xff]
    %v1127 = vld [vmem:[#allocation5 + $0xe88] sm:$0xff]
    %v1128 = vld [vmem:[#allocation5 + $0xe90] sm:$0xff]
    %v1129 = vld [vmem:[#allocation5 + $0xe98] sm:$0xff]
    %v1130 = vld [vmem:[#allocation5 + $0xea0] sm:$0xff]
    %v1131 = vld [vmem:[#allocation5 + $0xea8] sm:$0xff]
    %v1132 = vld [vmem:[#allocation5 + $0xeb0] sm:$0xff]
    %v1133 = vld [vmem:[#allocation5 + $0xeb8] sm:$0xff]
    %v1134 = vld [vmem:[#allocation5 + $0xec0] sm:$0xff]
    %v1135 = vld [vmem:[#allocation5 + $0xec8] sm:$0xff]
    %v1136 = vld [vmem:[#allocation5 + $0xed0] sm:$0xff]
    %v1137 = vld [vmem:[#allocation5 + $0xed8] sm:$0xff]
    %v1138 = vld [vmem:[#allocation5 + $0xee0] sm:$0xff]
    %v1139 = vld [vmem:[#allocation5 + $0xee8] sm:$0xff]
    %v1140 = vld [vmem:[#allocation5 + $0xef0] sm:$0xff]
    %v1141 = vld [vmem:[#allocation5 + $0xef8] sm:$0xff]
    %v1142 = vld [vmem:[#allocation5 + $0xf00] sm:$0xff]
    %v1143 = vld [vmem:[#allocation5 + $0xf08] sm:$0xff]
    %v1144 = vld [vmem:[#allocation5 + $0xf10] sm:$0xff]
    %v1145 = vld [vmem:[#allocation5 + $0xf18] sm:$0xff]
    %v1146 = vld [vmem:[#allocation5 + $0xf20] sm:$0xff]
    %v1147 = vld [vmem:[#allocation5 + $0xf28] sm:$0xff]
    %v1148 = vld [vmem:[#allocation5 + $0xf30] sm:$0xff]
    %v1149 = vld [vmem:[#allocation5 + $0xf38] sm:$0xff]
    %v1150 = vld [vmem:[#allocation5 + $0xf40] sm:$0xff]
    %v1151 = vld [vmem:[#allocation5 + $0xf48] sm:$0xff]
    %v1152 = vld [vmem:[#allocation5 + $0xf50] sm:$0xff]
    %v1153 = vld [vmem:[#allocation5 + $0xf58] sm:$0xff]
    %v1154 = vld [vmem:[#allocation5 + $0xf60] sm:$0xff]
    %v1155 = vld [vmem:[#allocation5 + $0xf68] sm:$0xff]
    %v1156 = vld [vmem:[#allocation5 + $0xf70] sm:$0xff]
    %v1157 = vld [vmem:[#allocation5 + $0xf78] sm:$0xff]
    %v1158 = vld [vmem:[#allocation5 + $0xf80] sm:$0xff]
    %v1159 = vld [vmem:[#allocation5 + $0xf88] sm:$0xff]
    %v1160 = vld [vmem:[#allocation5 + $0xf90] sm:$0xff]
    %v1161 = vld [vmem:[#allocation5 + $0xf98] sm:$0xff]
    %v1162 = vld [vmem:[#allocation5 + $0xfa0] sm:$0xff]
    %v1163 = vld [vmem:[#allocation5 + $0xfa8] sm:$0xff]
    %v1164 = vld [vmem:[#allocation5 + $0xfb0] sm:$0xff]
    %v1165 = vld [vmem:[#allocation5 + $0xfb8] sm:$0xff]
    %v1166 = vld [vmem:[#allocation5 + $0xfc0] sm:$0xff]
    %v1167 = vld [vmem:[#allocation5 + $0xfc8] sm:$0xff]
    %v1168 = vld [vmem:[#allocation5 + $0xfd0] sm:$0xff]
    %v1169 = vld [vmem:[#allocation5 + $0xfd8] sm:$0xff]
    %v1170 = vld [vmem:[#allocation5 + $0xfe0] sm:$0xff]
    %v1171 = vld [vmem:[#allocation5 + $0xfe8] sm:$0xff]
    %v1172 = vld [vmem:[#allocation5 + $0xff0] sm:$0xff]
    %v1173 = vld [vmem:[#allocation5 + $0xff8] sm:$0xff]
    %v1174 = vld [vmem:[#allocation5 + $0x1000] sm:$0xff]
    %v1175 = vld [vmem:[#allocation5 + $0x1008] sm:$0xff]
    %v1176 = vld [vmem:[#allocation5 + $0x1010] sm:$0xff]
    %v1177 = vld [vmem:[#allocation5 + $0x1018] sm:$0xff]
    %v1178 = vld [vmem:[#allocation5 + $0x1020] sm:$0xff]
    %v1179 = vld [vmem:[#allocation5 + $0x1028] sm:$0xff]
    %v1180 = vld [vmem:[#allocation5 + $0x1030] sm:$0xff]
    %v1181 = vld [vmem:[#allocation5 + $0x1038] sm:$0xff]
    %v1182 = vld [vmem:[#allocation5 + $0x1040] sm:$0xff]
    %v1183 = vld [vmem:[#allocation5 + $0x1048] sm:$0xff]
    %v1184 = vld [vmem:[#allocation5 + $0x1050] sm:$0xff]
    %v1185 = vld [vmem:[#allocation5 + $0x1058] sm:$0xff]
    %v1186 = vld [vmem:[#allocation5 + $0x1060] sm:$0xff]
    %v1187 = vld [vmem:[#allocation5 + $0x1068] sm:$0xff]
    %v1188 = vld [vmem:[#allocation5 + $0x1070] sm:$0xff]
    %v1189 = vld [vmem:[#allocation5 + $0x1078] sm:$0xff]
    %v1190 = vld [vmem:[#allocation5 + $0x1080] sm:$0xff]
    %v1191 = vld [vmem:[#allocation5 + $0x1088] sm:$0xff]
    %v1192 = vld [vmem:[#allocation5 + $0x1090] sm:$0xff]
    %v1193 = vld [vmem:[#allocation5 + $0x1098] sm:$0xff]
    %v1194 = vld [vmem:[#allocation5 + $0x10a0] sm:$0xff]
    %v1195 = vld [vmem:[#allocation5 + $0x10a8] sm:$0xff]
    %v1196 = vld [vmem:[#allocation5 + $0x10b0] sm:$0xff]
    %v1197 = vld [vmem:[#allocation5 + $0x10b8] sm:$0xff]
    %v1198 = vld [vmem:[#allocation5 + $0x10c0] sm:$0xff]
    %v1199 = vld [vmem:[#allocation5 + $0x10c8] sm:$0xff]
    %v1200 = vld [vmem:[#allocation5 + $0x10d0] sm:$0xff]
    %v1201 = vld [vmem:[#allocation5 + $0x10d8] sm:$0xff]
    %v1202 = vld [vmem:[#allocation5 + $0x10e0] sm:$0xff]
    %v1203 = vld [vmem:[#allocation5 + $0x10e8] sm:$0xff]
    %v1204 = vld [vmem:[#allocation5 + $0x10f0] sm:$0xff]
    %v1205 = vld [vmem:[#allocation5 + $0x10f8] sm:$0xff]
    %v1206 = vld [vmem:[#allocation5 + $0x1100] sm:$0xff]
    %v1207 = vld [vmem:[#allocation5 + $0x1108] sm:$0xff]
    %v1208 = vld [vmem:[#allocation5 + $0x1110] sm:$0xff]
    %v1209 = vld [vmem:[#allocation5 + $0x1118] sm:$0xff]
    %v1210 = vld [vmem:[#allocation5 + $0x1120] sm:$0xff]
    %v1211 = vld [vmem:[#allocation5 + $0x1128] sm:$0xff]
    %v1212 = vld [vmem:[#allocation5 + $0x1130] sm:$0xff]
    %v1213 = vld [vmem:[#allocation5 + $0x1138] sm:$0xff]
    %v1214 = vld [vmem:[#allocation5 + $0x1140] sm:$0xff]
    %v1215 = vld [vmem:[#allocation5 + $0x1148] sm:$0xff]
    %v1216 = vld [vmem:[#allocation5 + $0x1150] sm:$0xff]
    %v1217 = vld [vmem:[#allocation5 + $0x1158] sm:$0xff]
    %v1218 = vld [vmem:[#allocation5 + $0x1160] sm:$0xff]
    %v1219 = vld [vmem:[#allocation5 + $0x1168] sm:$0xff]
    %v1220 = vld [vmem:[#allocation5 + $0x1170] sm:$0xff]
    %v1221 = vld [vmem:[#allocation5 + $0x1178] sm:$0xff]
    %v1222 = vld [vmem:[#allocation5 + $0x1180] sm:$0xff]
    %v1223 = vld [vmem:[#allocation5 + $0x1188] sm:$0xff]
    %v1224 = vld [vmem:[#allocation5 + $0x1190] sm:$0xff]
    %v1225 = vld [vmem:[#allocation5 + $0x1198] sm:$0xff]
    %v1226 = vld [vmem:[#allocation5 + $0x11a0] sm:$0xff]
    %v1227 = vld [vmem:[#allocation5 + $0x11a8] sm:$0xff]
    %v1228 = vld [vmem:[#allocation5 + $0x11b0] sm:$0xff]
    %v1229 = vld [vmem:[#allocation5 + $0x11b8] sm:$0xff]
    %v1230 = vld [vmem:[#allocation5 + $0x11c0] sm:$0xff]
    %v1231 = vld [vmem:[#allocation5 + $0x11c8] sm:$0xff]
    %v1232 = vld [vmem:[#allocation5 + $0x11d0] sm:$0xff]
    %v1233 = vld [vmem:[#allocation5 + $0x11d8] sm:$0xff]
    %v1234 = vld [vmem:[#allocation5 + $0x11e0] sm:$0xff]
    %v1235 = vld [vmem:[#allocation5 + $0x11e8] sm:$0xff]
    %v1236 = vld [vmem:[#allocation5 + $0x11f0] sm:$0xff]
    %v1237 = vld [vmem:[#allocation5 + $0x11f8] sm:$0xff]
    %v1238 = vld [vmem:[#allocation5 + $0x1200] sm:$0xff]
    %v1239 = vld [vmem:[#allocation5 + $0x1208] sm:$0xff]
    %v1240 = vld [vmem:[#allocation5 + $0x1210] sm:$0xff]
    %v1241 = vld [vmem:[#allocation5 + $0x1218] sm:$0xff]
    %v1242 = vld [vmem:[#allocation5 + $0x1220] sm:$0xff]
    %v1243 = vld [vmem:[#allocation5 + $0x1228] sm:$0xff]
    %v1244 = vld [vmem:[#allocation5 + $0x1230] sm:$0xff]
    %v1245 = vld [vmem:[#allocation5 + $0x1238] sm:$0xff]
    %v1246 = vld [vmem:[#allocation5 + $0x1240] sm:$0xff]
    %v1247 = vld [vmem:[#allocation5 + $0x1248] sm:$0xff]
    %v1248 = vld [vmem:[#allocation5 + $0x1250] sm:$0xff]
    %v1249 = vld [vmem:[#allocation5 + $0x1258] sm:$0xff]
    %v1250 = vld [vmem:[#allocation5 + $0x1260] sm:$0xff]
    %v1251 = vld [vmem:[#allocation5 + $0x1268] sm:$0xff]
    %v1252 = vld [vmem:[#allocation5 + $0x1270] sm:$0xff]
    %v1253 = vld [vmem:[#allocation5 + $0x1278] sm:$0xff]
    %v1254 = vld [vmem:[#allocation5 + $0x1280] sm:$0xff]
    %v1255 = vld [vmem:[#allocation5 + $0x1288] sm:$0xff]
    %v1256 = vld [vmem:[#allocation5 + $0x1290] sm:$0xff]
    %v1257 = vld [vmem:[#allocation5 + $0x1298] sm:$0xff]
    %v1258 = vld [vmem:[#allocation5 + $0x12a0] sm:$0xff]
    %v1259 = vld [vmem:[#allocation5 + $0x12a8] sm:$0xff]
    %v1260 = vld [vmem:[#allocation5 + $0x12b0] sm:$0xff]
    %v1261 = vld [vmem:[#allocation5 + $0x12b8] sm:$0xff]
    %v1262 = vld [vmem:[#allocation5 + $0x12c0] sm:$0xff]
    %v1263 = vld [vmem:[#allocation5 + $0x12c8] sm:$0xff]
    %v1264 = vld [vmem:[#allocation5 + $0x12d0] sm:$0xff]
    %v1265 = vld [vmem:[#allocation5 + $0x12d8] sm:$0xff]
    %v1266 = vld [vmem:[#allocation5 + $0x12e0] sm:$0xff]
    %v1267 = vld [vmem:[#allocation5 + $0x12e8] sm:$0xff]
    %v1268 = vld [vmem:[#allocation5 + $0x12f0] sm:$0xff]
    %v1269 = vld [vmem:[#allocation5 + $0x12f8] sm:$0xff]
    %v1270 = vld [vmem:[#allocation5 + $0x1300] sm:$0xff]
    %v1271 = vld [vmem:[#allocation5 + $0x1308] sm:$0xff]
    %v1272 = vld [vmem:[#allocation5 + $0x1310] sm:$0xff]
    %v1273 = vld [vmem:[#allocation5 + $0x1318] sm:$0xff]
    %v1274 = vld [vmem:[#allocation5 + $0x1320] sm:$0xff]
    %v1275 = vld [vmem:[#allocation5 + $0x1328] sm:$0xff]
    %v1276 = vld [vmem:[#allocation5 + $0x1330] sm:$0xff]
    %v1277 = vld [vmem:[#allocation5 + $0x1338] sm:$0xff]
    %v1278 = vld [vmem:[#allocation5 + $0x1340] sm:$0xff]
    %v1279 = vld [vmem:[#allocation5 + $0x1348] sm:$0xff]
    %v1280 = vld [vmem:[#allocation5 + $0x1350] sm:$0xff]
    %v1281 = vld [vmem:[#allocation5 + $0x1358] sm:$0xff]
    %v1282 = vld [vmem:[#allocation5 + $0x1360] sm:$0xff]
    %v1283 = vld [vmem:[#allocation5 + $0x1368] sm:$0xff]
    %v1284 = vld [vmem:[#allocation5 + $0x1370] sm:$0xff]
    %v1285 = vld [vmem:[#allocation5 + $0x1378] sm:$0xff]
    %v1286 = vld [vmem:[#allocation5 + $0x1380] sm:$0xff]
    %v1287 = vld [vmem:[#allocation5 + $0x1388] sm:$0xff]
    %v1288 = vld [vmem:[#allocation5 + $0x1390] sm:$0xff]
    %v1289 = vld [vmem:[#allocation5 + $0x1398] sm:$0xff]
    %v1290 = vld [vmem:[#allocation5 + $0x13a0] sm:$0xff]
    %v1291 = vld [vmem:[#allocation5 + $0x13a8] sm:$0xff]
    %v1292 = vld [vmem:[#allocation5 + $0x13b0] sm:$0xff]
    %v1293 = vld [vmem:[#allocation5 + $0x13b8] sm:$0xff]
    %v1294 = vld [vmem:[#allocation5 + $0x13c0] sm:$0xff]
    %v1295 = vld [vmem:[#allocation5 + $0x13c8] sm:$0xff]
    %v1296 = vld [vmem:[#allocation5 + $0x13d0] sm:$0xff]
    %v1297 = vld [vmem:[#allocation5 + $0x13d8] sm:$0xff]
    %v1298 = vld [vmem:[#allocation5 + $0x13e0] sm:$0xff]
    %v1299 = vld [vmem:[#allocation5 + $0x13e8] sm:$0xff]
    %v1300 = vld [vmem:[#allocation5 + $0x13f0] sm:$0xff]
    %v1301 = vld [vmem:[#allocation5 + $0x13f8] sm:$0xff]
    %v1302 = vld [vmem:[#allocation5 + $0x1400] sm:$0xff]
    %v1303 = vld [vmem:[#allocation5 + $0x1408] sm:$0xff]
    %v1304 = vld [vmem:[#allocation5 + $0x1410] sm:$0xff]
    %v1305 = vld [vmem:[#allocation5 + $0x1418] sm:$0xff]
    %v1306 = vld [vmem:[#allocation5 + $0x1420] sm:$0xff]
    %v1307 = vld [vmem:[#allocation5 + $0x1428] sm:$0xff]
    %v1308 = vld [vmem:[#allocation5 + $0x1430] sm:$0xff]
    %v1309 = vld [vmem:[#allocation5 + $0x1438] sm:$0xff]
    %v1310 = vld [vmem:[#allocation5 + $0x1440] sm:$0xff]
    %v1311 = vld [vmem:[#allocation5 + $0x1448] sm:$0xff]
    %v1312 = vld [vmem:[#allocation5 + $0x1450] sm:$0xff]
    %v1313 = vld [vmem:[#allocation5 + $0x1458] sm:$0xff]
    %v1314 = vld [vmem:[#allocation5 + $0x1460] sm:$0xff]
    %v1315 = vld [vmem:[#allocation5 + $0x1468] sm:$0xff]
    %v1316 = vld [vmem:[#allocation5 + $0x1470] sm:$0xff]
    %v1317 = vld [vmem:[#allocation5 + $0x1478] sm:$0xff]
    %v1318 = vld [vmem:[#allocation5 + $0x1480] sm:$0xff]
    %v1319 = vld [vmem:[#allocation5 + $0x1488] sm:$0xff]
    %v1320 = vld [vmem:[#allocation5 + $0x1490] sm:$0xff]
    %v1321 = vld [vmem:[#allocation5 + $0x1498] sm:$0xff]
    %v1322 = vld [vmem:[#allocation5 + $0x14a0] sm:$0xff]
    %v1323 = vld [vmem:[#allocation5 + $0x14a8] sm:$0xff]
    %v1324 = vld [vmem:[#allocation5 + $0x14b0] sm:$0xff]
    %v1325 = vld [vmem:[#allocation5 + $0x14b8] sm:$0xff]
    %v1326 = vld [vmem:[#allocation5 + $0x14c0] sm:$0xff]
    %v1327 = vld [vmem:[#allocation5 + $0x14c8] sm:$0xff]
    %v1328 = vld [vmem:[#allocation5 + $0x14d0] sm:$0xff]
    %v1329 = vld [vmem:[#allocation5 + $0x14d8] sm:$0xff]
    %v1330 = vld [vmem:[#allocation5 + $0x14e0] sm:$0xff]
    %v1331 = vld [vmem:[#allocation5 + $0x14e8] sm:$0xff]
    %v1332 = vld [vmem:[#allocation5 + $0x14f0] sm:$0xff]
    %v1333 = vld [vmem:[#allocation5 + $0x14f8] sm:$0xff]
    %v1334 = vld [vmem:[#allocation5 + $0x1500] sm:$0xff]
    %v1335 = vld [vmem:[#allocation5 + $0x1508] sm:$0xff]
    %v1336 = vld [vmem:[#allocation5 + $0x1510] sm:$0xff]
    %v1337 = vld [vmem:[#allocation5 + $0x1518] sm:$0xff]
    %v1338 = vld [vmem:[#allocation5 + $0x1520] sm:$0xff]
    %v1339 = vld [vmem:[#allocation5 + $0x1528] sm:$0xff]
    %v1340 = vld [vmem:[#allocation5 + $0x1530] sm:$0xff]
    %v1341 = vld [vmem:[#allocation5 + $0x1538] sm:$0xff]
    %v1342 = vld [vmem:[#allocation5 + $0x1540] sm:$0xff]
    %v1343 = vld [vmem:[#allocation5 + $0x1548] sm:$0xff]
    %v1344 = vld [vmem:[#allocation5 + $0x1550] sm:$0xff]
    %v1345 = vld [vmem:[#allocation5 + $0x1558] sm:$0xff]
    %v1346 = vld [vmem:[#allocation5 + $0x1560] sm:$0xff]
    %v1347 = vld [vmem:[#allocation5 + $0x1568] sm:$0xff]
    %v1348 = vld [vmem:[#allocation5 + $0x1570] sm:$0xff]
    %v1349 = vld [vmem:[#allocation5 + $0x1578] sm:$0xff]
    %v1350 = vld [vmem:[#allocation5 + $0x1580] sm:$0xff]
    %v1351 = vld [vmem:[#allocation5 + $0x1588] sm:$0xff]
    %v1352 = vld [vmem:[#allocation5 + $0x1590] sm:$0xff]
    %v1353 = vld [vmem:[#allocation5 + $0x1598] sm:$0xff]
    %v1354 = vld [vmem:[#allocation5 + $0x15a0] sm:$0xff]
    %v1355 = vld [vmem:[#allocation5 + $0x15a8] sm:$0xff]
    %v1356 = vld [vmem:[#allocation5 + $0x15b0] sm:$0xff]
    %v1357 = vld [vmem:[#allocation5 + $0x15b8] sm:$0xff]
    %v1358 = vld [vmem:[#allocation5 + $0x15c0] sm:$0xff]
    %v1359 = vld [vmem:[#allocation5 + $0x15c8] sm:$0xff]
    %v1360 = vld [vmem:[#allocation5 + $0x15d0] sm:$0xff]
    %v1361 = vld [vmem:[#allocation5 + $0x15d8] sm:$0xff]
    %v1362 = vld [vmem:[#allocation5 + $0x15e0] sm:$0xff]
    %v1363 = vld [vmem:[#allocation5 + $0x15e8] sm:$0xff]
    %v1364 = vld [vmem:[#allocation5 + $0x15f0] sm:$0xff]
    %v1365 = vld [vmem:[#allocation5 + $0x15f8] sm:$0xff]
    %v1366 = vld [vmem:[#allocation5 + $0x1600] sm:$0xff]
    %v1367 = vld [vmem:[#allocation5 + $0x1608] sm:$0xff]
    %v1368 = vld [vmem:[#allocation5 + $0x1610] sm:$0xff]
    %v1369 = vld [vmem:[#allocation5 + $0x1618] sm:$0xff]
    %v1370 = vld [vmem:[#allocation5 + $0x1620] sm:$0xff]
    %v1371 = vld [vmem:[#allocation5 + $0x1628] sm:$0xff]
    %v1372 = vld [vmem:[#allocation5 + $0x1630] sm:$0xff]
    %v1373 = vld [vmem:[#allocation5 + $0x1638] sm:$0xff]
    %v1374 = vld [vmem:[#allocation5 + $0x1640] sm:$0xff]
    %v1375 = vld [vmem:[#allocation5 + $0x1648] sm:$0xff]
    %v1376 = vld [vmem:[#allocation5 + $0x1650] sm:$0xff]
    %v1377 = vld [vmem:[#allocation5 + $0x1658] sm:$0xff]
    %v1378 = vld [vmem:[#allocation5 + $0x1660] sm:$0xff]
    %v1379 = vld [vmem:[#allocation5 + $0x1668] sm:$0xff]
    %v1380 = vld [vmem:[#allocation5 + $0x1670] sm:$0xff]
    %v1381 = vld [vmem:[#allocation5 + $0x1678] sm:$0xff]
    %v1382 = vld [vmem:[#allocation5 + $0x1680] sm:$0xff]
    %v1383 = vld [vmem:[#allocation5 + $0x1688] sm:$0xff]
    %v1384 = vld [vmem:[#allocation5 + $0x1690] sm:$0xff]
    %v1385 = vld [vmem:[#allocation5 + $0x1698] sm:$0xff]
    %v1386 = vld [vmem:[#allocation5 + $0x16a0] sm:$0xff]
    %v1387 = vld [vmem:[#allocation5 + $0x16a8] sm:$0xff]
    %v1388 = vld [vmem:[#allocation5 + $0x16b0] sm:$0xff]
    %v1389 = vld [vmem:[#allocation5 + $0x16b8] sm:$0xff]
    %v1390 = vld [vmem:[#allocation5 + $0x16c0] sm:$0xff]
    %v1391 = vld [vmem:[#allocation5 + $0x16c8] sm:$0xff]
    %v1392 = vld [vmem:[#allocation5 + $0x16d0] sm:$0xff]
    %v1393 = vld [vmem:[#allocation5 + $0x16d8] sm:$0xff]
    %v1394 = vld [vmem:[#allocation5 + $0x16e0] sm:$0xff]
    %v1395 = vld [vmem:[#allocation5 + $0x16e8] sm:$0xff]
    %v1396 = vld [vmem:[#allocation5 + $0x16f0] sm:$0xff]
    %v1397 = vld [vmem:[#allocation5 + $0x16f8] sm:$0xff]
    %v1398 = vld [vmem:[#allocation5 + $0x1700] sm:$0xff]
    %v1399 = vld [vmem:[#allocation5 + $0x1708] sm:$0xff]
    %v1400 = vld [vmem:[#allocation5 + $0x1710] sm:$0xff]
    %v1401 = vld [vmem:[#allocation5 + $0x1718] sm:$0xff]
    %v1402 = vld [vmem:[#allocation5 + $0x1720] sm:$0xff]
    %v1403 = vld [vmem:[#allocation5 + $0x1728] sm:$0xff]
    %v1404 = vld [vmem:[#allocation5 + $0x1730] sm:$0xff]
    %v1405 = vld [vmem:[#allocation5 + $0x1738] sm:$0xff]
    %v1406 = vld [vmem:[#allocation5 + $0x1740] sm:$0xff]
    %v1407 = vld [vmem:[#allocation5 + $0x1748] sm:$0xff]
    %v1408 = vld [vmem:[#allocation5 + $0x1750] sm:$0xff]
    %v1409 = vld [vmem:[#allocation5 + $0x1758] sm:$0xff]
    %v1410 = vld [vmem:[#allocation5 + $0x1760] sm:$0xff]
    %v1411 = vld [vmem:[#allocation5 + $0x1768] sm:$0xff]
    %v1412 = vld [vmem:[#allocation5 + $0x1770] sm:$0xff]
    %v1413 = vld [vmem:[#allocation5 + $0x1778] sm:$0xff]
    %v1414 = vld [vmem:[#allocation5 + $0x1780] sm:$0xff]
    %v1415 = vld [vmem:[#allocation5 + $0x1788] sm:$0xff]
    %v1416 = vld [vmem:[#allocation5 + $0x1790] sm:$0xff]
    %v1417 = vld [vmem:[#allocation5 + $0x1798] sm:$0xff]
    %v1418 = vld [vmem:[#allocation5 + $0x17a0] sm:$0xff]
    %v1419 = vld [vmem:[#allocation5 + $0x17a8] sm:$0xff]
    %v1420 = vld [vmem:[#allocation5 + $0x17b0] sm:$0xff]
    %v1421 = vld [vmem:[#allocation5 + $0x17b8] sm:$0xff]
    %v1422 = vld [vmem:[#allocation5 + $0x17c0] sm:$0xff]
    %v1423 = vld [vmem:[#allocation5 + $0x17c8] sm:$0xff]
    %v1424 = vld [vmem:[#allocation5 + $0x17d0] sm:$0xff]
    %v1425 = vld [vmem:[#allocation5 + $0x17d8] sm:$0xff]
    %v1426 = vld [vmem:[#allocation5 + $0x17e0] sm:$0xff]
    %v1427 = vld [vmem:[#allocation5 + $0x17e8] sm:$0xff]
    %v1428 = vld [vmem:[#allocation5 + $0x17f0] sm:$0xff]
    %v1429 = vld [vmem:[#allocation5 + $0x17f8] sm:$0xff]
    %v1430 = vld [vmem:[#allocation5 + $0x1800] sm:$0xff]
    %v1431 = vld [vmem:[#allocation5 + $0x1808] sm:$0xff]
    %v1432 = vld [vmem:[#allocation5 + $0x1810] sm:$0xff]
    %v1433 = vld [vmem:[#allocation5 + $0x1818] sm:$0xff]
    %v1434 = vld [vmem:[#allocation5 + $0x1820] sm:$0xff]
    %v1435 = vld [vmem:[#allocation5 + $0x1828] sm:$0xff]
    %v1436 = vld [vmem:[#allocation5 + $0x1830] sm:$0xff]
    %v1437 = vld [vmem:[#allocation5 + $0x1838] sm:$0xff]
    %v1438 = vld [vmem:[#allocation5 + $0x1840] sm:$0xff]
    %v1439 = vld [vmem:[#allocation5 + $0x1848] sm:$0xff]
    %v1440 = vld [vmem:[#allocation5 + $0x1850] sm:$0xff]
    %v1441 = vld [vmem:[#allocation5 + $0x1858] sm:$0xff]
    %v1442 = vld [vmem:[#allocation5 + $0x1860] sm:$0xff]
    %v1443 = vld [vmem:[#allocation5 + $0x1868] sm:$0xff]
    %v1444 = vld [vmem:[#allocation5 + $0x1870] sm:$0xff]
    %v1445 = vld [vmem:[#allocation5 + $0x1878] sm:$0xff]
    %v1446 = vld [vmem:[#allocation5 + $0x1880] sm:$0xff]
    %v1447 = vld [vmem:[#allocation5 + $0x1888] sm:$0xff]
    %v1448 = vld [vmem:[#allocation5 + $0x1890] sm:$0xff]
    %v1449 = vld [vmem:[#allocation5 + $0x1898] sm:$0xff]
    %v1450 = vld [vmem:[#allocation5 + $0x18a0] sm:$0xff]
    %v1451 = vld [vmem:[#allocation5 + $0x18a8] sm:$0xff]
    %v1452 = vld [vmem:[#allocation5 + $0x18b0] sm:$0xff]
    %v1453 = vld [vmem:[#allocation5 + $0x18b8] sm:$0xff]
    %v1454 = vld [vmem:[#allocation5 + $0x18c0] sm:$0xff]
    %v1455 = vld [vmem:[#allocation5 + $0x18c8] sm:$0xff]
    %v1456 = vld [vmem:[#allocation5 + $0x18d0] sm:$0xff]
    %v1457 = vld [vmem:[#allocation5 + $0x18d8] sm:$0xff]
    %v1458 = vld [vmem:[#allocation5 + $0x18e0] sm:$0xff]
    %v1459 = vld [vmem:[#allocation5 + $0x18e8] sm:$0xff]
    %v1460 = vld [vmem:[#allocation5 + $0x18f0] sm:$0xff]
    %v1461 = vld [vmem:[#allocation5 + $0x18f8] sm:$0xff]
    %v1462 = vld [vmem:[#allocation5 + $0x1900] sm:$0xff]
    %v1463 = vld [vmem:[#allocation5 + $0x1908] sm:$0xff]
    %v1464 = vld [vmem:[#allocation5 + $0x1910] sm:$0xff]
    %v1465 = vld [vmem:[#allocation5 + $0x1918] sm:$0xff]
    %v1466 = vld [vmem:[#allocation5 + $0x1920] sm:$0xff]
    %v1467 = vld [vmem:[#allocation5 + $0x1928] sm:$0xff]
    %v1468 = vld [vmem:[#allocation5 + $0x1930] sm:$0xff]
    %v1469 = vld [vmem:[#allocation5 + $0x1938] sm:$0xff]
    %v1470 = vld [vmem:[#allocation5 + $0x1940] sm:$0xff]
    %v1471 = vld [vmem:[#allocation5 + $0x1948] sm:$0xff]
    %v1472 = vld [vmem:[#allocation5 + $0x1950] sm:$0xff]
    %v1473 = vld [vmem:[#allocation5 + $0x1958] sm:$0xff]
    %v1474 = vld [vmem:[#allocation5 + $0x1960] sm:$0xff]
    %v1475 = vld [vmem:[#allocation5 + $0x1968] sm:$0xff]
    %v1476 = vld [vmem:[#allocation5 + $0x1970] sm:$0xff]
    %v1477 = vld [vmem:[#allocation5 + $0x1978] sm:$0xff]
    %v1478 = vld [vmem:[#allocation5 + $0x1980] sm:$0xff]
    %v1479 = vld [vmem:[#allocation5 + $0x1988] sm:$0xff]
    %v1480 = vld [vmem:[#allocation5 + $0x1990] sm:$0xff]
    %v1481 = vld [vmem:[#allocation5 + $0x1998] sm:$0xff]
    %v1482 = vld [vmem:[#allocation5 + $0x19a0] sm:$0xff]
    %v1483 = vld [vmem:[#allocation5 + $0x19a8] sm:$0xff]
    %v1484 = vld [vmem:[#allocation5 + $0x19b0] sm:$0xff]
    %v1485 = vld [vmem:[#allocation5 + $0x19b8] sm:$0xff]
    %v1486 = vld [vmem:[#allocation5 + $0x19c0] sm:$0xff]
    %v1487 = vld [vmem:[#allocation5 + $0x19c8] sm:$0xff]
    %v1488 = vld [vmem:[#allocation5 + $0x19d0] sm:$0xff]
    %v1489 = vld [vmem:[#allocation5 + $0x19d8] sm:$0xff]
    %v1490 = vld [vmem:[#allocation5 + $0x19e0] sm:$0xff]
    %v1491 = vld [vmem:[#allocation5 + $0x19e8] sm:$0xff]
    %v1492 = vld [vmem:[#allocation5 + $0x19f0] sm:$0xff]
    %v1493 = vld [vmem:[#allocation5 + $0x19f8] sm:$0xff]
    %v1494 = vld [vmem:[#allocation5 + $0x1a00] sm:$0xff]
    %v1495 = vld [vmem:[#allocation5 + $0x1a08] sm:$0xff]
    %v1496 = vld [vmem:[#allocation5 + $0x1a10] sm:$0xff]
    %v1497 = vld [vmem:[#allocation5 + $0x1a18] sm:$0xff]
    %v1498 = vld [vmem:[#allocation5 + $0x1a20] sm:$0xff]
    %v1499 = vld [vmem:[#allocation5 + $0x1a28] sm:$0xff]
    %v1500 = vld [vmem:[#allocation5 + $0x1a30] sm:$0xff]
    %v1501 = vld [vmem:[#allocation5 + $0x1a38] sm:$0xff]
    %v1502 = vld [vmem:[#allocation5 + $0x1a40] sm:$0xff]
    %v1503 = vld [vmem:[#allocation5 + $0x1a48] sm:$0xff]
    %v1504 = vld [vmem:[#allocation5 + $0x1a50] sm:$0xff]
    %v1505 = vld [vmem:[#allocation5 + $0x1a58] sm:$0xff]
    %v1506 = vld [vmem:[#allocation5 + $0x1a60] sm:$0xff]
    %v1507 = vld [vmem:[#allocation5 + $0x1a68] sm:$0xff]
    %v1508 = vld [vmem:[#allocation5 + $0x1a70] sm:$0xff]
    %v1509 = vld [vmem:[#allocation5 + $0x1a78] sm:$0xff]
    %v1510 = vld [vmem:[#allocation5 + $0x1a80] sm:$0xff]
    %v1511 = vld [vmem:[#allocation5 + $0x1a88] sm:$0xff]
    %v1512 = vld [vmem:[#allocation5 + $0x1a90] sm:$0xff]
    %v1513 = vld [vmem:[#allocation5 + $0x1a98] sm:$0xff]
    %v1514 = vld [vmem:[#allocation5 + $0x1aa0] sm:$0xff]
    %v1515 = vld [vmem:[#allocation5 + $0x1aa8] sm:$0xff]
    %v1516 = vld [vmem:[#allocation5 + $0x1ab0] sm:$0xff]
    %v1517 = vld [vmem:[#allocation5 + $0x1ab8] sm:$0xff]
    %v1518 = vld [vmem:[#allocation5 + $0x1ac0] sm:$0xff]
    %v1519 = vld [vmem:[#allocation5 + $0x1ac8] sm:$0xff]
    %v1520 = vld [vmem:[#allocation5 + $0x1ad0] sm:$0xff]
    %v1521 = vld [vmem:[#allocation5 + $0x1ad8] sm:$0xff]
    %v1522 = vld [vmem:[#allocation5 + $0x1ae0] sm:$0xff]
    %v1523 = vld [vmem:[#allocation5 + $0x1ae8] sm:$0xff]
    %v1524 = vld [vmem:[#allocation5 + $0x1af0] sm:$0xff]
    %v1525 = vld [vmem:[#allocation5 + $0x1af8] sm:$0xff]
    %v1526 = vld [vmem:[#allocation5 + $0x1b00] sm:$0xff]
    %v1527 = vld [vmem:[#allocation5 + $0x1b08] sm:$0xff]
    %v1528 = vld [vmem:[#allocation5 + $0x1b10] sm:$0xff]
    %v1529 = vld [vmem:[#allocation5 + $0x1b18] sm:$0xff]
    %v1530 = vld [vmem:[#allocation5 + $0x1b20] sm:$0xff]
    %v1531 = vld [vmem:[#allocation5 + $0x1b28] sm:$0xff]
    %v1532 = vld [vmem:[#allocation5 + $0x1b30] sm:$0xff]
    %v1533 = vld [vmem:[#allocation5 + $0x1b38] sm:$0xff]
    %v1534 = vld [vmem:[#allocation5 + $0x1b40] sm:$0xff]
    %v1535 = vld [vmem:[#allocation5 + $0x1b48] sm:$0xff]
    %v1536 = vld [vmem:[#allocation5 + $0x1b50] sm:$0xff]
    %v1537 = vld [vmem:[#allocation5 + $0x1b58] sm:$0xff]
    %v1538 = vld [vmem:[#allocation5 + $0x1b60] sm:$0xff]
    %v1539 = vld [vmem:[#allocation5 + $0x1b68] sm:$0xff]
    %v1540 = vld [vmem:[#allocation5 + $0x1b70] sm:$0xff]
    %v1541 = vld [vmem:[#allocation5 + $0x1b78] sm:$0xff]
    %v1542 = vld [vmem:[#allocation5 + $0x1b80] sm:$0xff]
    %v1543 = vld [vmem:[#allocation5 + $0x1b88] sm:$0xff]
    %v1544 = vld [vmem:[#allocation5 + $0x1b90] sm:$0xff]
    %v1545 = vld [vmem:[#allocation5 + $0x1b98] sm:$0xff]
    %v1546 = vld [vmem:[#allocation5 + $0x1ba0] sm:$0xff]
    %v1547 = vld [vmem:[#allocation5 + $0x1ba8] sm:$0xff]
    %v1548 = vld [vmem:[#allocation5 + $0x1bb0] sm:$0xff]
    %v1549 = vld [vmem:[#allocation5 + $0x1bb8] sm:$0xff]
    %v1550 = vld [vmem:[#allocation5 + $0x1bc0] sm:$0xff]
    %v1551 = vld [vmem:[#allocation5 + $0x1bc8] sm:$0xff]
    %v1552 = vld [vmem:[#allocation5 + $0x1bd0] sm:$0xff]
    %v1553 = vld [vmem:[#allocation5 + $0x1bd8] sm:$0xff]
    %v1554 = vld [vmem:[#allocation5 + $0x1be0] sm:$0xff]
    %v1555 = vld [vmem:[#allocation5 + $0x1be8] sm:$0xff]
    %v1556 = vld [vmem:[#allocation5 + $0x1bf0] sm:$0xff]
    %v1557 = vld [vmem:[#allocation5 + $0x1bf8] sm:$0xff]
    %v1558 = vld [vmem:[#allocation5 + $0x1c00] sm:$0xff]
    %v1559 = vld [vmem:[#allocation5 + $0x1c08] sm:$0xff]
    %v1560 = vld [vmem:[#allocation5 + $0x1c10] sm:$0xff]
    %v1561 = vld [vmem:[#allocation5 + $0x1c18] sm:$0xff]
    %v1562 = vld [vmem:[#allocation5 + $0x1c20] sm:$0xff]
    %v1563 = vld [vmem:[#allocation5 + $0x1c28] sm:$0xff]
    %v1564 = vld [vmem:[#allocation5 + $0x1c30] sm:$0xff]
    %v1565 = vld [vmem:[#allocation5 + $0x1c38] sm:$0xff]
    %v1566 = vld [vmem:[#allocation5 + $0x1c40] sm:$0xff]
    %v1567 = vld [vmem:[#allocation5 + $0x1c48] sm:$0xff]
    %v1568 = vld [vmem:[#allocation5 + $0x1c50] sm:$0xff]
    %v1569 = vld [vmem:[#allocation5 + $0x1c58] sm:$0xff]
    %v1570 = vld [vmem:[#allocation5 + $0x1c60] sm:$0xff]
    %v1571 = vld [vmem:[#allocation5 + $0x1c68] sm:$0xff]
    %v1572 = vld [vmem:[#allocation5 + $0x1c70] sm:$0xff]
    %v1573 = vld [vmem:[#allocation5 + $0x1c78] sm:$0xff]
    %v1574 = vld [vmem:[#allocation5 + $0x1c80] sm:$0xff]
    %v1575 = vld [vmem:[#allocation5 + $0x1c88] sm:$0xff]
    %v1576 = vld [vmem:[#allocation5 + $0x1c90] sm:$0xff]
    %v1577 = vld [vmem:[#allocation5 + $0x1c98] sm:$0xff]
    %v1578 = vld [vmem:[#allocation5 + $0x1ca0] sm:$0xff]
    %v1579 = vld [vmem:[#allocation5 + $0x1ca8] sm:$0xff]
    %v1580 = vld [vmem:[#allocation5 + $0x1cb0] sm:$0xff]
    %v1581 = vld [vmem:[#allocation5 + $0x1cb8] sm:$0xff]
    %v1582 = vld [vmem:[#allocation5 + $0x1cc0] sm:$0xff]
    %v1583 = vld [vmem:[#allocation5 + $0x1cc8] sm:$0xff]
    %v1584 = vld [vmem:[#allocation5 + $0x1cd0] sm:$0xff]
    %v1585 = vld [vmem:[#allocation5 + $0x1cd8] sm:$0xff]
    %v1586 = vld [vmem:[#allocation5 + $0x1ce0] sm:$0xff]
    %v1587 = vld [vmem:[#allocation5 + $0x1ce8] sm:$0xff]
    %v1588 = vld [vmem:[#allocation5 + $0x1cf0] sm:$0xff]
    %v1589 = vld [vmem:[#allocation5 + $0x1cf8] sm:$0xff]
    %v1590 = vld [vmem:[#allocation5 + $0x1d00] sm:$0xff]
    %v1591 = vld [vmem:[#allocation5 + $0x1d08] sm:$0xff]
    %v1592 = vld [vmem:[#allocation5 + $0x1d10] sm:$0xff]
    %v1593 = vld [vmem:[#allocation5 + $0x1d18] sm:$0xff]
    %v1594 = vld [vmem:[#allocation5 + $0x1d20] sm:$0xff]
    %v1595 = vld [vmem:[#allocation5 + $0x1d28] sm:$0xff]
    %v1596 = vld [vmem:[#allocation5 + $0x1d30] sm:$0xff]
    %v1597 = vld [vmem:[#allocation5 + $0x1d38] sm:$0xff]
    %v1598 = vld [vmem:[#allocation5 + $0x1d40] sm:$0xff]
    %v1599 = vld [vmem:[#allocation5 + $0x1d48] sm:$0xff]
    %v1600 = vld [vmem:[#allocation5 + $0x1d50] sm:$0xff]
    %v1601 = vld [vmem:[#allocation5 + $0x1d58] sm:$0xff]
    %v1602 = vld [vmem:[#allocation5 + $0x1d60] sm:$0xff]
    %v1603 = vld [vmem:[#allocation5 + $0x1d68] sm:$0xff]
    %v1604 = vld [vmem:[#allocation5 + $0x1d70] sm:$0xff]
    %v1605 = vld [vmem:[#allocation5 + $0x1d78] sm:$0xff]
    %v1606 = vld [vmem:[#allocation5 + $0x1d80] sm:$0xff]
    %v1607 = vld [vmem:[#allocation5 + $0x1d88] sm:$0xff]
    %v1608 = vld [vmem:[#allocation5 + $0x1d90] sm:$0xff]
    %v1609 = vld [vmem:[#allocation5 + $0x1d98] sm:$0xff]
    %v1610 = vld [vmem:[#allocation5 + $0x1da0] sm:$0xff]
    %v1611 = vld [vmem:[#allocation5 + $0x1da8] sm:$0xff]
    %v1612 = vld [vmem:[#allocation5 + $0x1db0] sm:$0xff]
    %v1613 = vld [vmem:[#allocation5 + $0x1db8] sm:$0xff]
    %v1614 = vld [vmem:[#allocation5 + $0x1dc0] sm:$0xff]
    %v1615 = vld [vmem:[#allocation5 + $0x1dc8] sm:$0xff]
    %v1616 = vld [vmem:[#allocation5 + $0x1dd0] sm:$0xff]
    %v1617 = vld [vmem:[#allocation5 + $0x1dd8] sm:$0xff]
    %v1618 = vld [vmem:[#allocation5 + $0x1de0] sm:$0xff]
    %v1619 = vld [vmem:[#allocation5 + $0x1de8] sm:$0xff]
    %v1620 = vld [vmem:[#allocation5 + $0x1df0] sm:$0xff]
    %v1621 = vld [vmem:[#allocation5 + $0x1df8] sm:$0xff]
    %v1622 = vld [vmem:[#allocation5 + $0x1e00] sm:$0xff]
    %v1623 = vld [vmem:[#allocation5 + $0x1e08] sm:$0xff]
    %v1624 = vld [vmem:[#allocation5 + $0x1e10] sm:$0xff]
    %v1625 = vld [vmem:[#allocation5 + $0x1e18] sm:$0xff]
    %v1626 = vld [vmem:[#allocation5 + $0x1e20] sm:$0xff]
    %v1627 = vld [vmem:[#allocation5 + $0x1e28] sm:$0xff]
    %v1628 = vld [vmem:[#allocation5 + $0x1e30] sm:$0xff]
    %v1629 = vld [vmem:[#allocation5 + $0x1e38] sm:$0xff]
    %v1630 = vld [vmem:[#allocation5 + $0x1e40] sm:$0xff]
    %v1631 = vld [vmem:[#allocation5 + $0x1e48] sm:$0xff]
    %v1632 = vld [vmem:[#allocation5 + $0x1e50] sm:$0xff]
    %v1633 = vld [vmem:[#allocation5 + $0x1e58] sm:$0xff]
    %v1634 = vld [vmem:[#allocation5 + $0x1e60] sm:$0xff]
    %v1635 = vld [vmem:[#allocation5 + $0x1e68] sm:$0xff]
    %v1636 = vld [vmem:[#allocation5 + $0x1e70] sm:$0xff]
    %v1637 = vld [vmem:[#allocation5 + $0x1e78] sm:$0xff]
    %v1638 = vld [vmem:[#allocation5 + $0x1e80] sm:$0xff]
    %v1639 = vld [vmem:[#allocation5 + $0x1e88] sm:$0xff]
    %v1640 = vld [vmem:[#allocation5 + $0x1e90] sm:$0xff]
    %v1641 = vld [vmem:[#allocation5 + $0x1e98] sm:$0xff]
    %v1642 = vld [vmem:[#allocation5 + $0x1ea0] sm:$0xff]
    %v1643 = vld [vmem:[#allocation5 + $0x1ea8] sm:$0xff]
    %v1644 = vld [vmem:[#allocation5 + $0x1eb0] sm:$0xff]
    %v1645 = vld [vmem:[#allocation5 + $0x1eb8] sm:$0xff]
    %v1646 = vld [vmem:[#allocation5 + $0x1ec0] sm:$0xff]
    %v1647 = vld [vmem:[#allocation5 + $0x1ec8] sm:$0xff]
    %v1648 = vld [vmem:[#allocation5 + $0x1ed0] sm:$0xff]
    %v1649 = vld [vmem:[#allocation5 + $0x1ed8] sm:$0xff]
    %v1650 = vld [vmem:[#allocation5 + $0x1ee0] sm:$0xff]
    %v1651 = vld [vmem:[#allocation5 + $0x1ee8] sm:$0xff]
    %v1652 = vld [vmem:[#allocation5 + $0x1ef0] sm:$0xff]
    %v1653 = vld [vmem:[#allocation5 + $0x1ef8] sm:$0xff]
    %v1654 = vld [vmem:[#allocation5 + $0x1f00] sm:$0xff]
    %v1655 = vld [vmem:[#allocation5 + $0x1f08] sm:$0xff]
    %v1656 = vld [vmem:[#allocation5 + $0x1f10] sm:$0xff]
    %v1657 = vld [vmem:[#allocation5 + $0x1f18] sm:$0xff]
    %v1658 = vld [vmem:[#allocation5 + $0x1f20] sm:$0xff]
    %v1659 = vld [vmem:[#allocation5 + $0x1f28] sm:$0xff]
    %v1660 = vld [vmem:[#allocation5 + $0x1f30] sm:$0xff]
    %v1661 = vld [vmem:[#allocation5 + $0x1f38] sm:$0xff]
    %v1662 = vld [vmem:[#allocation5 + $0x1f40] sm:$0xff]
    %v1663 = vld [vmem:[#allocation5 + $0x1f48] sm:$0xff]
    %v1664 = vld [vmem:[#allocation5 + $0x1f50] sm:$0xff]
    %v1665 = vld [vmem:[#allocation5 + $0x1f58] sm:$0xff]
    %v1666 = vld [vmem:[#allocation5 + $0x1f60] sm:$0xff]
    %v1667 = vld [vmem:[#allocation5 + $0x1f68] sm:$0xff]
    %v1668 = vld [vmem:[#allocation5 + $0x1f70] sm:$0xff]
    %v1669 = vld [vmem:[#allocation5 + $0x1f78] sm:$0xff]
    %v1670 = vld [vmem:[#allocation5 + $0x1f80] sm:$0xff]
    %v1671 = vld [vmem:[#allocation5 + $0x1f88] sm:$0xff]
    %v1672 = vld [vmem:[#allocation5 + $0x1f90] sm:$0xff]
    %v1673 = vld [vmem:[#allocation5 + $0x1f98] sm:$0xff]
    %v1674 = vld [vmem:[#allocation5 + $0x1fa0] sm:$0xff]
    %v1675 = vld [vmem:[#allocation5 + $0x1fa8] sm:$0xff]
    %v1676 = vld [vmem:[#allocation5 + $0x1fb0] sm:$0xff]
    %v1677 = vld [vmem:[#allocation5 + $0x1fb8] sm:$0xff]
    %v1678 = vld [vmem:[#allocation5 + $0x1fc0] sm:$0xff]
    %v1679 = vld [vmem:[#allocation5 + $0x1fc8] sm:$0xff]
    %v1680 = vld [vmem:[#allocation5 + $0x1fd0] sm:$0xff]
    %v1681 = vld [vmem:[#allocation5 + $0x1fd8] sm:$0xff]
    %v1682 = vld [vmem:[#allocation5 + $0x1fe0] sm:$0xff]
    %v1683 = vld [vmem:[#allocation5 + $0x1fe8] sm:$0xff]
    %v1684 = vld [vmem:[#allocation5 + $0x1ff0] sm:$0xff]
    %v1685 = vld [vmem:[#allocation5 + $0x1ff8] sm:$0xff]
    %v1686 = vpack.c.bf16 %v666, %v662
    %v1687 = vpack.c.bf16 %v667, %v663
    %v1688 = vpack.c.bf16 %v668, %v664
    %v1689 = vpack.c.bf16 %v669, %v665
    %v1690 = vpack.c.bf16 %v674, %v670
    %v1691 = vpack.c.bf16 %v675, %v671
    %v1692 = vpack.c.bf16 %v676, %v672
    %v1693 = vpack.c.bf16 %v677, %v673
    %v1694 = vpack.c.bf16 %v682, %v678
    %v1695 = vpack.c.bf16 %v683, %v679
    %v1696 = vpack.c.bf16 %v684, %v680
    %v1697 = vpack.c.bf16 %v685, %v681
    %v1698 = vpack.c.bf16 %v690, %v686
    %v1699 = vpack.c.bf16 %v691, %v687
    %v1700 = vpack.c.bf16 %v692, %v688
    %v1701 = vpack.c.bf16 %v693, %v689
    %v1702 = vpack.c.bf16 %v698, %v694
    %v1703 = vpack.c.bf16 %v699, %v695
    %v1704 = vpack.c.bf16 %v700, %v696
    %v1705 = vpack.c.bf16 %v701, %v697
    %v1706 = vpack.c.bf16 %v706, %v702
    %v1707 = vpack.c.bf16 %v707, %v703
    %v1708 = vpack.c.bf16 %v708, %v704
    %v1709 = vpack.c.bf16 %v709, %v705
    %v1710 = vpack.c.bf16 %v714, %v710
    %v1711 = vpack.c.bf16 %v715, %v711
    %v1712 = vpack.c.bf16 %v716, %v712
    %v1713 = vpack.c.bf16 %v717, %v713
    %v1714 = vpack.c.bf16 %v722, %v718
    %v1715 = vpack.c.bf16 %v723, %v719
    %v1716 = vpack.c.bf16 %v724, %v720
    %v1717 = vpack.c.bf16 %v725, %v721
    %v1718 = vpack.c.bf16 %v730, %v726
    %v1719 = vpack.c.bf16 %v731, %v727
    %v1720 = vpack.c.bf16 %v732, %v728
    %v1721 = vpack.c.bf16 %v733, %v729
    %v1722 = vpack.c.bf16 %v738, %v734
    %v1723 = vpack.c.bf16 %v739, %v735
    %v1724 = vpack.c.bf16 %v740, %v736
    %v1725 = vpack.c.bf16 %v741, %v737
    %v1726 = vpack.c.bf16 %v746, %v742
    %v1727 = vpack.c.bf16 %v747, %v743
    %v1728 = vpack.c.bf16 %v748, %v744
    %v1729 = vpack.c.bf16 %v749, %v745
    %v1730 = vpack.c.bf16 %v754, %v750
    %v1731 = vpack.c.bf16 %v755, %v751
    %v1732 = vpack.c.bf16 %v756, %v752
    %v1733 = vpack.c.bf16 %v757, %v753
    %v1734 = vpack.c.bf16 %v762, %v758
    %v1735 = vpack.c.bf16 %v763, %v759
    %v1736 = vpack.c.bf16 %v764, %v760
    %v1737 = vpack.c.bf16 %v765, %v761
    %v1738 = vpack.c.bf16 %v770, %v766
    %v1739 = vpack.c.bf16 %v771, %v767
    %v1740 = vpack.c.bf16 %v772, %v768
    %v1741 = vpack.c.bf16 %v773, %v769
    %v1742 = vpack.c.bf16 %v778, %v774
    %v1743 = vpack.c.bf16 %v779, %v775
    %v1744 = vpack.c.bf16 %v780, %v776
    %v1745 = vpack.c.bf16 %v781, %v777
    %v1746 = vpack.c.bf16 %v786, %v782
    %v1747 = vpack.c.bf16 %v787, %v783
    %v1748 = vpack.c.bf16 %v788, %v784
    %v1749 = vpack.c.bf16 %v789, %v785
    %v1750 = vpack.c.bf16 %v794, %v790
    %v1751 = vpack.c.bf16 %v795, %v791
    %v1752 = vpack.c.bf16 %v796, %v792
    %v1753 = vpack.c.bf16 %v797, %v793
    %v1754 = vpack.c.bf16 %v802, %v798
    %v1755 = vpack.c.bf16 %v803, %v799
    %v1756 = vpack.c.bf16 %v804, %v800
    %v1757 = vpack.c.bf16 %v805, %v801
    %v1758 = vpack.c.bf16 %v810, %v806
    %v1759 = vpack.c.bf16 %v811, %v807
    %v1760 = vpack.c.bf16 %v812, %v808
    %v1761 = vpack.c.bf16 %v813, %v809
    %v1762 = vpack.c.bf16 %v818, %v814
    %v1763 = vpack.c.bf16 %v819, %v815
    %v1764 = vpack.c.bf16 %v820, %v816
    %v1765 = vpack.c.bf16 %v821, %v817
    %v1766 = vpack.c.bf16 %v826, %v822
    %v1767 = vpack.c.bf16 %v827, %v823
    %v1768 = vpack.c.bf16 %v828, %v824
    %v1769 = vpack.c.bf16 %v829, %v825
    %v1770 = vpack.c.bf16 %v834, %v830
    %v1771 = vpack.c.bf16 %v835, %v831
    %v1772 = vpack.c.bf16 %v836, %v832
    %v1773 = vpack.c.bf16 %v837, %v833
    %v1774 = vpack.c.bf16 %v842, %v838
    %v1775 = vpack.c.bf16 %v843, %v839
    %v1776 = vpack.c.bf16 %v844, %v840
    %v1777 = vpack.c.bf16 %v845, %v841
    %v1778 = vpack.c.bf16 %v850, %v846
    %v1779 = vpack.c.bf16 %v851, %v847
    %v1780 = vpack.c.bf16 %v852, %v848
    %v1781 = vpack.c.bf16 %v853, %v849
    %v1782 = vpack.c.bf16 %v858, %v854
    %v1783 = vpack.c.bf16 %v859, %v855
    %v1784 = vpack.c.bf16 %v860, %v856
    %v1785 = vpack.c.bf16 %v861, %v857
    %v1786 = vpack.c.bf16 %v866, %v862
    %v1787 = vpack.c.bf16 %v867, %v863
    %v1788 = vpack.c.bf16 %v868, %v864
    %v1789 = vpack.c.bf16 %v869, %v865
    %v1790 = vpack.c.bf16 %v874, %v870
    %v1791 = vpack.c.bf16 %v875, %v871
    %v1792 = vpack.c.bf16 %v876, %v872
    %v1793 = vpack.c.bf16 %v877, %v873
    %v1794 = vpack.c.bf16 %v882, %v878
    %v1795 = vpack.c.bf16 %v883, %v879
    %v1796 = vpack.c.bf16 %v884, %v880
    %v1797 = vpack.c.bf16 %v885, %v881
    %v1798 = vpack.c.bf16 %v890, %v886
    %v1799 = vpack.c.bf16 %v891, %v887
    %v1800 = vpack.c.bf16 %v892, %v888
    %v1801 = vpack.c.bf16 %v893, %v889
    %v1802 = vpack.c.bf16 %v898, %v894
    %v1803 = vpack.c.bf16 %v899, %v895
    %v1804 = vpack.c.bf16 %v900, %v896
    %v1805 = vpack.c.bf16 %v901, %v897
    %v1806 = vpack.c.bf16 %v906, %v902
    %v1807 = vpack.c.bf16 %v907, %v903
    %v1808 = vpack.c.bf16 %v908, %v904
    %v1809 = vpack.c.bf16 %v909, %v905
    %v1810 = vpack.c.bf16 %v914, %v910
    %v1811 = vpack.c.bf16 %v915, %v911
    %v1812 = vpack.c.bf16 %v916, %v912
    %v1813 = vpack.c.bf16 %v917, %v913
    %v1814 = vpack.c.bf16 %v922, %v918
    %v1815 = vpack.c.bf16 %v923, %v919
    %v1816 = vpack.c.bf16 %v924, %v920
    %v1817 = vpack.c.bf16 %v925, %v921
    %v1818 = vpack.c.bf16 %v930, %v926
    %v1819 = vpack.c.bf16 %v931, %v927
    %v1820 = vpack.c.bf16 %v932, %v928
    %v1821 = vpack.c.bf16 %v933, %v929
    %v1822 = vpack.c.bf16 %v938, %v934
    %v1823 = vpack.c.bf16 %v939, %v935
    %v1824 = vpack.c.bf16 %v940, %v936
    %v1825 = vpack.c.bf16 %v941, %v937
    %v1826 = vpack.c.bf16 %v946, %v942
    %v1827 = vpack.c.bf16 %v947, %v943
    %v1828 = vpack.c.bf16 %v948, %v944
    %v1829 = vpack.c.bf16 %v949, %v945
    %v1830 = vpack.c.bf16 %v954, %v950
    %v1831 = vpack.c.bf16 %v955, %v951
    %v1832 = vpack.c.bf16 %v956, %v952
    %v1833 = vpack.c.bf16 %v957, %v953
    %v1834 = vpack.c.bf16 %v962, %v958
    %v1835 = vpack.c.bf16 %v963, %v959
    %v1836 = vpack.c.bf16 %v964, %v960
    %v1837 = vpack.c.bf16 %v965, %v961
    %v1838 = vpack.c.bf16 %v970, %v966
    %v1839 = vpack.c.bf16 %v971, %v967
    %v1840 = vpack.c.bf16 %v972, %v968
    %v1841 = vpack.c.bf16 %v973, %v969
    %v1842 = vpack.c.bf16 %v978, %v974
    %v1843 = vpack.c.bf16 %v979, %v975
    %v1844 = vpack.c.bf16 %v980, %v976
    %v1845 = vpack.c.bf16 %v981, %v977
    %v1846 = vpack.c.bf16 %v986, %v982
    %v1847 = vpack.c.bf16 %v987, %v983
    %v1848 = vpack.c.bf16 %v988, %v984
    %v1849 = vpack.c.bf16 %v989, %v985
    %v1850 = vpack.c.bf16 %v994, %v990
    %v1851 = vpack.c.bf16 %v995, %v991
    %v1852 = vpack.c.bf16 %v996, %v992
    %v1853 = vpack.c.bf16 %v997, %v993
    %v1854 = vpack.c.bf16 %v1002, %v998
    %v1855 = vpack.c.bf16 %v1003, %v999
    %v1856 = vpack.c.bf16 %v1004, %v1000
    %v1857 = vpack.c.bf16 %v1005, %v1001
    %v1858 = vpack.c.bf16 %v1010, %v1006
    %v1859 = vpack.c.bf16 %v1011, %v1007
    %v1860 = vpack.c.bf16 %v1012, %v1008
    %v1861 = vpack.c.bf16 %v1013, %v1009
    %v1862 = vpack.c.bf16 %v1018, %v1014
    %v1863 = vpack.c.bf16 %v1019, %v1015
    %v1864 = vpack.c.bf16 %v1020, %v1016
    %v1865 = vpack.c.bf16 %v1021, %v1017
    %v1866 = vpack.c.bf16 %v1026, %v1022
    %v1867 = vpack.c.bf16 %v1027, %v1023
    %v1868 = vpack.c.bf16 %v1028, %v1024
    %v1869 = vpack.c.bf16 %v1029, %v1025
    %v1870 = vpack.c.bf16 %v1034, %v1030
    %v1871 = vpack.c.bf16 %v1035, %v1031
    %v1872 = vpack.c.bf16 %v1036, %v1032
    %v1873 = vpack.c.bf16 %v1037, %v1033
    %v1874 = vpack.c.bf16 %v1042, %v1038
    %v1875 = vpack.c.bf16 %v1043, %v1039
    %v1876 = vpack.c.bf16 %v1044, %v1040
    %v1877 = vpack.c.bf16 %v1045, %v1041
    %v1878 = vpack.c.bf16 %v1050, %v1046
    %v1879 = vpack.c.bf16 %v1051, %v1047
    %v1880 = vpack.c.bf16 %v1052, %v1048
    %v1881 = vpack.c.bf16 %v1053, %v1049
    %v1882 = vpack.c.bf16 %v1058, %v1054
    %v1883 = vpack.c.bf16 %v1059, %v1055
    %v1884 = vpack.c.bf16 %v1060, %v1056
    %v1885 = vpack.c.bf16 %v1061, %v1057
    %v1886 = vpack.c.bf16 %v1066, %v1062
    %v1887 = vpack.c.bf16 %v1067, %v1063
    %v1888 = vpack.c.bf16 %v1068, %v1064
    %v1889 = vpack.c.bf16 %v1069, %v1065
    %v1890 = vpack.c.bf16 %v1074, %v1070
    %v1891 = vpack.c.bf16 %v1075, %v1071
    %v1892 = vpack.c.bf16 %v1076, %v1072
    %v1893 = vpack.c.bf16 %v1077, %v1073
    %v1894 = vpack.c.bf16 %v1082, %v1078
    %v1895 = vpack.c.bf16 %v1083, %v1079
    %v1896 = vpack.c.bf16 %v1084, %v1080
    %v1897 = vpack.c.bf16 %v1085, %v1081
    %v1898 = vpack.c.bf16 %v1090, %v1086
    %v1899 = vpack.c.bf16 %v1091, %v1087
    %v1900 = vpack.c.bf16 %v1092, %v1088
    %v1901 = vpack.c.bf16 %v1093, %v1089
    %v1902 = vpack.c.bf16 %v1098, %v1094
    %v1903 = vpack.c.bf16 %v1099, %v1095
    %v1904 = vpack.c.bf16 %v1100, %v1096
    %v1905 = vpack.c.bf16 %v1101, %v1097
    %v1906 = vpack.c.bf16 %v1106, %v1102
    %v1907 = vpack.c.bf16 %v1107, %v1103
    %v1908 = vpack.c.bf16 %v1108, %v1104
    %v1909 = vpack.c.bf16 %v1109, %v1105
    %v1910 = vpack.c.bf16 %v1114, %v1110
    %v1911 = vpack.c.bf16 %v1115, %v1111
    %v1912 = vpack.c.bf16 %v1116, %v1112
    %v1913 = vpack.c.bf16 %v1117, %v1113
    %v1914 = vpack.c.bf16 %v1122, %v1118
    %v1915 = vpack.c.bf16 %v1123, %v1119
    %v1916 = vpack.c.bf16 %v1124, %v1120
    %v1917 = vpack.c.bf16 %v1125, %v1121
    %v1918 = vpack.c.bf16 %v1130, %v1126
    %v1919 = vpack.c.bf16 %v1131, %v1127
    %v1920 = vpack.c.bf16 %v1132, %v1128
    %v1921 = vpack.c.bf16 %v1133, %v1129
    %v1922 = vpack.c.bf16 %v1138, %v1134
    %v1923 = vpack.c.bf16 %v1139, %v1135
    %v1924 = vpack.c.bf16 %v1140, %v1136
    %v1925 = vpack.c.bf16 %v1141, %v1137
    %v1926 = vpack.c.bf16 %v1146, %v1142
    %v1927 = vpack.c.bf16 %v1147, %v1143
    %v1928 = vpack.c.bf16 %v1148, %v1144
    %v1929 = vpack.c.bf16 %v1149, %v1145
    %v1930 = vpack.c.bf16 %v1154, %v1150
    %v1931 = vpack.c.bf16 %v1155, %v1151
    %v1932 = vpack.c.bf16 %v1156, %v1152
    %v1933 = vpack.c.bf16 %v1157, %v1153
    %v1934 = vpack.c.bf16 %v1162, %v1158
    %v1935 = vpack.c.bf16 %v1163, %v1159
    %v1936 = vpack.c.bf16 %v1164, %v1160
    %v1937 = vpack.c.bf16 %v1165, %v1161
    %v1938 = vpack.c.bf16 %v1170, %v1166
    %v1939 = vpack.c.bf16 %v1171, %v1167
    %v1940 = vpack.c.bf16 %v1172, %v1168
    %v1941 = vpack.c.bf16 %v1173, %v1169
    %v1942 = vpack.c.bf16 %v1178, %v1174
    %v1943 = vpack.c.bf16 %v1179, %v1175
    %v1944 = vpack.c.bf16 %v1180, %v1176
    %v1945 = vpack.c.bf16 %v1181, %v1177
    %v1946 = vpack.c.bf16 %v1186, %v1182
    %v1947 = vpack.c.bf16 %v1187, %v1183
    %v1948 = vpack.c.bf16 %v1188, %v1184
    %v1949 = vpack.c.bf16 %v1189, %v1185
    %v1950 = vpack.c.bf16 %v1194, %v1190
    %v1951 = vpack.c.bf16 %v1195, %v1191
    %v1952 = vpack.c.bf16 %v1196, %v1192
    %v1953 = vpack.c.bf16 %v1197, %v1193
    %v1954 = vpack.c.bf16 %v1202, %v1198
    %v1955 = vpack.c.bf16 %v1203, %v1199
    %v1956 = vpack.c.bf16 %v1204, %v1200
    %v1957 = vpack.c.bf16 %v1205, %v1201
    %v1958 = vpack.c.bf16 %v1210, %v1206
    %v1959 = vpack.c.bf16 %v1211, %v1207
    %v1960 = vpack.c.bf16 %v1212, %v1208
    %v1961 = vpack.c.bf16 %v1213, %v1209
    %v1962 = vpack.c.bf16 %v1218, %v1214
    %v1963 = vpack.c.bf16 %v1219, %v1215
    %v1964 = vpack.c.bf16 %v1220, %v1216
    %v1965 = vpack.c.bf16 %v1221, %v1217
    %v1966 = vpack.c.bf16 %v1226, %v1222
    %v1967 = vpack.c.bf16 %v1227, %v1223
    %v1968 = vpack.c.bf16 %v1228, %v1224
    %v1969 = vpack.c.bf16 %v1229, %v1225
    %v1970 = vpack.c.bf16 %v1234, %v1230
    %v1971 = vpack.c.bf16 %v1235, %v1231
    %v1972 = vpack.c.bf16 %v1236, %v1232
    %v1973 = vpack.c.bf16 %v1237, %v1233
    %v1974 = vpack.c.bf16 %v1242, %v1238
    %v1975 = vpack.c.bf16 %v1243, %v1239
    %v1976 = vpack.c.bf16 %v1244, %v1240
    %v1977 = vpack.c.bf16 %v1245, %v1241
    %v1978 = vpack.c.bf16 %v1250, %v1246
    %v1979 = vpack.c.bf16 %v1251, %v1247
    %v1980 = vpack.c.bf16 %v1252, %v1248
    %v1981 = vpack.c.bf16 %v1253, %v1249
    %v1982 = vpack.c.bf16 %v1258, %v1254
    %v1983 = vpack.c.bf16 %v1259, %v1255
    %v1984 = vpack.c.bf16 %v1260, %v1256
    %v1985 = vpack.c.bf16 %v1261, %v1257
    %v1986 = vpack.c.bf16 %v1266, %v1262
    %v1987 = vpack.c.bf16 %v1267, %v1263
    %v1988 = vpack.c.bf16 %v1268, %v1264
    %v1989 = vpack.c.bf16 %v1269, %v1265
    %v1990 = vpack.c.bf16 %v1274, %v1270
    %v1991 = vpack.c.bf16 %v1275, %v1271
    %v1992 = vpack.c.bf16 %v1276, %v1272
    %v1993 = vpack.c.bf16 %v1277, %v1273
    %v1994 = vpack.c.bf16 %v1282, %v1278
    %v1995 = vpack.c.bf16 %v1283, %v1279
    %v1996 = vpack.c.bf16 %v1284, %v1280
    %v1997 = vpack.c.bf16 %v1285, %v1281
    %v1998 = vpack.c.bf16 %v1290, %v1286
    %v1999 = vpack.c.bf16 %v1291, %v1287
    %v2000 = vpack.c.bf16 %v1292, %v1288
    %v2001 = vpack.c.bf16 %v1293, %v1289
    %v2002 = vpack.c.bf16 %v1298, %v1294
    %v2003 = vpack.c.bf16 %v1299, %v1295
    %v2004 = vpack.c.bf16 %v1300, %v1296
    %v2005 = vpack.c.bf16 %v1301, %v1297
    %v2006 = vpack.c.bf16 %v1306, %v1302
    %v2007 = vpack.c.bf16 %v1307, %v1303
    %v2008 = vpack.c.bf16 %v1308, %v1304
    %v2009 = vpack.c.bf16 %v1309, %v1305
    %v2010 = vpack.c.bf16 %v1314, %v1310
    %v2011 = vpack.c.bf16 %v1315, %v1311
    %v2012 = vpack.c.bf16 %v1316, %v1312
    %v2013 = vpack.c.bf16 %v1317, %v1313
    %v2014 = vpack.c.bf16 %v1322, %v1318
    %v2015 = vpack.c.bf16 %v1323, %v1319
    %v2016 = vpack.c.bf16 %v1324, %v1320
    %v2017 = vpack.c.bf16 %v1325, %v1321
    %v2018 = vpack.c.bf16 %v1330, %v1326
    %v2019 = vpack.c.bf16 %v1331, %v1327
    %v2020 = vpack.c.bf16 %v1332, %v1328
    %v2021 = vpack.c.bf16 %v1333, %v1329
    %v2022 = vpack.c.bf16 %v1338, %v1334
    %v2023 = vpack.c.bf16 %v1339, %v1335
    %v2024 = vpack.c.bf16 %v1340, %v1336
    %v2025 = vpack.c.bf16 %v1341, %v1337
    %v2026 = vpack.c.bf16 %v1346, %v1342
    %v2027 = vpack.c.bf16 %v1347, %v1343
    %v2028 = vpack.c.bf16 %v1348, %v1344
    %v2029 = vpack.c.bf16 %v1349, %v1345
    %v2030 = vpack.c.bf16 %v1354, %v1350
    %v2031 = vpack.c.bf16 %v1355, %v1351
    %v2032 = vpack.c.bf16 %v1356, %v1352
    %v2033 = vpack.c.bf16 %v1357, %v1353
    %v2034 = vpack.c.bf16 %v1362, %v1358
    %v2035 = vpack.c.bf16 %v1363, %v1359
    %v2036 = vpack.c.bf16 %v1364, %v1360
    %v2037 = vpack.c.bf16 %v1365, %v1361
    %v2038 = vpack.c.bf16 %v1370, %v1366
    %v2039 = vpack.c.bf16 %v1371, %v1367
    %v2040 = vpack.c.bf16 %v1372, %v1368
    %v2041 = vpack.c.bf16 %v1373, %v1369
    %v2042 = vpack.c.bf16 %v1378, %v1374
    %v2043 = vpack.c.bf16 %v1379, %v1375
    %v2044 = vpack.c.bf16 %v1380, %v1376
    %v2045 = vpack.c.bf16 %v1381, %v1377
    %v2046 = vpack.c.bf16 %v1386, %v1382
    %v2047 = vpack.c.bf16 %v1387, %v1383
    %v2048 = vpack.c.bf16 %v1388, %v1384
    %v2049 = vpack.c.bf16 %v1389, %v1385
    %v2050 = vpack.c.bf16 %v1394, %v1390
    %v2051 = vpack.c.bf16 %v1395, %v1391
    %v2052 = vpack.c.bf16 %v1396, %v1392
    %v2053 = vpack.c.bf16 %v1397, %v1393
    %v2054 = vpack.c.bf16 %v1402, %v1398
    %v2055 = vpack.c.bf16 %v1403, %v1399
    %v2056 = vpack.c.bf16 %v1404, %v1400
    %v2057 = vpack.c.bf16 %v1405, %v1401
    %v2058 = vpack.c.bf16 %v1410, %v1406
    %v2059 = vpack.c.bf16 %v1411, %v1407
    %v2060 = vpack.c.bf16 %v1412, %v1408
    %v2061 = vpack.c.bf16 %v1413, %v1409
    %v2062 = vpack.c.bf16 %v1418, %v1414
    %v2063 = vpack.c.bf16 %v1419, %v1415
    %v2064 = vpack.c.bf16 %v1420, %v1416
    %v2065 = vpack.c.bf16 %v1421, %v1417
    %v2066 = vpack.c.bf16 %v1426, %v1422
    %v2067 = vpack.c.bf16 %v1427, %v1423
    %v2068 = vpack.c.bf16 %v1428, %v1424
    %v2069 = vpack.c.bf16 %v1429, %v1425
    %v2070 = vpack.c.bf16 %v1434, %v1430
    %v2071 = vpack.c.bf16 %v1435, %v1431
    %v2072 = vpack.c.bf16 %v1436, %v1432
    %v2073 = vpack.c.bf16 %v1437, %v1433
    %v2074 = vpack.c.bf16 %v1442, %v1438
    %v2075 = vpack.c.bf16 %v1443, %v1439
    %v2076 = vpack.c.bf16 %v1444, %v1440
    %v2077 = vpack.c.bf16 %v1445, %v1441
    %v2078 = vpack.c.bf16 %v1450, %v1446
    %v2079 = vpack.c.bf16 %v1451, %v1447
    %v2080 = vpack.c.bf16 %v1452, %v1448
    %v2081 = vpack.c.bf16 %v1453, %v1449
    %v2082 = vpack.c.bf16 %v1458, %v1454
    %v2083 = vpack.c.bf16 %v1459, %v1455
    %v2084 = vpack.c.bf16 %v1460, %v1456
    %v2085 = vpack.c.bf16 %v1461, %v1457
    %v2086 = vpack.c.bf16 %v1466, %v1462
    %v2087 = vpack.c.bf16 %v1467, %v1463
    %v2088 = vpack.c.bf16 %v1468, %v1464
    %v2089 = vpack.c.bf16 %v1469, %v1465
    %v2090 = vpack.c.bf16 %v1474, %v1470
    %v2091 = vpack.c.bf16 %v1475, %v1471
    %v2092 = vpack.c.bf16 %v1476, %v1472
    %v2093 = vpack.c.bf16 %v1477, %v1473
    %v2094 = vpack.c.bf16 %v1482, %v1478
    %v2095 = vpack.c.bf16 %v1483, %v1479
    %v2096 = vpack.c.bf16 %v1484, %v1480
    %v2097 = vpack.c.bf16 %v1485, %v1481
    %v2098 = vpack.c.bf16 %v1490, %v1486
    %v2099 = vpack.c.bf16 %v1491, %v1487
    %v2100 = vpack.c.bf16 %v1492, %v1488
    %v2101 = vpack.c.bf16 %v1493, %v1489
    %v2102 = vpack.c.bf16 %v1498, %v1494
    %v2103 = vpack.c.bf16 %v1499, %v1495
    %v2104 = vpack.c.bf16 %v1500, %v1496
    %v2105 = vpack.c.bf16 %v1501, %v1497
    %v2106 = vpack.c.bf16 %v1506, %v1502
    %v2107 = vpack.c.bf16 %v1507, %v1503
    %v2108 = vpack.c.bf16 %v1508, %v1504
    %v2109 = vpack.c.bf16 %v1509, %v1505
    %v2110 = vpack.c.bf16 %v1514, %v1510
    %v2111 = vpack.c.bf16 %v1515, %v1511
    %v2112 = vpack.c.bf16 %v1516, %v1512
    %v2113 = vpack.c.bf16 %v1517, %v1513
    %v2114 = vpack.c.bf16 %v1522, %v1518
    %v2115 = vpack.c.bf16 %v1523, %v1519
    %v2116 = vpack.c.bf16 %v1524, %v1520
    %v2117 = vpack.c.bf16 %v1525, %v1521
    %v2118 = vpack.c.bf16 %v1530, %v1526
    %v2119 = vpack.c.bf16 %v1531, %v1527
    %v2120 = vpack.c.bf16 %v1532, %v1528
    %v2121 = vpack.c.bf16 %v1533, %v1529
    %v2122 = vpack.c.bf16 %v1538, %v1534
    %v2123 = vpack.c.bf16 %v1539, %v1535
    %v2124 = vpack.c.bf16 %v1540, %v1536
    %v2125 = vpack.c.bf16 %v1541, %v1537
    %v2126 = vpack.c.bf16 %v1546, %v1542
    %v2127 = vpack.c.bf16 %v1547, %v1543
    %v2128 = vpack.c.bf16 %v1548, %v1544
    %v2129 = vpack.c.bf16 %v1549, %v1545
    %v2130 = vpack.c.bf16 %v1554, %v1550
    %v2131 = vpack.c.bf16 %v1555, %v1551
    %v2132 = vpack.c.bf16 %v1556, %v1552
    %v2133 = vpack.c.bf16 %v1557, %v1553
    %v2134 = vpack.c.bf16 %v1562, %v1558
    %v2135 = vpack.c.bf16 %v1563, %v1559
    %v2136 = vpack.c.bf16 %v1564, %v1560
    %v2137 = vpack.c.bf16 %v1565, %v1561
    %v2138 = vpack.c.bf16 %v1570, %v1566
    %v2139 = vpack.c.bf16 %v1571, %v1567
    %v2140 = vpack.c.bf16 %v1572, %v1568
    %v2141 = vpack.c.bf16 %v1573, %v1569
    %v2142 = vpack.c.bf16 %v1578, %v1574
    %v2143 = vpack.c.bf16 %v1579, %v1575
    %v2144 = vpack.c.bf16 %v1580, %v1576
    %v2145 = vpack.c.bf16 %v1581, %v1577
    %v2146 = vpack.c.bf16 %v1586, %v1582
    %v2147 = vpack.c.bf16 %v1587, %v1583
    %v2148 = vpack.c.bf16 %v1588, %v1584
    %v2149 = vpack.c.bf16 %v1589, %v1585
    %v2150 = vpack.c.bf16 %v1594, %v1590
    %v2151 = vpack.c.bf16 %v1595, %v1591
    %v2152 = vpack.c.bf16 %v1596, %v1592
    %v2153 = vpack.c.bf16 %v1597, %v1593
    %v2154 = vpack.c.bf16 %v1602, %v1598
    %v2155 = vpack.c.bf16 %v1603, %v1599
    %v2156 = vpack.c.bf16 %v1604, %v1600
    %v2157 = vpack.c.bf16 %v1605, %v1601
    %v2158 = vpack.c.bf16 %v1610, %v1606
    %v2159 = vpack.c.bf16 %v1611, %v1607
    %v2160 = vpack.c.bf16 %v1612, %v1608
    %v2161 = vpack.c.bf16 %v1613, %v1609
    %v2162 = vpack.c.bf16 %v1618, %v1614
    %v2163 = vpack.c.bf16 %v1619, %v1615
    %v2164 = vpack.c.bf16 %v1620, %v1616
    %v2165 = vpack.c.bf16 %v1621, %v1617
    %v2166 = vpack.c.bf16 %v1626, %v1622
    %v2167 = vpack.c.bf16 %v1627, %v1623
    %v2168 = vpack.c.bf16 %v1628, %v1624
    %v2169 = vpack.c.bf16 %v1629, %v1625
    %v2170 = vpack.c.bf16 %v1634, %v1630
    %v2171 = vpack.c.bf16 %v1635, %v1631
    %v2172 = vpack.c.bf16 %v1636, %v1632
    %v2173 = vpack.c.bf16 %v1637, %v1633
    %v2174 = vpack.c.bf16 %v1642, %v1638
    %v2175 = vpack.c.bf16 %v1643, %v1639
    %v2176 = vpack.c.bf16 %v1644, %v1640
    %v2177 = vpack.c.bf16 %v1645, %v1641
    %v2178 = vpack.c.bf16 %v1650, %v1646
    %v2179 = vpack.c.bf16 %v1651, %v1647
    %v2180 = vpack.c.bf16 %v1652, %v1648
    %v2181 = vpack.c.bf16 %v1653, %v1649
    %v2182 = vpack.c.bf16 %v1658, %v1654
    %v2183 = vpack.c.bf16 %v1659, %v1655
    %v2184 = vpack.c.bf16 %v1660, %v1656
    %v2185 = vpack.c.bf16 %v1661, %v1657
    %v2186 = vpack.c.bf16 %v1666, %v1662
    %v2187 = vpack.c.bf16 %v1667, %v1663
    %v2188 = vpack.c.bf16 %v1668, %v1664
    %v2189 = vpack.c.bf16 %v1669, %v1665
    %v2190 = vpack.c.bf16 %v1674, %v1670
    %v2191 = vpack.c.bf16 %v1675, %v1671
    %v2192 = vpack.c.bf16 %v1676, %v1672
    %v2193 = vpack.c.bf16 %v1677, %v1673
    %v2194 = vpack.c.bf16 %v1682, %v1678
    %v2195 = vpack.c.bf16 %v1683, %v1679
    %v2196 = vpack.c.bf16 %v1684, %v1680
    %v2197 = vpack.c.bf16 %v1685, %v1681
    %v2198 = vld [vmem:[#allocation7] sm:$0xf]
    %v2200 = vlaneseq
    %v2201 = vshrl.u32 %v2200, 7
    %v2202 = vsub.s32 0, %v2201
    %v2203 = vrot.slane %v2198, %v2202
    %v2204 = vlaneseq
    %v2205 = vshrl.u32 %v2204, 7
    %v2206 = vsub.s32 1, %v2205
    %v2207 = vrot.slane %v2198, %v2206
    %v2208 = vlaneseq
    %v2209 = vshrl.u32 %v2208, 7
    %v2210 = vsub.s32 2, %v2209
    %v2211 = vrot.slane %v2198, %v2210
    %v2212 = vlaneseq
    %v2213 = vshrl.u32 %v2212, 7
    %v2214 = vsub.s32 3, %v2213
    %v2215 = vrot.slane %v2198, %v2214
    %2220 = vmatprep.subr.bf16.mxu0 %v1687
    %2221 = vmatpush1.bf16.msra.mxu0 %v1686
    %2222 = vmatprep.subr.bf16.mxu0 %v1691
    %2223 = vmatpush1.bf16.msra.mxu0 %v1690
    %2224 = vmatprep.subr.bf16.mxu0 %v1695
    %2225 = vmatpush1.bf16.msra.mxu0 %v1694
    %2226 = vmatprep.subr.bf16.mxu0 %v1699
    %2227 = vmatpush1.bf16.msra.mxu0 %v1698
    %2228 = vmatprep.subr.bf16.mxu0 %v1703
    %2229 = vmatpush1.bf16.msra.mxu0 %v1702
    %2230 = vmatprep.subr.bf16.mxu0 %v1707
    %2231 = vmatpush1.bf16.msra.mxu0 %v1706
    %2232 = vmatprep.subr.bf16.mxu0 %v1711
    %2233 = vmatpush1.bf16.msra.mxu0 %v1710
    %2234 = vmatprep.subr.bf16.mxu0 %v1715
    %2235 = vmatpush1.bf16.msra.mxu0 %v1714
    %2236 = vmatprep.subr.bf16.mxu0 %v1719
    %2237 = vmatpush1.bf16.msra.mxu0 %v1718
    %2238 = vmatprep.subr.bf16.mxu0 %v1723
    %2239 = vmatpush1.bf16.msra.mxu0 %v1722
    %2240 = vmatprep.subr.bf16.mxu0 %v1727
    %2241 = vmatpush1.bf16.msra.mxu0 %v1726
    %2242 = vmatprep.subr.bf16.mxu0 %v1731
    %2243 = vmatpush1.bf16.msra.mxu0 %v1730
    %2244 = vmatprep.subr.bf16.mxu0 %v1735
    %2245 = vmatpush1.bf16.msra.mxu0 %v1734
    %2246 = vmatprep.subr.bf16.mxu0 %v1739
    %2247 = vmatpush1.bf16.msra.mxu0 %v1738
    %2248 = vmatprep.subr.bf16.mxu0 %v1743
    %2249 = vmatpush1.bf16.msra.mxu0 %v1742
    %2250 = vmatprep.subr.bf16.mxu0 %v1747
    %2251 = vmatpush1.bf16.msra.mxu0 %v1746
    %2252 = vmatprep.mubr.bf16.mxu0 %v455
    %2253 = vmatmul.mubr.bf16.gmra.mrb[0].mxu0 %v454
    %v2254 = vpop.f32.mrb[0].mxu0
    %v2255 = vadd.f32 %v2203, %v2254
    %v2256 = vpop.f32.mrb[0].mxu0
    %v2257 = vadd.f32 %v2207, %v2256
    %v2258 = vpop.f32.mrb[0].mxu0
    %v2259 = vadd.f32 %v2203, %v2258
    %v2260 = vpop.f32.mrb[0].mxu0
    %v2261 = vadd.f32 %v2207, %v2260
    %2262 = vmatprep.mubr.bf16.mxu0 %v471
    %2263 = vmatmul.mubr.bf16.gmra.mrb[0].mxu0 %v470
    %v2264 = vpop.f32.mrb[0].mxu0
    %v2265 = vadd.f32 %v2203, %v2264
    %v2266 = vpop.f32.mrb[0].mxu0
    %v2267 = vadd.f32 %v2207, %v2266
    %v2268 = vpop.f32.mrb[0].mxu0
    %v2269 = vadd.f32 %v2203, %v2268
    %v2270 = vpop.f32.mrb[0].mxu0
    %v2271 = vadd.f32 %v2207, %v2270
    %2272 = vmatprep.mubr.bf16.mxu0 %v487
    %2273 = vmatmul.mubr.bf16.gmra.mrb[0].mxu0 %v486
    %v2274 = vpop.f32.mrb[0].mxu0
    %v2275 = vadd.f32 %v2203, %v2274
    %v2276 = vpop.f32.mrb[0].mxu0
    %v2277 = vadd.f32 %v2207, %v2276
    %v2278 = vpop.f32.mrb[0].mxu0
    %v2279 = vadd.f32 %v2203, %v2278
    %v2280 = vpop.f32.mrb[0].mxu0
    %v2281 = vadd.f32 %v2207, %v2280
    %2282 = vmatprep.mubr.bf16.mxu0 %v503
    %2283 = vmatmul.mubr.bf16.gmra.mrb[0].mxu0 %v502
    %v2284 = vpop.f32.mrb[0].mxu0
    %v2285 = vadd.f32 %v2203, %v2284
    %v2286 = vpop.f32.mrb[0].mxu0
    %v2287 = vadd.f32 %v2207, %v2286
    %v2288 = vpop.f32.mrb[0].mxu0
    %v2289 = vadd.f32 %v2203, %v2288
    %v2290 = vpop.f32.mrb[0].mxu0
    %v2291 = vadd.f32 %v2207, %v2290
    %2292 = vmatprep.mubr.bf16.mxu0 %v519
    %2293 = vmatmul.mubr.bf16.gmra.mrb[0].mxu0 %v518
    %v2294 = vpop.f32.mrb[0].mxu0
    %v2295 = vadd.f32 %v2203, %v2294
    %v2296 = vpop.f32.mrb[0].mxu0
    %v2297 = vadd.f32 %v2207, %v2296
    %v2298 = vpop.f32.mrb[0].mxu0
    %v2299 = vadd.f32 %v2203, %v2298
    %v2300 = vpop.f32.mrb[0].mxu0
    %v2301 = vadd.f32 %v2207, %v2300
    %2302 = vmatprep.mubr.bf16.mxu0 %v535
    %2303 = vmatmul.mubr.bf16.gmra.mrb[0].mxu0 %v534
    %v2304 = vpop.f32.mrb[0].mxu0
    %v2305 = vadd.f32 %v2203, %v2304
    %v2306 = vpop.f32.mrb[0].mxu0
    %v2307 = vadd.f32 %v2207, %v2306
    %v2308 = vpop.f32.mrb[0].mxu0
    %v2309 = vadd.f32 %v2203, %v2308
    %v2310 = vpop.f32.mrb[0].mxu0
    %v2311 = vadd.f32 %v2207, %v2310
    %2312 = vmatprep.mubr.bf16.mxu0 %v551
    %2313 = vmatmul.mubr.bf16.gmra.mrb[0].mxu0 %v550
    %v2314 = vpop.f32.mrb[0].mxu0
    %v2315 = vadd.f32 %v2203, %v2314
    %v2316 = vpop.f32.mrb[0].mxu0
    %v2317 = vadd.f32 %v2207, %v2316
    %v2318 = vpop.f32.mrb[0].mxu0
    %v2319 = vadd.f32 %v2203, %v2318
    %v2320 = vpop.f32.mrb[0].mxu0
    %v2321 = vadd.f32 %v2207, %v2320
    %2322 = vmatprep.mubr.bf16.mxu0 %v567
    %2323 = vmatmul.mubr.bf16.gmra.mrb[0].mxu0 %v566
    %v2324 = vpop.f32.mrb[0].mxu0
    %v2325 = vadd.f32 %v2203, %v2324
    %v2326 = vpop.f32.mrb[0].mxu0
    %v2327 = vadd.f32 %v2207, %v2326
    %v2328 = vpop.f32.mrb[0].mxu0
    %v2329 = vadd.f32 %v2203, %v2328
    %v2330 = vpop.f32.mrb[0].mxu0
    %v2331 = vadd.f32 %v2207, %v2330
    %2332 = vmatprep.mubr.bf16.mxu0 %v583
    %2333 = vmatmul.mubr.bf16.gmra.mrb[0].mxu0 %v582
    %v2334 = vpop.f32.mrb[0].mxu0
    %v2335 = vadd.f32 %v2203, %v2334
    %v2336 = vpop.f32.mrb[0].mxu0
    %v2337 = vadd.f32 %v2207, %v2336
    %v2338 = vpop.f32.mrb[0].mxu0
    %v2339 = vadd.f32 %v2203, %v2338
    %v2340 = vpop.f32.mrb[0].mxu0
    %v2341 = vadd.f32 %v2207, %v2340
    %2342 = vmatprep.mubr.bf16.mxu0 %v599
    %2343 = vmatmul.mubr.bf16.gmra.mrb[0].mxu0 %v598
    %v2344 = vpop.f32.mrb[0].mxu0
    %v2345 = vadd.f32 %v2203, %v2344
    %v2346 = vpop.f32.mrb[0].mxu0
    %v2347 = vadd.f32 %v2207, %v2346
    %v2348 = vpop.f32.mrb[0].mxu0
    %v2349 = vadd.f32 %v2203, %v2348
    %v2350 = vpop.f32.mrb[0].mxu0
    %v2351 = vadd.f32 %v2207, %v2350
    %2352 = vmatprep.mubr.bf16.mxu0 %v615
    %2353 = vmatmul.mubr.bf16.gmra.mrb[0].mxu0 %v614
    %v2354 = vpop.f32.mrb[0].mxu0
    %v2355 = vadd.f32 %v2203, %v2354
    %v2356 = vpop.f32.mrb[0].mxu0
    %v2357 = vadd.f32 %v2207, %v2356
    %v2358 = vpop.f32.mrb[0].mxu0
    %v2359 = vadd.f32 %v2203, %v2358
    %v2360 = vpop.f32.mrb[0].mxu0
    %v2361 = vadd.f32 %v2207, %v2360
    %2362 = vmatprep.mubr.bf16.mxu0 %v631
    %2363 = vmatmul.mubr.bf16.gmra.mrb[0].mxu0 %v630
    %v2364 = vpop.f32.mrb[0].mxu0
    %v2365 = vadd.f32 %v2203, %v2364
    %v2366 = vpop.f32.mrb[0].mxu0
    %v2367 = vadd.f32 %v2207, %v2366
    %v2368 = vpop.f32.mrb[0].mxu0
    %v2369 = vadd.f32 %v2203, %v2368
    %v2370 = vpop.f32.mrb[0].mxu0
    %v2371 = vadd.f32 %v2207, %v2370
    %2372 = vmatprep.mubr.bf16.mxu0 %v647
    %2373 = vmatmul.mubr.bf16.gmra.mrb[0].mxu0 %v646
    %v2374 = vpop.f32.mrb[0].mxu0
    %v2375 = vadd.f32 %v2203, %v2374
    %v2376 = vpop.f32.mrb[0].mxu0
    %v2377 = vadd.f32 %v2207, %v2376
    %v2378 = vpop.f32.mrb[0].mxu0
    %v2379 = vpop.f32.mrb[0].mxu0
    %2380 = vdwg.mxu0
    %2381 = vmatprep.subr.bf16.mxu0 %v1751
    %2382 = vmatpush1.bf16.msra.mxu0 %v1750
    %2383 = vmatprep.subr.bf16.mxu0 %v1755
    %2384 = vmatpush1.bf16.msra.mxu0 %v1754
    %2385 = vmatprep.subr.bf16.mxu0 %v1759
    %2386 = vmatpush1.bf16.msra.mxu0 %v1758
    %2387 = vmatprep.subr.bf16.mxu0 %v1763
    %2388 = vmatpush1.bf16.msra.mxu0 %v1762
    %2389 = vmatprep.subr.bf16.mxu0 %v1767
    %2390 = vmatpush1.bf16.msra.mxu0 %v1766
    %2391 = vmatprep.subr.bf16.mxu0 %v1771
    %2392 = vmatpush1.bf16.msra.mxu0 %v1770
    %2393 = vmatprep.subr.bf16.mxu0 %v1775
    %2394 = vmatpush1.bf16.msra.mxu0 %v1774
    %2395 = vmatprep.subr.bf16.mxu0 %v1779
    %2396 = vmatpush1.bf16.msra.mxu0 %v1778
    %2397 = vmatprep.subr.bf16.mxu0 %v1783
    %2398 = vmatpush1.bf16.msra.mxu0 %v1782
    %2399 = vmatprep.subr.bf16.mxu0 %v1787
    %2400 = vmatpush1.bf16.msra.mxu0 %v1786
    %2401 = vmatprep.subr.bf16.mxu0 %v1791
    %2402 = vmatpush1.bf16.msra.mxu0 %v1790
    %2403 = vmatprep.subr.bf16.mxu0 %v1795
    %2404 = vmatpush1.bf16.msra.mxu0 %v1794
    %2405 = vmatprep.subr.bf16.mxu0 %v1799
    %2406 = vmatpush1.bf16.msra.mxu0 %v1798
    %2407 = vmatprep.subr.bf16.mxu0 %v1803
    %2408 = vmatpush1.bf16.msra.mxu0 %v1802
    %2409 = vmatprep.subr.bf16.mxu0 %v1807
    %2410 = vmatpush1.bf16.msra.mxu0 %v1806
    %2411 = vmatprep.subr.bf16.mxu0 %v1811
    %2412 = vmatpush1.bf16.msra.mxu0 %v1810
    %2413 = vmatprep.mubr.bf16.mxu0 %v457
    %2414 = vmatmul.mubr.bf16.gmra.mrb[0].mxu0 %v456
    %v2415 = vpop.f32.mrb[0].mxu0
    %v2416 = vadd.f32 %v2255, %v2415
    %v2417 = vpop.f32.mrb[0].mxu0
    %v2418 = vadd.f32 %v2257, %v2417
    %v2419 = vpop.f32.mrb[0].mxu0
    %v2420 = vadd.f32 %v2259, %v2419
    %v2421 = vpop.f32.mrb[0].mxu0
    %v2422 = vadd.f32 %v2261, %v2421
    %2423 = vmatprep.mubr.bf16.mxu0 %v473
    %2424 = vmatmul.mubr.bf16.gmra.mrb[0].mxu0 %v472
    %v2425 = vpop.f32.mrb[0].mxu0
    %v2426 = vadd.f32 %v2265, %v2425
    %v2427 = vpop.f32.mrb[0].mxu0
    %v2428 = vadd.f32 %v2267, %v2427
    %v2429 = vpop.f32.mrb[0].mxu0
    %v2430 = vadd.f32 %v2269, %v2429
    %v2431 = vpop.f32.mrb[0].mxu0
    %v2432 = vadd.f32 %v2271, %v2431
    %2433 = vmatprep.mubr.bf16.mxu0 %v489
    %2434 = vmatmul.mubr.bf16.gmra.mrb[0].mxu0 %v488
    %v2435 = vpop.f32.mrb[0].mxu0
    %v2436 = vadd.f32 %v2275, %v2435
    %v2437 = vpop.f32.mrb[0].mxu0
    %v2438 = vadd.f32 %v2277, %v2437
    %v2439 = vpop.f32.mrb[0].mxu0
    %v2440 = vadd.f32 %v2279, %v2439
    %v2441 = vpop.f32.mrb[0].mxu0
    %v2442 = vadd.f32 %v2281, %v2441
    %2443 = vmatprep.mubr.bf16.mxu0 %v505
    %2444 = vmatmul.mubr.bf16.gmra.mrb[0].mxu0 %v504
    %v2445 = vpop.f32.mrb[0].mxu0
    %v2446 = vadd.f32 %v2285, %v2445
    %v2447 = vpop.f32.mrb[0].mxu0
    %v2448 = vadd.f32 %v2287, %v2447
    %v2449 = vpop.f32.mrb[0].mxu0
    %v2450 = vadd.f32 %v2289, %v2449
    %v2451 = vpop.f32.mrb[0].mxu0
    %v2452 = vadd.f32 %v2291, %v2451
    %2453 = vmatprep.mubr.bf16.mxu0 %v521
    %2454 = vmatmul.mubr.bf16.gmra.mrb[0].mxu0 %v520
    %v2455 = vpop.f32.mrb[0].mxu0
    %v2456 = vadd.f32 %v2295, %v2455
    %v2457 = vpop.f32.mrb[0].mxu0
    %v2458 = vadd.f32 %v2297, %v2457
    %v2459 = vpop.f32.mrb[0].mxu0
    %v2460 = vadd.f32 %v2299, %v2459
    %v2461 = vpop.f32.mrb[0].mxu0
    %v2462 = vadd.f32 %v2301, %v2461
    %2463 = vmatprep.mubr.bf16.mxu0 %v537
    %2464 = vmatmul.mubr.bf16.gmra.mrb[0].mxu0 %v536
    %v2465 = vpop.f32.mrb[0].mxu0
    %v2466 = vadd.f32 %v2305, %v2465
    %v2467 = vpop.f32.mrb[0].mxu0
    %v2468 = vadd.f32 %v2307, %v2467
    %v2469 = vpop.f32.mrb[0].mxu0
    %v2470 = vadd.f32 %v2309, %v2469
    %v2471 = vpop.f32.mrb[0].mxu0
    %v2472 = vadd.f32 %v2311, %v2471
    %2473 = vmatprep.mubr.bf16.mxu0 %v553
    %2474 = vmatmul.mubr.bf16.gmra.mrb[0].mxu0 %v552
    %v2475 = vpop.f32.mrb[0].mxu0
    %v2476 = vadd.f32 %v2315, %v2475
    %v2477 = vpop.f32.mrb[0].mxu0
    %v2478 = vadd.f32 %v2317, %v2477
    %v2479 = vpop.f32.mrb[0].mxu0
    %v2480 = vadd.f32 %v2319, %v2479
    %v2481 = vpop.f32.mrb[0].mxu0
    %v2482 = vadd.f32 %v2321, %v2481
    %2483 = vmatprep.mubr.bf16.mxu0 %v569
    %2484 = vmatmul.mubr.bf16.gmra.mrb[0].mxu0 %v568
    %v2485 = vpop.f32.mrb[0].mxu0
    %v2486 = vadd.f32 %v2325, %v2485
    %v2487 = vpop.f32.mrb[0].mxu0
    %v2488 = vadd.f32 %v2327, %v2487
    %v2489 = vpop.f32.mrb[0].mxu0
    %v2490 = vadd.f32 %v2329, %v2489
    %v2491 = vpop.f32.mrb[0].mxu0
    %v2492 = vadd.f32 %v2331, %v2491
    %2493 = vmatprep.mubr.bf16.mxu0 %v585
    %2494 = vmatmul.mubr.bf16.gmra.mrb[0].mxu0 %v584
    %v2495 = vpop.f32.mrb[0].mxu0
    %v2496 = vadd.f32 %v2335, %v2495
    %v2497 = vpop.f32.mrb[0].mxu0
    %v2498 = vadd.f32 %v2337, %v2497
    %v2499 = vpop.f32.mrb[0].mxu0
    %v2500 = vadd.f32 %v2339, %v2499
    %v2501 = vpop.f32.mrb[0].mxu0
    %v2502 = vadd.f32 %v2341, %v2501
    %2503 = vmatprep.mubr.bf16.mxu0 %v601
    %2504 = vmatmul.mubr.bf16.gmra.mrb[0].mxu0 %v600
    %v2505 = vpop.f32.mrb[0].mxu0
    %v2506 = vadd.f32 %v2345, %v2505
    %v2507 = vpop.f32.mrb[0].mxu0
    %v2508 = vadd.f32 %v2347, %v2507
    %v2509 = vpop.f32.mrb[0].mxu0
    %v2510 = vadd.f32 %v2349, %v2509
    %v2511 = vpop.f32.mrb[0].mxu0
    %v2512 = vadd.f32 %v2351, %v2511
    %2513 = vmatprep.mubr.bf16.mxu0 %v617
    %2514 = vmatmul.mubr.bf16.gmra.mrb[0].mxu0 %v616
    %v2515 = vpop.f32.mrb[0].mxu0
    %v2516 = vadd.f32 %v2355, %v2515
    %v2517 = vpop.f32.mrb[0].mxu0
    %v2518 = vadd.f32 %v2357, %v2517
    %v2519 = vpop.f32.mrb[0].mxu0
    %v2520 = vadd.f32 %v2359, %v2519
    %v2521 = vpop.f32.mrb[0].mxu0
    %v2522 = vadd.f32 %v2361, %v2521
    %2523 = vmatprep.mubr.bf16.mxu0 %v633
    %2524 = vmatmul.mubr.bf16.gmra.mrb[0].mxu0 %v632
    %v2525 = vpop.f32.mrb[0].mxu0
    %v2526 = vadd.f32 %v2365, %v2525
    %v2527 = vpop.f32.mrb[0].mxu0
    %v2528 = vadd.f32 %v2367, %v2527
    %v2529 = vpop.f32.mrb[0].mxu0
    %v2530 = vadd.f32 %v2369, %v2529
    %v2531 = vpop.f32.mrb[0].mxu0
    %v2532 = vadd.f32 %v2371, %v2531
    %2533 = vmatprep.mubr.bf16.mxu0 %v649
    %2534 = vmatmul.mubr.bf16.gmra.mrb[0].mxu0 %v648
    %v2535 = vpop.f32.mrb[0].mxu0
    %v2536 = vadd.f32 %v2375, %v2535
    %v2537 = vpop.f32.mrb[0].mxu0
    %v2538 = vadd.f32 %v2377, %v2537
    %v2539 = vpop.f32.mrb[0].mxu0
    %v2540 = vpop.f32.mrb[0].mxu0
    %2541 = vdwg.mxu0
    %2542 = vmatprep.subr.bf16.mxu0 %v1815
    %2543 = vmatpush1.bf16.msra.mxu0 %v1814
    %2544 = vmatprep.subr.bf16.mxu0 %v1819
    %2545 = vmatpush1.bf16.msra.mxu0 %v1818
    %2546 = vmatprep.subr.bf16.mxu0 %v1823
    %2547 = vmatpush1.bf16.msra.mxu0 %v1822
    %2548 = vmatprep.subr.bf16.mxu0 %v1827
    %2549 = vmatpush1.bf16.msra.mxu0 %v1826
    %2550 = vmatprep.subr.bf16.mxu0 %v1831
    %2551 = vmatpush1.bf16.msra.mxu0 %v1830
    %2552 = vmatprep.subr.bf16.mxu0 %v1835
    %2553 = vmatpush1.bf16.msra.mxu0 %v1834
    %2554 = vmatprep.subr.bf16.mxu0 %v1839
    %2555 = vmatpush1.bf16.msra.mxu0 %v1838
    %2556 = vmatprep.subr.bf16.mxu0 %v1843
    %2557 = vmatpush1.bf16.msra.mxu0 %v1842
    %2558 = vmatprep.subr.bf16.mxu0 %v1847
    %2559 = vmatpush1.bf16.msra.mxu0 %v1846
    %2560 = vmatprep.subr.bf16.mxu0 %v1851
    %2561 = vmatpush1.bf16.msra.mxu0 %v1850
    %2562 = vmatprep.subr.bf16.mxu0 %v1855
    %2563 = vmatpush1.bf16.msra.mxu0 %v1854
    %2564 = vmatprep.subr.bf16.mxu0 %v1859
    %2565 = vmatpush1.bf16.msra.mxu0 %v1858
    %2566 = vmatprep.subr.bf16.mxu0 %v1863
    %2567 = vmatpush1.bf16.msra.mxu0 %v1862
    %2568 = vmatprep.subr.bf16.mxu0 %v1867
    %2569 = vmatpush1.bf16.msra.mxu0 %v1866
    %2570 = vmatprep.subr.bf16.mxu0 %v1871
    %2571 = vmatpush1.bf16.msra.mxu0 %v1870
    %2572 = vmatprep.subr.bf16.mxu0 %v1875
    %2573 = vmatpush1.bf16.msra.mxu0 %v1874
    %2574 = vmatprep.mubr.bf16.mxu0 %v459
    %2575 = vmatmul.mubr.bf16.gmra.mrb[0].mxu0 %v458
    %v2576 = vpop.f32.mrb[0].mxu0
    %v2577 = vadd.f32 %v2416, %v2576
    %v2578 = vpop.f32.mrb[0].mxu0
    %v2579 = vadd.f32 %v2418, %v2578
    %v2580 = vpop.f32.mrb[0].mxu0
    %v2581 = vadd.f32 %v2420, %v2580
    %v2582 = vpop.f32.mrb[0].mxu0
    %v2583 = vadd.f32 %v2422, %v2582
    %2584 = vmatprep.mubr.bf16.mxu0 %v475
    %2585 = vmatmul.mubr.bf16.gmra.mrb[0].mxu0 %v474
    %v2586 = vpop.f32.mrb[0].mxu0
    %v2587 = vadd.f32 %v2426, %v2586
    %v2588 = vpop.f32.mrb[0].mxu0
    %v2589 = vadd.f32 %v2428, %v2588
    %v2590 = vpop.f32.mrb[0].mxu0
    %v2591 = vadd.f32 %v2430, %v2590
    %v2592 = vpop.f32.mrb[0].mxu0
    %v2593 = vadd.f32 %v2432, %v2592
    %2594 = vmatprep.mubr.bf16.mxu0 %v491
    %2595 = vmatmul.mubr.bf16.gmra.mrb[0].mxu0 %v490
    %v2596 = vpop.f32.mrb[0].mxu0
    %v2597 = vadd.f32 %v2436, %v2596
    %v2598 = vpop.f32.mrb[0].mxu0
    %v2599 = vadd.f32 %v2438, %v2598
    %v2600 = vpop.f32.mrb[0].mxu0
    %v2601 = vadd.f32 %v2440, %v2600
    %v2602 = vpop.f32.mrb[0].mxu0
    %v2603 = vadd.f32 %v2442, %v2602
    %2604 = vmatprep.mubr.bf16.mxu0 %v507
    %2605 = vmatmul.mubr.bf16.gmra.mrb[0].mxu0 %v506
    %v2606 = vpop.f32.mrb[0].mxu0
    %v2607 = vadd.f32 %v2446, %v2606
    %v2608 = vpop.f32.mrb[0].mxu0
    %v2609 = vadd.f32 %v2448, %v2608
    %v2610 = vpop.f32.mrb[0].mxu0
    %v2611 = vadd.f32 %v2450, %v2610
    %v2612 = vpop.f32.mrb[0].mxu0
    %v2613 = vadd.f32 %v2452, %v2612
    %2614 = vmatprep.mubr.bf16.mxu0 %v523
    %2615 = vmatmul.mubr.bf16.gmra.mrb[0].mxu0 %v522
    %v2616 = vpop.f32.mrb[0].mxu0
    %v2617 = vadd.f32 %v2456, %v2616
    %v2618 = vpop.f32.mrb[0].mxu0
    %v2619 = vadd.f32 %v2458, %v2618
    %v2620 = vpop.f32.mrb[0].mxu0
    %v2621 = vadd.f32 %v2460, %v2620
    %v2622 = vpop.f32.mrb[0].mxu0
    %v2623 = vadd.f32 %v2462, %v2622
    %2624 = vmatprep.mubr.bf16.mxu0 %v539
    %2625 = vmatmul.mubr.bf16.gmra.mrb[0].mxu0 %v538
    %v2626 = vpop.f32.mrb[0].mxu0
    %v2627 = vadd.f32 %v2466, %v2626
    %v2628 = vpop.f32.mrb[0].mxu0
    %v2629 = vadd.f32 %v2468, %v2628
    %v2630 = vpop.f32.mrb[0].mxu0
    %v2631 = vadd.f32 %v2470, %v2630
    %v2632 = vpop.f32.mrb[0].mxu0
    %v2633 = vadd.f32 %v2472, %v2632
    %2634 = vmatprep.mubr.bf16.mxu0 %v555
    %2635 = vmatmul.mubr.bf16.gmra.mrb[0].mxu0 %v554
    %v2636 = vpop.f32.mrb[0].mxu0
    %v2637 = vadd.f32 %v2476, %v2636
    %v2638 = vpop.f32.mrb[0].mxu0
    %v2639 = vadd.f32 %v2478, %v2638
    %v2640 = vpop.f32.mrb[0].mxu0
    %v2641 = vadd.f32 %v2480, %v2640
    %v2642 = vpop.f32.mrb[0].mxu0
    %v2643 = vadd.f32 %v2482, %v2642
    %2644 = vmatprep.mubr.bf16.mxu0 %v571
    %2645 = vmatmul.mubr.bf16.gmra.mrb[0].mxu0 %v570
    %v2646 = vpop.f32.mrb[0].mxu0
    %v2647 = vadd.f32 %v2486, %v2646
    %v2648 = vpop.f32.mrb[0].mxu0
    %v2649 = vadd.f32 %v2488, %v2648
    %v2650 = vpop.f32.mrb[0].mxu0
    %v2651 = vadd.f32 %v2490, %v2650
    %v2652 = vpop.f32.mrb[0].mxu0
    %v2653 = vadd.f32 %v2492, %v2652
    %2654 = vmatprep.mubr.bf16.mxu0 %v587
    %2655 = vmatmul.mubr.bf16.gmra.mrb[0].mxu0 %v586
    %v2656 = vpop.f32.mrb[0].mxu0
    %v2657 = vadd.f32 %v2496, %v2656
    %v2658 = vpop.f32.mrb[0].mxu0
    %v2659 = vadd.f32 %v2498, %v2658
    %v2660 = vpop.f32.mrb[0].mxu0
    %v2661 = vadd.f32 %v2500, %v2660
    %v2662 = vpop.f32.mrb[0].mxu0
    %v2663 = vadd.f32 %v2502, %v2662
    %2664 = vmatprep.mubr.bf16.mxu0 %v603
    %2665 = vmatmul.mubr.bf16.gmra.mrb[0].mxu0 %v602
    %v2666 = vpop.f32.mrb[0].mxu0
    %v2667 = vadd.f32 %v2506, %v2666
    %v2668 = vpop.f32.mrb[0].mxu0
    %v2669 = vadd.f32 %v2508, %v2668
    %v2670 = vpop.f32.mrb[0].mxu0
    %v2671 = vadd.f32 %v2510, %v2670
    %v2672 = vpop.f32.mrb[0].mxu0
    %v2673 = vadd.f32 %v2512, %v2672
    %2674 = vmatprep.mubr.bf16.mxu0 %v619
    %2675 = vmatmul.mubr.bf16.gmra.mrb[0].mxu0 %v618
    %v2676 = vpop.f32.mrb[0].mxu0
    %v2677 = vadd.f32 %v2516, %v2676
    %v2678 = vpop.f32.mrb[0].mxu0
    %v2679 = vadd.f32 %v2518, %v2678
    %v2680 = vpop.f32.mrb[0].mxu0
    %v2681 = vadd.f32 %v2520, %v2680
    %v2682 = vpop.f32.mrb[0].mxu0
    %v2683 = vadd.f32 %v2522, %v2682
    %2684 = vmatprep.mubr.bf16.mxu0 %v635
    %2685 = vmatmul.mubr.bf16.gmra.mrb[0].mxu0 %v634
    %v2686 = vpop.f32.mrb[0].mxu0
    %v2687 = vadd.f32 %v2526, %v2686
    %v2688 = vpop.f32.mrb[0].mxu0
    %v2689 = vadd.f32 %v2528, %v2688
    %v2690 = vpop.f32.mrb[0].mxu0
    %v2691 = vadd.f32 %v2530, %v2690
    %v2692 = vpop.f32.mrb[0].mxu0
    %v2693 = vadd.f32 %v2532, %v2692
    %2694 = vmatprep.mubr.bf16.mxu0 %v651
    %2695 = vmatmul.mubr.bf16.gmra.mrb[0].mxu0 %v650
    %v2696 = vpop.f32.mrb[0].mxu0
    %v2697 = vadd.f32 %v2536, %v2696
    %v2698 = vpop.f32.mrb[0].mxu0
    %v2699 = vadd.f32 %v2538, %v2698
    %v2700 = vpop.f32.mrb[0].mxu0
    %v2701 = vpop.f32.mrb[0].mxu0
    %2702 = vdwg.mxu0
    %2703 = vmatprep.subr.bf16.mxu0 %v1879
    %2704 = vmatpush1.bf16.msra.mxu0 %v1878
    %2705 = vmatprep.subr.bf16.mxu0 %v1883
    %2706 = vmatpush1.bf16.msra.mxu0 %v1882
    %2707 = vmatprep.subr.bf16.mxu0 %v1887
    %2708 = vmatpush1.bf16.msra.mxu0 %v1886
    %2709 = vmatprep.subr.bf16.mxu0 %v1891
    %2710 = vmatpush1.bf16.msra.mxu0 %v1890
    %2711 = vmatprep.subr.bf16.mxu0 %v1895
    %2712 = vmatpush1.bf16.msra.mxu0 %v1894
    %2713 = vmatprep.subr.bf16.mxu0 %v1899
    %2714 = vmatpush1.bf16.msra.mxu0 %v1898
    %2715 = vmatprep.subr.bf16.mxu0 %v1903
    %2716 = vmatpush1.bf16.msra.mxu0 %v1902
    %2717 = vmatprep.subr.bf16.mxu0 %v1907
    %2718 = vmatpush1.bf16.msra.mxu0 %v1906
    %2719 = vmatprep.subr.bf16.mxu0 %v1911
    %2720 = vmatpush1.bf16.msra.mxu0 %v1910
    %2721 = vmatprep.subr.bf16.mxu0 %v1915
    %2722 = vmatpush1.bf16.msra.mxu0 %v1914
    %2723 = vmatprep.subr.bf16.mxu0 %v1919
    %2724 = vmatpush1.bf16.msra.mxu0 %v1918
    %2725 = vmatprep.subr.bf16.mxu0 %v1923
    %2726 = vmatpush1.bf16.msra.mxu0 %v1922
    %2727 = vmatprep.subr.bf16.mxu0 %v1927
    %2728 = vmatpush1.bf16.msra.mxu0 %v1926
    %2729 = vmatprep.subr.bf16.mxu0 %v1931
    %2730 = vmatpush1.bf16.msra.mxu0 %v1930
    %2731 = vmatprep.subr.bf16.mxu0 %v1935
    %2732 = vmatpush1.bf16.msra.mxu0 %v1934
    %2733 = vmatprep.subr.bf16.mxu0 %v1939
    %2734 = vmatpush1.bf16.msra.mxu0 %v1938
    %2735 = vmatprep.mubr.bf16.mxu0 %v461
    %2736 = vmatmul.mubr.bf16.gmra.mrb[0].mxu0 %v460
    %v2737 = vpop.f32.mrb[0].mxu0
    %v2738 = vadd.f32 %v2577, %v2737
    %v2739 = vpop.f32.mrb[0].mxu0
    %v2740 = vadd.f32 %v2579, %v2739
    %v2741 = vpop.f32.mrb[0].mxu0
    %v2742 = vadd.f32 %v2581, %v2741
    %v2743 = vpop.f32.mrb[0].mxu0
    %v2744 = vadd.f32 %v2583, %v2743
    %2745 = vmatprep.mubr.bf16.mxu0 %v477
    %2746 = vmatmul.mubr.bf16.gmra.mrb[0].mxu0 %v476
    %v2747 = vpop.f32.mrb[0].mxu0
    %v2748 = vadd.f32 %v2587, %v2747
    %v2749 = vpop.f32.mrb[0].mxu0
    %v2750 = vadd.f32 %v2589, %v2749
    %v2751 = vpop.f32.mrb[0].mxu0
    %v2752 = vadd.f32 %v2591, %v2751
    %v2753 = vpop.f32.mrb[0].mxu0
    %v2754 = vadd.f32 %v2593, %v2753
    %2755 = vmatprep.mubr.bf16.mxu0 %v493
    %2756 = vmatmul.mubr.bf16.gmra.mrb[0].mxu0 %v492
    %v2757 = vpop.f32.mrb[0].mxu0
    %v2758 = vadd.f32 %v2597, %v2757
    %v2759 = vpop.f32.mrb[0].mxu0
    %v2760 = vadd.f32 %v2599, %v2759
    %v2761 = vpop.f32.mrb[0].mxu0
    %v2762 = vadd.f32 %v2601, %v2761
    %v2763 = vpop.f32.mrb[0].mxu0
    %v2764 = vadd.f32 %v2603, %v2763
    %2765 = vmatprep.mubr.bf16.mxu0 %v509
    %2766 = vmatmul.mubr.bf16.gmra.mrb[0].mxu0 %v508
    %v2767 = vpop.f32.mrb[0].mxu0
    %v2768 = vadd.f32 %v2607, %v2767
    %v2769 = vpop.f32.mrb[0].mxu0
    %v2770 = vadd.f32 %v2609, %v2769
    %v2771 = vpop.f32.mrb[0].mxu0
    %v2772 = vadd.f32 %v2611, %v2771
    %v2773 = vpop.f32.mrb[0].mxu0
    %v2774 = vadd.f32 %v2613, %v2773
    %2775 = vmatprep.mubr.bf16.mxu0 %v525
    %2776 = vmatmul.mubr.bf16.gmra.mrb[0].mxu0 %v524
    %v2777 = vpop.f32.mrb[0].mxu0
    %v2778 = vadd.f32 %v2617, %v2777
    %v2779 = vpop.f32.mrb[0].mxu0
    %v2780 = vadd.f32 %v2619, %v2779
    %v2781 = vpop.f32.mrb[0].mxu0
    %v2782 = vadd.f32 %v2621, %v2781
    %v2783 = vpop.f32.mrb[0].mxu0
    %v2784 = vadd.f32 %v2623, %v2783
    %2785 = vmatprep.mubr.bf16.mxu0 %v541
    %2786 = vmatmul.mubr.bf16.gmra.mrb[0].mxu0 %v540
    %v2787 = vpop.f32.mrb[0].mxu0
    %v2788 = vadd.f32 %v2627, %v2787
    %v2789 = vpop.f32.mrb[0].mxu0
    %v2790 = vadd.f32 %v2629, %v2789
    %v2791 = vpop.f32.mrb[0].mxu0
    %v2792 = vadd.f32 %v2631, %v2791
    %v2793 = vpop.f32.mrb[0].mxu0
    %v2794 = vadd.f32 %v2633, %v2793
    %2795 = vmatprep.mubr.bf16.mxu0 %v557
    %2796 = vmatmul.mubr.bf16.gmra.mrb[0].mxu0 %v556
    %v2797 = vpop.f32.mrb[0].mxu0
    %v2798 = vadd.f32 %v2637, %v2797
    %v2799 = vpop.f32.mrb[0].mxu0
    %v2800 = vadd.f32 %v2639, %v2799
    %v2801 = vpop.f32.mrb[0].mxu0
    %v2802 = vadd.f32 %v2641, %v2801
    %v2803 = vpop.f32.mrb[0].mxu0
    %v2804 = vadd.f32 %v2643, %v2803
    %2805 = vmatprep.mubr.bf16.mxu0 %v573
    %2806 = vmatmul.mubr.bf16.gmra.mrb[0].mxu0 %v572
    %v2807 = vpop.f32.mrb[0].mxu0
    %v2808 = vadd.f32 %v2647, %v2807
    %v2809 = vpop.f32.mrb[0].mxu0
    %v2810 = vadd.f32 %v2649, %v2809
    %v2811 = vpop.f32.mrb[0].mxu0
    %v2812 = vadd.f32 %v2651, %v2811
    %v2813 = vpop.f32.mrb[0].mxu0
    %v2814 = vadd.f32 %v2653, %v2813
    %2815 = vmatprep.mubr.bf16.mxu0 %v589
    %2816 = vmatmul.mubr.bf16.gmra.mrb[0].mxu0 %v588
    %v2817 = vpop.f32.mrb[0].mxu0
    %v2818 = vadd.f32 %v2657, %v2817
    %v2819 = vpop.f32.mrb[0].mxu0
    %v2820 = vadd.f32 %v2659, %v2819
    %v2821 = vpop.f32.mrb[0].mxu0
    %v2822 = vadd.f32 %v2661, %v2821
    %v2823 = vpop.f32.mrb[0].mxu0
    %v2824 = vadd.f32 %v2663, %v2823
    %2825 = vmatprep.mubr.bf16.mxu0 %v605
    %2826 = vmatmul.mubr.bf16.gmra.mrb[0].mxu0 %v604
    %v2827 = vpop.f32.mrb[0].mxu0
    %v2828 = vadd.f32 %v2667, %v2827
    %v2829 = vpop.f32.mrb[0].mxu0
    %v2830 = vadd.f32 %v2669, %v2829
    %v2831 = vpop.f32.mrb[0].mxu0
    %v2832 = vadd.f32 %v2671, %v2831
    %v2833 = vpop.f32.mrb[0].mxu0
    %v2834 = vadd.f32 %v2673, %v2833
    %2835 = vmatprep.mubr.bf16.mxu0 %v621
    %2836 = vmatmul.mubr.bf16.gmra.mrb[0].mxu0 %v620
    %v2837 = vpop.f32.mrb[0].mxu0
    %v2838 = vadd.f32 %v2677, %v2837
    %v2839 = vpop.f32.mrb[0].mxu0
    %v2840 = vadd.f32 %v2679, %v2839
    %v2841 = vpop.f32.mrb[0].mxu0
    %v2842 = vadd.f32 %v2681, %v2841
    %v2843 = vpop.f32.mrb[0].mxu0
    %v2844 = vadd.f32 %v2683, %v2843
    %2845 = vmatprep.mubr.bf16.mxu0 %v637
    %2846 = vmatmul.mubr.bf16.gmra.mrb[0].mxu0 %v636
    %v2847 = vpop.f32.mrb[0].mxu0
    %v2848 = vadd.f32 %v2687, %v2847
    %v2849 = vpop.f32.mrb[0].mxu0
    %v2850 = vadd.f32 %v2689, %v2849
    %v2851 = vpop.f32.mrb[0].mxu0
    %v2852 = vadd.f32 %v2691, %v2851
    %v2853 = vpop.f32.mrb[0].mxu0
    %v2854 = vadd.f32 %v2693, %v2853
    %2855 = vmatprep.mubr.bf16.mxu0 %v653
    %2856 = vmatmul.mubr.bf16.gmra.mrb[0].mxu0 %v652
    %v2857 = vpop.f32.mrb[0].mxu0
    %v2858 = vadd.f32 %v2697, %v2857
    %v2859 = vpop.f32.mrb[0].mxu0
    %v2860 = vadd.f32 %v2699, %v2859
    %v2861 = vpop.f32.mrb[0].mxu0
    %v2862 = vpop.f32.mrb[0].mxu0
    %2863 = vdwg.mxu0
    %2864 = vmatprep.subr.bf16.mxu0 %v1943
    %2865 = vmatpush1.bf16.msra.mxu0 %v1942
    %2866 = vmatprep.subr.bf16.mxu0 %v1947
    %2867 = vmatpush1.bf16.msra.mxu0 %v1946
    %2868 = vmatprep.subr.bf16.mxu0 %v1951
    %2869 = vmatpush1.bf16.msra.mxu0 %v1950
    %2870 = vmatprep.subr.bf16.mxu0 %v1955
    %2871 = vmatpush1.bf16.msra.mxu0 %v1954
    %2872 = vmatprep.subr.bf16.mxu0 %v1959
    %2873 = vmatpush1.bf16.msra.mxu0 %v1958
    %2874 = vmatprep.subr.bf16.mxu0 %v1963
    %2875 = vmatpush1.bf16.msra.mxu0 %v1962
    %2876 = vmatprep.subr.bf16.mxu0 %v1967
    %2877 = vmatpush1.bf16.msra.mxu0 %v1966
    %2878 = vmatprep.subr.bf16.mxu0 %v1971
    %2879 = vmatpush1.bf16.msra.mxu0 %v1970
    %2880 = vmatprep.subr.bf16.mxu0 %v1975
    %2881 = vmatpush1.bf16.msra.mxu0 %v1974
    %2882 = vmatprep.subr.bf16.mxu0 %v1979
    %2883 = vmatpush1.bf16.msra.mxu0 %v1978
    %2884 = vmatprep.subr.bf16.mxu0 %v1983
    %2885 = vmatpush1.bf16.msra.mxu0 %v1982
    %2886 = vmatprep.subr.bf16.mxu0 %v1987
    %2887 = vmatpush1.bf16.msra.mxu0 %v1986
    %2888 = vmatprep.subr.bf16.mxu0 %v1991
    %2889 = vmatpush1.bf16.msra.mxu0 %v1990
    %2890 = vmatprep.subr.bf16.mxu0 %v1995
    %2891 = vmatpush1.bf16.msra.mxu0 %v1994
    %2892 = vmatprep.subr.bf16.mxu0 %v1999
    %2893 = vmatpush1.bf16.msra.mxu0 %v1998
    %2894 = vmatprep.subr.bf16.mxu0 %v2003
    %2895 = vmatpush1.bf16.msra.mxu0 %v2002
    %2896 = vmatprep.mubr.bf16.mxu0 %v463
    %2897 = vmatmul.mubr.bf16.gmra.mrb[0].mxu0 %v462
    %v2898 = vpop.f32.mrb[0].mxu0
    %v2899 = vadd.f32 %v2738, %v2898
    %v2900 = vpop.f32.mrb[0].mxu0
    %v2901 = vadd.f32 %v2740, %v2900
    %v2902 = vpop.f32.mrb[0].mxu0
    %v2903 = vadd.f32 %v2742, %v2902
    %v2904 = vpop.f32.mrb[0].mxu0
    %v2905 = vadd.f32 %v2744, %v2904
    %2906 = vmatprep.mubr.bf16.mxu0 %v479
    %2907 = vmatmul.mubr.bf16.gmra.mrb[0].mxu0 %v478
    %v2908 = vpop.f32.mrb[0].mxu0
    %v2909 = vadd.f32 %v2748, %v2908
    %v2910 = vpop.f32.mrb[0].mxu0
    %v2911 = vadd.f32 %v2750, %v2910
    %v2912 = vpop.f32.mrb[0].mxu0
    %v2913 = vadd.f32 %v2752, %v2912
    %v2914 = vpop.f32.mrb[0].mxu0
    %v2915 = vadd.f32 %v2754, %v2914
    %2916 = vmatprep.mubr.bf16.mxu0 %v495
    %2917 = vmatmul.mubr.bf16.gmra.mrb[0].mxu0 %v494
    %v2918 = vpop.f32.mrb[0].mxu0
    %v2919 = vadd.f32 %v2758, %v2918
    %v2920 = vpop.f32.mrb[0].mxu0
    %v2921 = vadd.f32 %v2760, %v2920
    %v2922 = vpop.f32.mrb[0].mxu0
    %v2923 = vadd.f32 %v2762, %v2922
    %v2924 = vpop.f32.mrb[0].mxu0
    %v2925 = vadd.f32 %v2764, %v2924
    %2926 = vmatprep.mubr.bf16.mxu0 %v511
    %2927 = vmatmul.mubr.bf16.gmra.mrb[0].mxu0 %v510
    %v2928 = vpop.f32.mrb[0].mxu0
    %v2929 = vadd.f32 %v2768, %v2928
    %v2930 = vpop.f32.mrb[0].mxu0
    %v2931 = vadd.f32 %v2770, %v2930
    %v2932 = vpop.f32.mrb[0].mxu0
    %v2933 = vadd.f32 %v2772, %v2932
    %v2934 = vpop.f32.mrb[0].mxu0
    %v2935 = vadd.f32 %v2774, %v2934
    %2936 = vmatprep.mubr.bf16.mxu0 %v527
    %2937 = vmatmul.mubr.bf16.gmra.mrb[0].mxu0 %v526
    %v2938 = vpop.f32.mrb[0].mxu0
    %v2939 = vadd.f32 %v2778, %v2938
    %v2940 = vpop.f32.mrb[0].mxu0
    %v2941 = vadd.f32 %v2780, %v2940
    %v2942 = vpop.f32.mrb[0].mxu0
    %v2943 = vadd.f32 %v2782, %v2942
    %v2944 = vpop.f32.mrb[0].mxu0
    %v2945 = vadd.f32 %v2784, %v2944
    %2946 = vmatprep.mubr.bf16.mxu0 %v543
    %2947 = vmatmul.mubr.bf16.gmra.mrb[0].mxu0 %v542
    %v2948 = vpop.f32.mrb[0].mxu0
    %v2949 = vadd.f32 %v2788, %v2948
    %v2950 = vpop.f32.mrb[0].mxu0
    %v2951 = vadd.f32 %v2790, %v2950
    %v2952 = vpop.f32.mrb[0].mxu0
    %v2953 = vadd.f32 %v2792, %v2952
    %v2954 = vpop.f32.mrb[0].mxu0
    %v2955 = vadd.f32 %v2794, %v2954
    %2956 = vmatprep.mubr.bf16.mxu0 %v559
    %2957 = vmatmul.mubr.bf16.gmra.mrb[0].mxu0 %v558
    %v2958 = vpop.f32.mrb[0].mxu0
    %v2959 = vadd.f32 %v2798, %v2958
    %v2960 = vpop.f32.mrb[0].mxu0
    %v2961 = vadd.f32 %v2800, %v2960
    %v2962 = vpop.f32.mrb[0].mxu0
    %v2963 = vadd.f32 %v2802, %v2962
    %v2964 = vpop.f32.mrb[0].mxu0
    %v2965 = vadd.f32 %v2804, %v2964
    %2966 = vmatprep.mubr.bf16.mxu0 %v575
    %2967 = vmatmul.mubr.bf16.gmra.mrb[0].mxu0 %v574
    %v2968 = vpop.f32.mrb[0].mxu0
    %v2969 = vadd.f32 %v2808, %v2968
    %v2970 = vpop.f32.mrb[0].mxu0
    %v2971 = vadd.f32 %v2810, %v2970
    %v2972 = vpop.f32.mrb[0].mxu0
    %v2973 = vadd.f32 %v2812, %v2972
    %v2974 = vpop.f32.mrb[0].mxu0
    %v2975 = vadd.f32 %v2814, %v2974
    %2976 = vmatprep.mubr.bf16.mxu0 %v591
    %2977 = vmatmul.mubr.bf16.gmra.mrb[0].mxu0 %v590
    %v2978 = vpop.f32.mrb[0].mxu0
    %v2979 = vadd.f32 %v2818, %v2978
    %v2980 = vpop.f32.mrb[0].mxu0
    %v2981 = vadd.f32 %v2820, %v2980
    %v2982 = vpop.f32.mrb[0].mxu0
    %v2983 = vadd.f32 %v2822, %v2982
    %v2984 = vpop.f32.mrb[0].mxu0
    %v2985 = vadd.f32 %v2824, %v2984
    %2986 = vmatprep.mubr.bf16.mxu0 %v607
    %2987 = vmatmul.mubr.bf16.gmra.mrb[0].mxu0 %v606
    %v2988 = vpop.f32.mrb[0].mxu0
    %v2989 = vadd.f32 %v2828, %v2988
    %v2990 = vpop.f32.mrb[0].mxu0
    %v2991 = vadd.f32 %v2830, %v2990
    %v2992 = vpop.f32.mrb[0].mxu0
    %v2993 = vadd.f32 %v2832, %v2992
    %v2994 = vpop.f32.mrb[0].mxu0
    %v2995 = vadd.f32 %v2834, %v2994
    %2996 = vmatprep.mubr.bf16.mxu0 %v623
    %2997 = vmatmul.mubr.bf16.gmra.mrb[0].mxu0 %v622
    %v2998 = vpop.f32.mrb[0].mxu0
    %v2999 = vadd.f32 %v2838, %v2998
    %v3000 = vpop.f32.mrb[0].mxu0
    %v3001 = vadd.f32 %v2840, %v3000
    %v3002 = vpop.f32.mrb[0].mxu0
    %v3003 = vadd.f32 %v2842, %v3002
    %v3004 = vpop.f32.mrb[0].mxu0
    %v3005 = vadd.f32 %v2844, %v3004
    %3006 = vmatprep.mubr.bf16.mxu0 %v639
    %3007 = vmatmul.mubr.bf16.gmra.mrb[0].mxu0 %v638
    %v3008 = vpop.f32.mrb[0].mxu0
    %v3009 = vadd.f32 %v2848, %v3008
    %v3010 = vpop.f32.mrb[0].mxu0
    %v3011 = vadd.f32 %v2850, %v3010
    %v3012 = vpop.f32.mrb[0].mxu0
    %v3013 = vadd.f32 %v2852, %v3012
    %v3014 = vpop.f32.mrb[0].mxu0
    %v3015 = vadd.f32 %v2854, %v3014
    %3016 = vmatprep.mubr.bf16.mxu0 %v655
    %3017 = vmatmul.mubr.bf16.gmra.mrb[0].mxu0 %v654
    %v3018 = vpop.f32.mrb[0].mxu0
    %v3019 = vadd.f32 %v2858, %v3018
    %v3020 = vpop.f32.mrb[0].mxu0
    %v3021 = vadd.f32 %v2860, %v3020
    %v3022 = vpop.f32.mrb[0].mxu0
    %v3023 = vpop.f32.mrb[0].mxu0
    %3024 = vdwg.mxu0
    %3025 = vmatprep.subr.bf16.mxu0 %v2007
    %3026 = vmatpush1.bf16.msra.mxu0 %v2006
    %3027 = vmatprep.subr.bf16.mxu0 %v2011
    %3028 = vmatpush1.bf16.msra.mxu0 %v2010
    %3029 = vmatprep.subr.bf16.mxu0 %v2015
    %3030 = vmatpush1.bf16.msra.mxu0 %v2014
    %3031 = vmatprep.subr.bf16.mxu0 %v2019
    %3032 = vmatpush1.bf16.msra.mxu0 %v2018
    %3033 = vmatprep.subr.bf16.mxu0 %v2023
    %3034 = vmatpush1.bf16.msra.mxu0 %v2022
    %3035 = vmatprep.subr.bf16.mxu0 %v2027
    %3036 = vmatpush1.bf16.msra.mxu0 %v2026
    %3037 = vmatprep.subr.bf16.mxu0 %v2031
    %3038 = vmatpush1.bf16.msra.mxu0 %v2030
    %3039 = vmatprep.subr.bf16.mxu0 %v2035
    %3040 = vmatpush1.bf16.msra.mxu0 %v2034
    %3041 = vmatprep.subr.bf16.mxu0 %v2039
    %3042 = vmatpush1.bf16.msra.mxu0 %v2038
    %3043 = vmatprep.subr.bf16.mxu0 %v2043
    %3044 = vmatpush1.bf16.msra.mxu0 %v2042
    %3045 = vmatprep.subr.bf16.mxu0 %v2047
    %3046 = vmatpush1.bf16.msra.mxu0 %v2046
    %3047 = vmatprep.subr.bf16.mxu0 %v2051
    %3048 = vmatpush1.bf16.msra.mxu0 %v2050
    %3049 = vmatprep.subr.bf16.mxu0 %v2055
    %3050 = vmatpush1.bf16.msra.mxu0 %v2054
    %3051 = vmatprep.subr.bf16.mxu0 %v2059
    %3052 = vmatpush1.bf16.msra.mxu0 %v2058
    %3053 = vmatprep.subr.bf16.mxu0 %v2063
    %3054 = vmatpush1.bf16.msra.mxu0 %v2062
    %3055 = vmatprep.subr.bf16.mxu0 %v2067
    %3056 = vmatpush1.bf16.msra.mxu0 %v2066
    %3057 = vmatprep.mubr.bf16.mxu0 %v465
    %3058 = vmatmul.mubr.bf16.gmra.mrb[0].mxu0 %v464
    %v3059 = vpop.f32.mrb[0].mxu0
    %v3060 = vadd.f32 %v2899, %v3059
    %v3061 = vpop.f32.mrb[0].mxu0
    %v3062 = vadd.f32 %v2901, %v3061
    %v3063 = vpop.f32.mrb[0].mxu0
    %v3064 = vadd.f32 %v2903, %v3063
    %v3065 = vpop.f32.mrb[0].mxu0
    %v3066 = vadd.f32 %v2905, %v3065
    %3067 = vmatprep.mubr.bf16.mxu0 %v481
    %3068 = vmatmul.mubr.bf16.gmra.mrb[0].mxu0 %v480
    %v3069 = vpop.f32.mrb[0].mxu0
    %v3070 = vadd.f32 %v2909, %v3069
    %v3071 = vpop.f32.mrb[0].mxu0
    %v3072 = vadd.f32 %v2911, %v3071
    %v3073 = vpop.f32.mrb[0].mxu0
    %v3074 = vadd.f32 %v2913, %v3073
    %v3075 = vpop.f32.mrb[0].mxu0
    %v3076 = vadd.f32 %v2915, %v3075
    %3077 = vmatprep.mubr.bf16.mxu0 %v497
    %3078 = vmatmul.mubr.bf16.gmra.mrb[0].mxu0 %v496
    %v3079 = vpop.f32.mrb[0].mxu0
    %v3080 = vadd.f32 %v2919, %v3079
    %v3081 = vpop.f32.mrb[0].mxu0
    %v3082 = vadd.f32 %v2921, %v3081
    %v3083 = vpop.f32.mrb[0].mxu0
    %v3084 = vadd.f32 %v2923, %v3083
    %v3085 = vpop.f32.mrb[0].mxu0
    %v3086 = vadd.f32 %v2925, %v3085
    %3087 = vmatprep.mubr.bf16.mxu0 %v513
    %3088 = vmatmul.mubr.bf16.gmra.mrb[0].mxu0 %v512
    %v3089 = vpop.f32.mrb[0].mxu0
    %v3090 = vadd.f32 %v2929, %v3089
    %v3091 = vpop.f32.mrb[0].mxu0
    %v3092 = vadd.f32 %v2931, %v3091
    %v3093 = vpop.f32.mrb[0].mxu0
    %v3094 = vadd.f32 %v2933, %v3093
    %v3095 = vpop.f32.mrb[0].mxu0
    %v3096 = vadd.f32 %v2935, %v3095
    %3097 = vmatprep.mubr.bf16.mxu0 %v529
    %3098 = vmatmul.mubr.bf16.gmra.mrb[0].mxu0 %v528
    %v3099 = vpop.f32.mrb[0].mxu0
    %v3100 = vadd.f32 %v2939, %v3099
    %v3101 = vpop.f32.mrb[0].mxu0
    %v3102 = vadd.f32 %v2941, %v3101
    %v3103 = vpop.f32.mrb[0].mxu0
    %v3104 = vadd.f32 %v2943, %v3103
    %v3105 = vpop.f32.mrb[0].mxu0
    %v3106 = vadd.f32 %v2945, %v3105
    %3107 = vmatprep.mubr.bf16.mxu0 %v545
    %3108 = vmatmul.mubr.bf16.gmra.mrb[0].mxu0 %v544
    %v3109 = vpop.f32.mrb[0].mxu0
    %v3110 = vadd.f32 %v2949, %v3109
    %v3111 = vpop.f32.mrb[0].mxu0
    %v3112 = vadd.f32 %v2951, %v3111
    %v3113 = vpop.f32.mrb[0].mxu0
    %v3114 = vadd.f32 %v2953, %v3113
    %v3115 = vpop.f32.mrb[0].mxu0
    %v3116 = vadd.f32 %v2955, %v3115
    %3117 = vmatprep.mubr.bf16.mxu0 %v561
    %3118 = vmatmul.mubr.bf16.gmra.mrb[0].mxu0 %v560
    %v3119 = vpop.f32.mrb[0].mxu0
    %v3120 = vadd.f32 %v2959, %v3119
    %v3121 = vpop.f32.mrb[0].mxu0
    %v3122 = vadd.f32 %v2961, %v3121
    %v3123 = vpop.f32.mrb[0].mxu0
    %v3124 = vadd.f32 %v2963, %v3123
    %v3125 = vpop.f32.mrb[0].mxu0
    %v3126 = vadd.f32 %v2965, %v3125
    %3127 = vmatprep.mubr.bf16.mxu0 %v577
    %3128 = vmatmul.mubr.bf16.gmra.mrb[0].mxu0 %v576
    %v3129 = vpop.f32.mrb[0].mxu0
    %v3130 = vadd.f32 %v2969, %v3129
    %v3131 = vpop.f32.mrb[0].mxu0
    %v3132 = vadd.f32 %v2971, %v3131
    %v3133 = vpop.f32.mrb[0].mxu0
    %v3134 = vadd.f32 %v2973, %v3133
    %v3135 = vpop.f32.mrb[0].mxu0
    %v3136 = vadd.f32 %v2975, %v3135
    %3137 = vmatprep.mubr.bf16.mxu0 %v593
    %3138 = vmatmul.mubr.bf16.gmra.mrb[0].mxu0 %v592
    %v3139 = vpop.f32.mrb[0].mxu0
    %v3140 = vadd.f32 %v2979, %v3139
    %v3141 = vpop.f32.mrb[0].mxu0
    %v3142 = vadd.f32 %v2981, %v3141
    %v3143 = vpop.f32.mrb[0].mxu0
    %v3144 = vadd.f32 %v2983, %v3143
    %v3145 = vpop.f32.mrb[0].mxu0
    %v3146 = vadd.f32 %v2985, %v3145
    %3147 = vmatprep.mubr.bf16.mxu0 %v609
    %3148 = vmatmul.mubr.bf16.gmra.mrb[0].mxu0 %v608
    %v3149 = vpop.f32.mrb[0].mxu0
    %v3150 = vadd.f32 %v2989, %v3149
    %v3151 = vpop.f32.mrb[0].mxu0
    %v3152 = vadd.f32 %v2991, %v3151
    %v3153 = vpop.f32.mrb[0].mxu0
    %v3154 = vadd.f32 %v2993, %v3153
    %v3155 = vpop.f32.mrb[0].mxu0
    %v3156 = vadd.f32 %v2995, %v3155
    %3157 = vmatprep.mubr.bf16.mxu0 %v625
    %3158 = vmatmul.mubr.bf16.gmra.mrb[0].mxu0 %v624
    %v3159 = vpop.f32.mrb[0].mxu0
    %v3160 = vadd.f32 %v2999, %v3159
    %v3161 = vpop.f32.mrb[0].mxu0
    %v3162 = vadd.f32 %v3001, %v3161
    %v3163 = vpop.f32.mrb[0].mxu0
    %v3164 = vadd.f32 %v3003, %v3163
    %v3165 = vpop.f32.mrb[0].mxu0
    %v3166 = vadd.f32 %v3005, %v3165
    %3167 = vmatprep.mubr.bf16.mxu0 %v641
    %3168 = vmatmul.mubr.bf16.gmra.mrb[0].mxu0 %v640
    %v3169 = vpop.f32.mrb[0].mxu0
    %v3170 = vadd.f32 %v3009, %v3169
    %v3171 = vpop.f32.mrb[0].mxu0
    %v3172 = vadd.f32 %v3011, %v3171
    %v3173 = vpop.f32.mrb[0].mxu0
    %v3174 = vadd.f32 %v3013, %v3173
    %v3175 = vpop.f32.mrb[0].mxu0
    %v3176 = vadd.f32 %v3015, %v3175
    %3177 = vmatprep.mubr.bf16.mxu0 %v657
    %3178 = vmatmul.mubr.bf16.gmra.mrb[0].mxu0 %v656
    %v3179 = vpop.f32.mrb[0].mxu0
    %v3180 = vadd.f32 %v3019, %v3179
    %v3181 = vpop.f32.mrb[0].mxu0
    %v3182 = vadd.f32 %v3021, %v3181
    %v3183 = vpop.f32.mrb[0].mxu0
    %v3184 = vpop.f32.mrb[0].mxu0
    %3185 = vdwg.mxu0
    %3186 = vmatprep.subr.bf16.mxu0 %v2071
    %3187 = vmatpush1.bf16.msra.mxu0 %v2070
    %3188 = vmatprep.subr.bf16.mxu0 %v2075
    %3189 = vmatpush1.bf16.msra.mxu0 %v2074
    %3190 = vmatprep.subr.bf16.mxu0 %v2079
    %3191 = vmatpush1.bf16.msra.mxu0 %v2078
    %3192 = vmatprep.subr.bf16.mxu0 %v2083
    %3193 = vmatpush1.bf16.msra.mxu0 %v2082
    %3194 = vmatprep.subr.bf16.mxu0 %v2087
    %3195 = vmatpush1.bf16.msra.mxu0 %v2086
    %3196 = vmatprep.subr.bf16.mxu0 %v2091
    %3197 = vmatpush1.bf16.msra.mxu0 %v2090
    %3198 = vmatprep.subr.bf16.mxu0 %v2095
    %3199 = vmatpush1.bf16.msra.mxu0 %v2094
    %3200 = vmatprep.subr.bf16.mxu0 %v2099
    %3201 = vmatpush1.bf16.msra.mxu0 %v2098
    %3202 = vmatprep.subr.bf16.mxu0 %v2103
    %3203 = vmatpush1.bf16.msra.mxu0 %v2102
    %3204 = vmatprep.subr.bf16.mxu0 %v2107
    %3205 = vmatpush1.bf16.msra.mxu0 %v2106
    %3206 = vmatprep.subr.bf16.mxu0 %v2111
    %3207 = vmatpush1.bf16.msra.mxu0 %v2110
    %3208 = vmatprep.subr.bf16.mxu0 %v2115
    %3209 = vmatpush1.bf16.msra.mxu0 %v2114
    %3210 = vmatprep.subr.bf16.mxu0 %v2119
    %3211 = vmatpush1.bf16.msra.mxu0 %v2118
    %3212 = vmatprep.subr.bf16.mxu0 %v2123
    %3213 = vmatpush1.bf16.msra.mxu0 %v2122
    %3214 = vmatprep.subr.bf16.mxu0 %v2127
    %3215 = vmatpush1.bf16.msra.mxu0 %v2126
    %3216 = vmatprep.subr.bf16.mxu0 %v2131
    %3217 = vmatpush1.bf16.msra.mxu0 %v2130
    %3218 = vmatprep.mubr.bf16.mxu0 %v467
    %3219 = vmatmul.mubr.bf16.gmra.mrb[0].mxu0 %v466
    %v3220 = vpop.f32.mrb[0].mxu0
    %v3221 = vadd.f32 %v3060, %v3220
    %v3222 = vpop.f32.mrb[0].mxu0
    %v3223 = vadd.f32 %v3062, %v3222
    %v3224 = vpop.f32.mrb[0].mxu0
    %v3225 = vadd.f32 %v3064, %v3224
    %v3226 = vpop.f32.mrb[0].mxu0
    %v3227 = vadd.f32 %v3066, %v3226
    %3228 = vmatprep.mubr.bf16.mxu0 %v483
    %3229 = vmatmul.mubr.bf16.gmra.mrb[0].mxu0 %v482
    %v3230 = vpop.f32.mrb[0].mxu0
    %v3231 = vadd.f32 %v3070, %v3230
    %v3232 = vpop.f32.mrb[0].mxu0
    %v3233 = vadd.f32 %v3072, %v3232
    %v3234 = vpop.f32.mrb[0].mxu0
    %v3235 = vadd.f32 %v3074, %v3234
    %v3236 = vpop.f32.mrb[0].mxu0
    %v3237 = vadd.f32 %v3076, %v3236
    %3238 = vmatprep.mubr.bf16.mxu0 %v499
    %3239 = vmatmul.mubr.bf16.gmra.mrb[0].mxu0 %v498
    %v3240 = vpop.f32.mrb[0].mxu0
    %v3241 = vadd.f32 %v3080, %v3240
    %v3242 = vpop.f32.mrb[0].mxu0
    %v3243 = vadd.f32 %v3082, %v3242
    %v3244 = vpop.f32.mrb[0].mxu0
    %v3245 = vadd.f32 %v3084, %v3244
    %v3246 = vpop.f32.mrb[0].mxu0
    %v3247 = vadd.f32 %v3086, %v3246
    %3248 = vmatprep.mubr.bf16.mxu0 %v515
    %3249 = vmatmul.mubr.bf16.gmra.mrb[0].mxu0 %v514
    %v3250 = vpop.f32.mrb[0].mxu0
    %v3251 = vadd.f32 %v3090, %v3250
    %v3252 = vpop.f32.mrb[0].mxu0
    %v3253 = vadd.f32 %v3092, %v3252
    %v3254 = vpop.f32.mrb[0].mxu0
    %v3255 = vadd.f32 %v3094, %v3254
    %v3256 = vpop.f32.mrb[0].mxu0
    %v3257 = vadd.f32 %v3096, %v3256
    %3258 = vmatprep.mubr.bf16.mxu0 %v531
    %3259 = vmatmul.mubr.bf16.gmra.mrb[0].mxu0 %v530
    %v3260 = vpop.f32.mrb[0].mxu0
    %v3261 = vadd.f32 %v3100, %v3260
    %v3262 = vpop.f32.mrb[0].mxu0
    %v3263 = vadd.f32 %v3102, %v3262
    %v3264 = vpop.f32.mrb[0].mxu0
    %v3265 = vadd.f32 %v3104, %v3264
    %v3266 = vpop.f32.mrb[0].mxu0
    %v3267 = vadd.f32 %v3106, %v3266
    %3268 = vmatprep.mubr.bf16.mxu0 %v547
    %3269 = vmatmul.mubr.bf16.gmra.mrb[0].mxu0 %v546
    %v3270 = vpop.f32.mrb[0].mxu0
    %v3271 = vadd.f32 %v3110, %v3270
    %v3272 = vpop.f32.mrb[0].mxu0
    %v3273 = vadd.f32 %v3112, %v3272
    %v3274 = vpop.f32.mrb[0].mxu0
    %v3275 = vadd.f32 %v3114, %v3274
    %v3276 = vpop.f32.mrb[0].mxu0
    %v3277 = vadd.f32 %v3116, %v3276
    %3278 = vmatprep.mubr.bf16.mxu0 %v563
    %3279 = vmatmul.mubr.bf16.gmra.mrb[0].mxu0 %v562
    %v3280 = vpop.f32.mrb[0].mxu0
    %v3281 = vadd.f32 %v3120, %v3280
    %v3282 = vpop.f32.mrb[0].mxu0
    %v3283 = vadd.f32 %v3122, %v3282
    %v3284 = vpop.f32.mrb[0].mxu0
    %v3285 = vadd.f32 %v3124, %v3284
    %v3286 = vpop.f32.mrb[0].mxu0
    %v3287 = vadd.f32 %v3126, %v3286
    %3288 = vmatprep.mubr.bf16.mxu0 %v579
    %3289 = vmatmul.mubr.bf16.gmra.mrb[0].mxu0 %v578
    %v3290 = vpop.f32.mrb[0].mxu0
    %v3291 = vadd.f32 %v3130, %v3290
    %v3292 = vpop.f32.mrb[0].mxu0
    %v3293 = vadd.f32 %v3132, %v3292
    %v3294 = vpop.f32.mrb[0].mxu0
    %v3295 = vadd.f32 %v3134, %v3294
    %v3296 = vpop.f32.mrb[0].mxu0
    %v3297 = vadd.f32 %v3136, %v3296
    %3298 = vmatprep.mubr.bf16.mxu0 %v595
    %3299 = vmatmul.mubr.bf16.gmra.mrb[0].mxu0 %v594
    %v3300 = vpop.f32.mrb[0].mxu0
    %v3301 = vadd.f32 %v3140, %v3300
    %v3302 = vpop.f32.mrb[0].mxu0
    %v3303 = vadd.f32 %v3142, %v3302
    %v3304 = vpop.f32.mrb[0].mxu0
    %v3305 = vadd.f32 %v3144, %v3304
    %v3306 = vpop.f32.mrb[0].mxu0
    %v3307 = vadd.f32 %v3146, %v3306
    %3308 = vmatprep.mubr.bf16.mxu0 %v611
    %3309 = vmatmul.mubr.bf16.gmra.mrb[0].mxu0 %v610
    %v3310 = vpop.f32.mrb[0].mxu0
    %v3311 = vadd.f32 %v3150, %v3310
    %v3312 = vpop.f32.mrb[0].mxu0
    %v3313 = vadd.f32 %v3152, %v3312
    %v3314 = vpop.f32.mrb[0].mxu0
    %v3315 = vadd.f32 %v3154, %v3314
    %v3316 = vpop.f32.mrb[0].mxu0
    %v3317 = vadd.f32 %v3156, %v3316
    %3318 = vmatprep.mubr.bf16.mxu0 %v627
    %3319 = vmatmul.mubr.bf16.gmra.mrb[0].mxu0 %v626
    %v3320 = vpop.f32.mrb[0].mxu0
    %v3321 = vadd.f32 %v3160, %v3320
    %v3322 = vpop.f32.mrb[0].mxu0
    %v3323 = vadd.f32 %v3162, %v3322
    %v3324 = vpop.f32.mrb[0].mxu0
    %v3325 = vadd.f32 %v3164, %v3324
    %v3326 = vpop.f32.mrb[0].mxu0
    %v3327 = vadd.f32 %v3166, %v3326
    %3328 = vmatprep.mubr.bf16.mxu0 %v643
    %3329 = vmatmul.mubr.bf16.gmra.mrb[0].mxu0 %v642
    %v3330 = vpop.f32.mrb[0].mxu0
    %v3331 = vadd.f32 %v3170, %v3330
    %v3332 = vpop.f32.mrb[0].mxu0
    %v3333 = vadd.f32 %v3172, %v3332
    %v3334 = vpop.f32.mrb[0].mxu0
    %v3335 = vadd.f32 %v3174, %v3334
    %v3336 = vpop.f32.mrb[0].mxu0
    %v3337 = vadd.f32 %v3176, %v3336
    %3338 = vmatprep.mubr.bf16.mxu0 %v659
    %3339 = vmatmul.mubr.bf16.gmra.mrb[0].mxu0 %v658
    %v3340 = vpop.f32.mrb[0].mxu0
    %v3341 = vadd.f32 %v3180, %v3340
    %v3342 = vpop.f32.mrb[0].mxu0
    %v3343 = vadd.f32 %v3182, %v3342
    %v3344 = vpop.f32.mrb[0].mxu0
    %v3345 = vpop.f32.mrb[0].mxu0
    %3346 = vdwg.mxu0
    %3347 = vmatprep.subr.bf16.mxu0 %v2135
    %3348 = vmatpush1.bf16.msra.mxu0 %v2134
    %3349 = vmatprep.subr.bf16.mxu0 %v2139
    %3350 = vmatpush1.bf16.msra.mxu0 %v2138
    %3351 = vmatprep.subr.bf16.mxu0 %v2143
    %3352 = vmatpush1.bf16.msra.mxu0 %v2142
    %3353 = vmatprep.subr.bf16.mxu0 %v2147
    %3354 = vmatpush1.bf16.msra.mxu0 %v2146
    %3355 = vmatprep.subr.bf16.mxu0 %v2151
    %3356 = vmatpush1.bf16.msra.mxu0 %v2150
    %3357 = vmatprep.subr.bf16.mxu0 %v2155
    %3358 = vmatpush1.bf16.msra.mxu0 %v2154
    %3359 = vmatprep.subr.bf16.mxu0 %v2159
    %3360 = vmatpush1.bf16.msra.mxu0 %v2158
    %3361 = vmatprep.subr.bf16.mxu0 %v2163
    %3362 = vmatpush1.bf16.msra.mxu0 %v2162
    %3363 = vmatprep.subr.bf16.mxu0 %v2167
    %3364 = vmatpush1.bf16.msra.mxu0 %v2166
    %3365 = vmatprep.subr.bf16.mxu0 %v2171
    %3366 = vmatpush1.bf16.msra.mxu0 %v2170
    %3367 = vmatprep.subr.bf16.mxu0 %v2175
    %3368 = vmatpush1.bf16.msra.mxu0 %v2174
    %3369 = vmatprep.subr.bf16.mxu0 %v2179
    %3370 = vmatpush1.bf16.msra.mxu0 %v2178
    %3371 = vmatprep.subr.bf16.mxu0 %v2183
    %3372 = vmatpush1.bf16.msra.mxu0 %v2182
    %3373 = vmatprep.subr.bf16.mxu0 %v2187
    %3374 = vmatpush1.bf16.msra.mxu0 %v2186
    %3375 = vmatprep.subr.bf16.mxu0 %v2191
    %3376 = vmatpush1.bf16.msra.mxu0 %v2190
    %3377 = vmatprep.subr.bf16.mxu0 %v2195
    %3378 = vmatpush1.bf16.msra.mxu0 %v2194
    %3379 = vmatprep.mubr.bf16.mxu0 %v469
    %3380 = vmatmul.mubr.bf16.gmra.mrb[0].mxu0 %v468
    %v3381 = vpop.f32.mrb[0].mxu0
    %v3382 = vadd.f32 %v3221, %v3381
    %v3383 = vpop.f32.mrb[0].mxu0
    %v3384 = vadd.f32 %v3223, %v3383
    %v3385 = vpop.f32.mrb[0].mxu0
    %v3386 = vadd.f32 %v3225, %v3385
    %v3387 = vpop.f32.mrb[0].mxu0
    %v3388 = vadd.f32 %v3227, %v3387
    %3389 = vmatprep.mubr.bf16.mxu0 %v485
    %3390 = vmatmul.mubr.bf16.gmra.mrb[0].mxu0 %v484
    %v3391 = vpop.f32.mrb[0].mxu0
    %v3392 = vadd.f32 %v3231, %v3391
    %v3393 = vpop.f32.mrb[0].mxu0
    %v3394 = vadd.f32 %v3233, %v3393
    %v3395 = vpop.f32.mrb[0].mxu0
    %v3396 = vadd.f32 %v3235, %v3395
    %v3397 = vpop.f32.mrb[0].mxu0
    %v3398 = vadd.f32 %v3237, %v3397
    %3399 = vmatprep.mubr.bf16.mxu0 %v501
    %3400 = vmatmul.mubr.bf16.gmra.mrb[0].mxu0 %v500
    %v3401 = vpop.f32.mrb[0].mxu0
    %v3402 = vadd.f32 %v3241, %v3401
    %v3403 = vpop.f32.mrb[0].mxu0
    %v3404 = vadd.f32 %v3243, %v3403
    %v3405 = vpop.f32.mrb[0].mxu0
    %v3406 = vadd.f32 %v3245, %v3405
    %v3407 = vpop.f32.mrb[0].mxu0
    %v3408 = vadd.f32 %v3247, %v3407
    %3409 = vmatprep.mubr.bf16.mxu0 %v517
    %3410 = vmatmul.mubr.bf16.gmra.mrb[0].mxu0 %v516
    %v3411 = vpop.f32.mrb[0].mxu0
    %v3412 = vadd.f32 %v3251, %v3411
    %v3413 = vpop.f32.mrb[0].mxu0
    %v3414 = vadd.f32 %v3253, %v3413
    %v3415 = vpop.f32.mrb[0].mxu0
    %v3416 = vadd.f32 %v3255, %v3415
    %v3417 = vpop.f32.mrb[0].mxu0
    %v3418 = vadd.f32 %v3257, %v3417
    %3419 = vmatprep.mubr.bf16.mxu0 %v533
    %3420 = vmatmul.mubr.bf16.gmra.mrb[0].mxu0 %v532
    %v3421 = vpop.f32.mrb[0].mxu0
    %v3422 = vadd.f32 %v3261, %v3421
    %v3423 = vpop.f32.mrb[0].mxu0
    %v3424 = vadd.f32 %v3263, %v3423
    %v3425 = vpop.f32.mrb[0].mxu0
    %v3426 = vadd.f32 %v3265, %v3425
    %v3427 = vpop.f32.mrb[0].mxu0
    %v3428 = vadd.f32 %v3267, %v3427
    %3429 = vmatprep.mubr.bf16.mxu0 %v549
    %3430 = vmatmul.mubr.bf16.gmra.mrb[0].mxu0 %v548
    %v3431 = vpop.f32.mrb[0].mxu0
    %v3432 = vadd.f32 %v3271, %v3431
    %v3433 = vpop.f32.mrb[0].mxu0
    %v3434 = vadd.f32 %v3273, %v3433
    %v3435 = vpop.f32.mrb[0].mxu0
    %v3436 = vadd.f32 %v3275, %v3435
    %v3437 = vpop.f32.mrb[0].mxu0
    %v3438 = vadd.f32 %v3277, %v3437
    %3439 = vmatprep.mubr.bf16.mxu0 %v565
    %3440 = vmatmul.mubr.bf16.gmra.mrb[0].mxu0 %v564
    %v3441 = vpop.f32.mrb[0].mxu0
    %v3442 = vadd.f32 %v3281, %v3441
    %v3443 = vpop.f32.mrb[0].mxu0
    %v3444 = vadd.f32 %v3283, %v3443
    %v3445 = vpop.f32.mrb[0].mxu0
    %v3446 = vadd.f32 %v3285, %v3445
    %v3447 = vpop.f32.mrb[0].mxu0
    %v3448 = vadd.f32 %v3287, %v3447
    %3449 = vmatprep.mubr.bf16.mxu0 %v581
    %3450 = vmatmul.mubr.bf16.gmra.mrb[0].mxu0 %v580
    %v3451 = vpop.f32.mrb[0].mxu0
    %v3452 = vadd.f32 %v3291, %v3451
    %v3453 = vpop.f32.mrb[0].mxu0
    %v3454 = vadd.f32 %v3293, %v3453
    %v3455 = vpop.f32.mrb[0].mxu0
    %v3456 = vadd.f32 %v3295, %v3455
    %v3457 = vpop.f32.mrb[0].mxu0
    %v3458 = vadd.f32 %v3297, %v3457
    %3459 = vmatprep.mubr.bf16.mxu0 %v597
    %3460 = vmatmul.mubr.bf16.gmra.mrb[0].mxu0 %v596
    %v3461 = vpop.f32.mrb[0].mxu0
    %v3462 = vadd.f32 %v3301, %v3461
    %v3463 = vpop.f32.mrb[0].mxu0
    %v3464 = vadd.f32 %v3303, %v3463
    %v3465 = vpop.f32.mrb[0].mxu0
    %v3466 = vadd.f32 %v3305, %v3465
    %v3467 = vpop.f32.mrb[0].mxu0
    %v3468 = vadd.f32 %v3307, %v3467
    %3469 = vmatprep.mubr.bf16.mxu0 %v613
    %3470 = vmatmul.mubr.bf16.gmra.mrb[0].mxu0 %v612
    %v3471 = vpop.f32.mrb[0].mxu0
    %v3472 = vadd.f32 %v3311, %v3471
    %v3473 = vpop.f32.mrb[0].mxu0
    %v3474 = vadd.f32 %v3313, %v3473
    %v3475 = vpop.f32.mrb[0].mxu0
    %v3476 = vadd.f32 %v3315, %v3475
    %v3477 = vpop.f32.mrb[0].mxu0
    %v3478 = vadd.f32 %v3317, %v3477
    %3479 = vmatprep.mubr.bf16.mxu0 %v629
    %3480 = vmatmul.mubr.bf16.gmra.mrb[0].mxu0 %v628
    %v3481 = vpop.f32.mrb[0].mxu0
    %v3482 = vadd.f32 %v3321, %v3481
    %v3483 = vpop.f32.mrb[0].mxu0
    %v3484 = vadd.f32 %v3323, %v3483
    %v3485 = vpop.f32.mrb[0].mxu0
    %v3486 = vadd.f32 %v3325, %v3485
    %v3487 = vpop.f32.mrb[0].mxu0
    %v3488 = vadd.f32 %v3327, %v3487
    %3489 = vmatprep.mubr.bf16.mxu0 %v645
    %3490 = vmatmul.mubr.bf16.gmra.mrb[0].mxu0 %v644
    %v3491 = vpop.f32.mrb[0].mxu0
    %v3492 = vadd.f32 %v3331, %v3491
    %v3493 = vpop.f32.mrb[0].mxu0
    %v3494 = vadd.f32 %v3333, %v3493
    %v3495 = vpop.f32.mrb[0].mxu0
    %v3496 = vadd.f32 %v3335, %v3495
    %v3497 = vpop.f32.mrb[0].mxu0
    %v3498 = vadd.f32 %v3337, %v3497
    %3499 = vmatprep.mubr.bf16.mxu0 %v661
    %3500 = vmatmul.mubr.bf16.gmra.mrb[0].mxu0 %v660
    %v3501 = vpop.f32.mrb[0].mxu0
    %v3502 = vadd.f32 %v3341, %v3501
    %v3503 = vpop.f32.mrb[0].mxu0
    %v3504 = vadd.f32 %v3343, %v3503
    %v3505 = vpop.f32.mrb[0].mxu0
    %v3506 = vpop.f32.mrb[0].mxu0
    %3507 = vdwg.mxu0
    %3508 = vmatprep.subr.bf16.mxu0 %v1689
    %3509 = vmatpush1.bf16.msra.mxu0 %v1688
    %3510 = vmatprep.subr.bf16.mxu0 %v1693
    %3511 = vmatpush1.bf16.msra.mxu0 %v1692
    %3512 = vmatprep.subr.bf16.mxu0 %v1697
    %3513 = vmatpush1.bf16.msra.mxu0 %v1696
    %3514 = vmatprep.subr.bf16.mxu0 %v1701
    %3515 = vmatpush1.bf16.msra.mxu0 %v1700
    %3516 = vmatprep.subr.bf16.mxu0 %v1705
    %3517 = vmatpush1.bf16.msra.mxu0 %v1704
    %3518 = vmatprep.subr.bf16.mxu0 %v1709
    %3519 = vmatpush1.bf16.msra.mxu0 %v1708
    %3520 = vmatprep.subr.bf16.mxu0 %v1713
    %3521 = vmatpush1.bf16.msra.mxu0 %v1712
    %3522 = vmatprep.subr.bf16.mxu0 %v1717
    %3523 = vmatpush1.bf16.msra.mxu0 %v1716
    %3524 = vmatprep.subr.bf16.mxu0 %v1721
    %3525 = vmatpush1.bf16.msra.mxu0 %v1720
    %3526 = vmatprep.subr.bf16.mxu0 %v1725
    %3527 = vmatpush1.bf16.msra.mxu0 %v1724
    %3528 = vmatprep.subr.bf16.mxu0 %v1729
    %3529 = vmatpush1.bf16.msra.mxu0 %v1728
    %3530 = vmatprep.subr.bf16.mxu0 %v1733
    %3531 = vmatpush1.bf16.msra.mxu0 %v1732
    %3532 = vmatprep.subr.bf16.mxu0 %v1737
    %3533 = vmatpush1.bf16.msra.mxu0 %v1736
    %3534 = vmatprep.subr.bf16.mxu0 %v1741
    %3535 = vmatpush1.bf16.msra.mxu0 %v1740
    %3536 = vmatprep.subr.bf16.mxu0 %v1745
    %3537 = vmatpush1.bf16.msra.mxu0 %v1744
    %3538 = vmatprep.subr.bf16.mxu0 %v1749
    %3539 = vmatpush1.bf16.msra.mxu0 %v1748
    %3540 = vmatprep.mubr.bf16.mxu0 %v455
    %3541 = vmatmul.mubr.bf16.gmra.mrb[0].mxu0 %v454
    %v3542 = vpop.f32.mrb[0].mxu0
    %v3543 = vadd.f32 %v2211, %v3542
    %v3544 = vpop.f32.mrb[0].mxu0
    %v3545 = vadd.f32 %v2215, %v3544
    %v3546 = vpop.f32.mrb[0].mxu0
    %v3547 = vadd.f32 %v2211, %v3546
    %v3548 = vpop.f32.mrb[0].mxu0
    %v3549 = vadd.f32 %v2215, %v3548
    %3550 = vmatprep.mubr.bf16.mxu0 %v471
    %3551 = vmatmul.mubr.bf16.gmra.mrb[0].mxu0 %v470
    %v3552 = vpop.f32.mrb[0].mxu0
    %v3553 = vadd.f32 %v2211, %v3552
    %v3554 = vpop.f32.mrb[0].mxu0
    %v3555 = vadd.f32 %v2215, %v3554
    %v3556 = vpop.f32.mrb[0].mxu0
    %v3557 = vadd.f32 %v2211, %v3556
    %v3558 = vpop.f32.mrb[0].mxu0
    %v3559 = vadd.f32 %v2215, %v3558
    %3560 = vmatprep.mubr.bf16.mxu0 %v487
    %3561 = vmatmul.mubr.bf16.gmra.mrb[0].mxu0 %v486
    %v3562 = vpop.f32.mrb[0].mxu0
    %v3563 = vadd.f32 %v2211, %v3562
    %v3564 = vpop.f32.mrb[0].mxu0
    %v3565 = vadd.f32 %v2215, %v3564
    %v3566 = vpop.f32.mrb[0].mxu0
    %v3567 = vadd.f32 %v2211, %v3566
    %v3568 = vpop.f32.mrb[0].mxu0
    %v3569 = vadd.f32 %v2215, %v3568
    %3570 = vmatprep.mubr.bf16.mxu0 %v503
    %3571 = vmatmul.mubr.bf16.gmra.mrb[0].mxu0 %v502
    %v3572 = vpop.f32.mrb[0].mxu0
    %v3573 = vadd.f32 %v2211, %v3572
    %v3574 = vpop.f32.mrb[0].mxu0
    %v3575 = vadd.f32 %v2215, %v3574
    %v3576 = vpop.f32.mrb[0].mxu0
    %v3577 = vadd.f32 %v2211, %v3576
    %v3578 = vpop.f32.mrb[0].mxu0
    %v3579 = vadd.f32 %v2215, %v3578
    %3580 = vmatprep.mubr.bf16.mxu0 %v519
    %3581 = vmatmul.mubr.bf16.gmra.mrb[0].mxu0 %v518
    %v3582 = vpop.f32.mrb[0].mxu0
    %v3583 = vadd.f32 %v2211, %v3582
    %v3584 = vpop.f32.mrb[0].mxu0
    %v3585 = vadd.f32 %v2215, %v3584
    %v3586 = vpop.f32.mrb[0].mxu0
    %v3587 = vadd.f32 %v2211, %v3586
    %v3588 = vpop.f32.mrb[0].mxu0
    %v3589 = vadd.f32 %v2215, %v3588
    %3590 = vmatprep.mubr.bf16.mxu0 %v535
    %3591 = vmatmul.mubr.bf16.gmra.mrb[0].mxu0 %v534
    %v3592 = vpop.f32.mrb[0].mxu0
    %v3593 = vadd.f32 %v2211, %v3592
    %v3594 = vpop.f32.mrb[0].mxu0
    %v3595 = vadd.f32 %v2215, %v3594
    %v3596 = vpop.f32.mrb[0].mxu0
    %v3597 = vadd.f32 %v2211, %v3596
    %v3598 = vpop.f32.mrb[0].mxu0
    %v3599 = vadd.f32 %v2215, %v3598
    %3600 = vmatprep.mubr.bf16.mxu0 %v551
    %3601 = vmatmul.mubr.bf16.gmra.mrb[0].mxu0 %v550
    %v3602 = vpop.f32.mrb[0].mxu0
    %v3603 = vadd.f32 %v2211, %v3602
    %v3604 = vpop.f32.mrb[0].mxu0
    %v3605 = vadd.f32 %v2215, %v3604
    %v3606 = vpop.f32.mrb[0].mxu0
    %v3607 = vadd.f32 %v2211, %v3606
    %v3608 = vpop.f32.mrb[0].mxu0
    %v3609 = vadd.f32 %v2215, %v3608
    %3610 = vmatprep.mubr.bf16.mxu0 %v567
    %3611 = vmatmul.mubr.bf16.gmra.mrb[0].mxu0 %v566
    %v3612 = vpop.f32.mrb[0].mxu0
    %v3613 = vadd.f32 %v2211, %v3612
    %v3614 = vpop.f32.mrb[0].mxu0
    %v3615 = vadd.f32 %v2215, %v3614
    %v3616 = vpop.f32.mrb[0].mxu0
    %v3617 = vadd.f32 %v2211, %v3616
    %v3618 = vpop.f32.mrb[0].mxu0
    %v3619 = vadd.f32 %v2215, %v3618
    %3620 = vmatprep.mubr.bf16.mxu0 %v583
    %3621 = vmatmul.mubr.bf16.gmra.mrb[0].mxu0 %v582
    %v3622 = vpop.f32.mrb[0].mxu0
    %v3623 = vadd.f32 %v2211, %v3622
    %v3624 = vpop.f32.mrb[0].mxu0
    %v3625 = vadd.f32 %v2215, %v3624
    %v3626 = vpop.f32.mrb[0].mxu0
    %v3627 = vadd.f32 %v2211, %v3626
    %v3628 = vpop.f32.mrb[0].mxu0
    %v3629 = vadd.f32 %v2215, %v3628
    %3630 = vmatprep.mubr.bf16.mxu0 %v599
    %3631 = vmatmul.mubr.bf16.gmra.mrb[0].mxu0 %v598
    %v3632 = vpop.f32.mrb[0].mxu0
    %v3633 = vadd.f32 %v2211, %v3632
    %v3634 = vpop.f32.mrb[0].mxu0
    %v3635 = vadd.f32 %v2215, %v3634
    %v3636 = vpop.f32.mrb[0].mxu0
    %v3637 = vadd.f32 %v2211, %v3636
    %v3638 = vpop.f32.mrb[0].mxu0
    %v3639 = vadd.f32 %v2215, %v3638
    %3640 = vmatprep.mubr.bf16.mxu0 %v615
    %3641 = vmatmul.mubr.bf16.gmra.mrb[0].mxu0 %v614
    %v3642 = vpop.f32.mrb[0].mxu0
    %v3643 = vadd.f32 %v2211, %v3642
    %v3644 = vpop.f32.mrb[0].mxu0
    %v3645 = vadd.f32 %v2215, %v3644
    %v3646 = vpop.f32.mrb[0].mxu0
    %v3647 = vadd.f32 %v2211, %v3646
    %v3648 = vpop.f32.mrb[0].mxu0
    %v3649 = vadd.f32 %v2215, %v3648
    %3650 = vmatprep.mubr.bf16.mxu0 %v631
    %3651 = vmatmul.mubr.bf16.gmra.mrb[0].mxu0 %v630
    %v3652 = vpop.f32.mrb[0].mxu0
    %v3653 = vadd.f32 %v2211, %v3652
    %v3654 = vpop.f32.mrb[0].mxu0
    %v3655 = vadd.f32 %v2215, %v3654
    %v3656 = vpop.f32.mrb[0].mxu0
    %v3657 = vadd.f32 %v2211, %v3656
    %v3658 = vpop.f32.mrb[0].mxu0
    %v3659 = vadd.f32 %v2215, %v3658
    %3660 = vmatprep.mubr.bf16.mxu0 %v647
    %3661 = vmatmul.mubr.bf16.gmra.mrb[0].mxu0 %v646
    %v3662 = vpop.f32.mrb[0].mxu0
    %v3663 = vadd.f32 %v2211, %v3662
    %v3664 = vpop.f32.mrb[0].mxu0
    %v3665 = vadd.f32 %v2215, %v3664
    %v3666 = vpop.f32.mrb[0].mxu0
    %v3667 = vpop.f32.mrb[0].mxu0
    %3668 = vdwg.mxu0
    %3669 = vmatprep.subr.bf16.mxu0 %v1753
    %3670 = vmatpush1.bf16.msra.mxu0 %v1752
    %3671 = vmatprep.subr.bf16.mxu0 %v1757
    %3672 = vmatpush1.bf16.msra.mxu0 %v1756
    %3673 = vmatprep.subr.bf16.mxu0 %v1761
    %3674 = vmatpush1.bf16.msra.mxu0 %v1760
    %3675 = vmatprep.subr.bf16.mxu0 %v1765
    %3676 = vmatpush1.bf16.msra.mxu0 %v1764
    %3677 = vmatprep.subr.bf16.mxu0 %v1769
    %3678 = vmatpush1.bf16.msra.mxu0 %v1768
    %3679 = vmatprep.subr.bf16.mxu0 %v1773
    %3680 = vmatpush1.bf16.msra.mxu0 %v1772
    %3681 = vmatprep.subr.bf16.mxu0 %v1777
    %3682 = vmatpush1.bf16.msra.mxu0 %v1776
    %3683 = vmatprep.subr.bf16.mxu0 %v1781
    %3684 = vmatpush1.bf16.msra.mxu0 %v1780
    %3685 = vmatprep.subr.bf16.mxu0 %v1785
    %3686 = vmatpush1.bf16.msra.mxu0 %v1784
    %3687 = vmatprep.subr.bf16.mxu0 %v1789
    %3688 = vmatpush1.bf16.msra.mxu0 %v1788
    %3689 = vmatprep.subr.bf16.mxu0 %v1793
    %3690 = vmatpush1.bf16.msra.mxu0 %v1792
    %3691 = vmatprep.subr.bf16.mxu0 %v1797
    %3692 = vmatpush1.bf16.msra.mxu0 %v1796
    %3693 = vmatprep.subr.bf16.mxu0 %v1801
    %3694 = vmatpush1.bf16.msra.mxu0 %v1800
    %3695 = vmatprep.subr.bf16.mxu0 %v1805
    %3696 = vmatpush1.bf16.msra.mxu0 %v1804
    %3697 = vmatprep.subr.bf16.mxu0 %v1809
    %3698 = vmatpush1.bf16.msra.mxu0 %v1808
    %3699 = vmatprep.subr.bf16.mxu0 %v1813
    %3700 = vmatpush1.bf16.msra.mxu0 %v1812
    %3701 = vmatprep.mubr.bf16.mxu0 %v457
    %3702 = vmatmul.mubr.bf16.gmra.mrb[0].mxu0 %v456
    %v3703 = vpop.f32.mrb[0].mxu0
    %v3704 = vadd.f32 %v3543, %v3703
    %v3705 = vpop.f32.mrb[0].mxu0
    %v3706 = vadd.f32 %v3545, %v3705
    %v3707 = vpop.f32.mrb[0].mxu0
    %v3708 = vadd.f32 %v3547, %v3707
    %v3709 = vpop.f32.mrb[0].mxu0
    %v3710 = vadd.f32 %v3549, %v3709
    %3711 = vmatprep.mubr.bf16.mxu0 %v473
    %3712 = vmatmul.mubr.bf16.gmra.mrb[0].mxu0 %v472
    %v3713 = vpop.f32.mrb[0].mxu0
    %v3714 = vadd.f32 %v3553, %v3713
    %v3715 = vpop.f32.mrb[0].mxu0
    %v3716 = vadd.f32 %v3555, %v3715
    %v3717 = vpop.f32.mrb[0].mxu0
    %v3718 = vadd.f32 %v3557, %v3717
    %v3719 = vpop.f32.mrb[0].mxu0
    %v3720 = vadd.f32 %v3559, %v3719
    %3721 = vmatprep.mubr.bf16.mxu0 %v489
    %3722 = vmatmul.mubr.bf16.gmra.mrb[0].mxu0 %v488
    %v3723 = vpop.f32.mrb[0].mxu0
    %v3724 = vadd.f32 %v3563, %v3723
    %v3725 = vpop.f32.mrb[0].mxu0
    %v3726 = vadd.f32 %v3565, %v3725
    %v3727 = vpop.f32.mrb[0].mxu0
    %v3728 = vadd.f32 %v3567, %v3727
    %v3729 = vpop.f32.mrb[0].mxu0
    %v3730 = vadd.f32 %v3569, %v3729
    %3731 = vmatprep.mubr.bf16.mxu0 %v505
    %3732 = vmatmul.mubr.bf16.gmra.mrb[0].mxu0 %v504
    %v3733 = vpop.f32.mrb[0].mxu0
    %v3734 = vadd.f32 %v3573, %v3733
    %v3735 = vpop.f32.mrb[0].mxu0
    %v3736 = vadd.f32 %v3575, %v3735
    %v3737 = vpop.f32.mrb[0].mxu0
    %v3738 = vadd.f32 %v3577, %v3737
    %v3739 = vpop.f32.mrb[0].mxu0
    %v3740 = vadd.f32 %v3579, %v3739
    %3741 = vmatprep.mubr.bf16.mxu0 %v521
    %3742 = vmatmul.mubr.bf16.gmra.mrb[0].mxu0 %v520
    %v3743 = vpop.f32.mrb[0].mxu0
    %v3744 = vadd.f32 %v3583, %v3743
    %v3745 = vpop.f32.mrb[0].mxu0
    %v3746 = vadd.f32 %v3585, %v3745
    %v3747 = vpop.f32.mrb[0].mxu0
    %v3748 = vadd.f32 %v3587, %v3747
    %v3749 = vpop.f32.mrb[0].mxu0
    %v3750 = vadd.f32 %v3589, %v3749
    %3751 = vmatprep.mubr.bf16.mxu0 %v537
    %3752 = vmatmul.mubr.bf16.gmra.mrb[0].mxu0 %v536
    %v3753 = vpop.f32.mrb[0].mxu0
    %v3754 = vadd.f32 %v3593, %v3753
    %v3755 = vpop.f32.mrb[0].mxu0
    %v3756 = vadd.f32 %v3595, %v3755
    %v3757 = vpop.f32.mrb[0].mxu0
    %v3758 = vadd.f32 %v3597, %v3757
    %v3759 = vpop.f32.mrb[0].mxu0
    %v3760 = vadd.f32 %v3599, %v3759
    %3761 = vmatprep.mubr.bf16.mxu0 %v553
    %3762 = vmatmul.mubr.bf16.gmra.mrb[0].mxu0 %v552
    %v3763 = vpop.f32.mrb[0].mxu0
    %v3764 = vadd.f32 %v3603, %v3763
    %v3765 = vpop.f32.mrb[0].mxu0
    %v3766 = vadd.f32 %v3605, %v3765
    %v3767 = vpop.f32.mrb[0].mxu0
    %v3768 = vadd.f32 %v3607, %v3767
    %v3769 = vpop.f32.mrb[0].mxu0
    %v3770 = vadd.f32 %v3609, %v3769
    %3771 = vmatprep.mubr.bf16.mxu0 %v569
    %3772 = vmatmul.mubr.bf16.gmra.mrb[0].mxu0 %v568
    %v3773 = vpop.f32.mrb[0].mxu0
    %v3774 = vadd.f32 %v3613, %v3773
    %v3775 = vpop.f32.mrb[0].mxu0
    %v3776 = vadd.f32 %v3615, %v3775
    %v3777 = vpop.f32.mrb[0].mxu0
    %v3778 = vadd.f32 %v3617, %v3777
    %v3779 = vpop.f32.mrb[0].mxu0
    %v3780 = vadd.f32 %v3619, %v3779
    %3781 = vmatprep.mubr.bf16.mxu0 %v585
    %3782 = vmatmul.mubr.bf16.gmra.mrb[0].mxu0 %v584
    %v3783 = vpop.f32.mrb[0].mxu0
    %v3784 = vadd.f32 %v3623, %v3783
    %v3785 = vpop.f32.mrb[0].mxu0
    %v3786 = vadd.f32 %v3625, %v3785
    %v3787 = vpop.f32.mrb[0].mxu0
    %v3788 = vadd.f32 %v3627, %v3787
    %v3789 = vpop.f32.mrb[0].mxu0
    %v3790 = vadd.f32 %v3629, %v3789
    %3791 = vmatprep.mubr.bf16.mxu0 %v601
    %3792 = vmatmul.mubr.bf16.gmra.mrb[0].mxu0 %v600
    %v3793 = vpop.f32.mrb[0].mxu0
    %v3794 = vadd.f32 %v3633, %v3793
    %v3795 = vpop.f32.mrb[0].mxu0
    %v3796 = vadd.f32 %v3635, %v3795
    %v3797 = vpop.f32.mrb[0].mxu0
    %v3798 = vadd.f32 %v3637, %v3797
    %v3799 = vpop.f32.mrb[0].mxu0
    %v3800 = vadd.f32 %v3639, %v3799
    %3801 = vmatprep.mubr.bf16.mxu0 %v617
    %3802 = vmatmul.mubr.bf16.gmra.mrb[0].mxu0 %v616
    %v3803 = vpop.f32.mrb[0].mxu0
    %v3804 = vadd.f32 %v3643, %v3803
    %v3805 = vpop.f32.mrb[0].mxu0
    %v3806 = vadd.f32 %v3645, %v3805
    %v3807 = vpop.f32.mrb[0].mxu0
    %v3808 = vadd.f32 %v3647, %v3807
    %v3809 = vpop.f32.mrb[0].mxu0
    %v3810 = vadd.f32 %v3649, %v3809
    %3811 = vmatprep.mubr.bf16.mxu0 %v633
    %3812 = vmatmul.mubr.bf16.gmra.mrb[0].mxu0 %v632
    %v3813 = vpop.f32.mrb[0].mxu0
    %v3814 = vadd.f32 %v3653, %v3813
    %v3815 = vpop.f32.mrb[0].mxu0
    %v3816 = vadd.f32 %v3655, %v3815
    %v3817 = vpop.f32.mrb[0].mxu0
    %v3818 = vadd.f32 %v3657, %v3817
    %v3819 = vpop.f32.mrb[0].mxu0
    %v3820 = vadd.f32 %v3659, %v3819
    %3821 = vmatprep.mubr.bf16.mxu0 %v649
    %3822 = vmatmul.mubr.bf16.gmra.mrb[0].mxu0 %v648
    %v3823 = vpop.f32.mrb[0].mxu0
    %v3824 = vadd.f32 %v3663, %v3823
    %v3825 = vpop.f32.mrb[0].mxu0
    %v3826 = vadd.f32 %v3665, %v3825
    %v3827 = vpop.f32.mrb[0].mxu0
    %v3828 = vpop.f32.mrb[0].mxu0
    %3829 = vdwg.mxu0
    %3830 = vmatprep.subr.bf16.mxu0 %v1817
    %3831 = vmatpush1.bf16.msra.mxu0 %v1816
    %3832 = vmatprep.subr.bf16.mxu0 %v1821
    %3833 = vmatpush1.bf16.msra.mxu0 %v1820
    %3834 = vmatprep.subr.bf16.mxu0 %v1825
    %3835 = vmatpush1.bf16.msra.mxu0 %v1824
    %3836 = vmatprep.subr.bf16.mxu0 %v1829
    %3837 = vmatpush1.bf16.msra.mxu0 %v1828
    %3838 = vmatprep.subr.bf16.mxu0 %v1833
    %3839 = vmatpush1.bf16.msra.mxu0 %v1832
    %3840 = vmatprep.subr.bf16.mxu0 %v1837
    %3841 = vmatpush1.bf16.msra.mxu0 %v1836
    %3842 = vmatprep.subr.bf16.mxu0 %v1841
    %3843 = vmatpush1.bf16.msra.mxu0 %v1840
    %3844 = vmatprep.subr.bf16.mxu0 %v1845
    %3845 = vmatpush1.bf16.msra.mxu0 %v1844
    %3846 = vmatprep.subr.bf16.mxu0 %v1849
    %3847 = vmatpush1.bf16.msra.mxu0 %v1848
    %3848 = vmatprep.subr.bf16.mxu0 %v1853
    %3849 = vmatpush1.bf16.msra.mxu0 %v1852
    %3850 = vmatprep.subr.bf16.mxu0 %v1857
    %3851 = vmatpush1.bf16.msra.mxu0 %v1856
    %3852 = vmatprep.subr.bf16.mxu0 %v1861
    %3853 = vmatpush1.bf16.msra.mxu0 %v1860
    %3854 = vmatprep.subr.bf16.mxu0 %v1865
    %3855 = vmatpush1.bf16.msra.mxu0 %v1864
    %3856 = vmatprep.subr.bf16.mxu0 %v1869
    %3857 = vmatpush1.bf16.msra.mxu0 %v1868
    %3858 = vmatprep.subr.bf16.mxu0 %v1873
    %3859 = vmatpush1.bf16.msra.mxu0 %v1872
    %3860 = vmatprep.subr.bf16.mxu0 %v1877
    %3861 = vmatpush1.bf16.msra.mxu0 %v1876
    %3862 = vmatprep.mubr.bf16.mxu0 %v459
    %3863 = vmatmul.mubr.bf16.gmra.mrb[0].mxu0 %v458
    %v3864 = vpop.f32.mrb[0].mxu0
    %v3865 = vadd.f32 %v3704, %v3864
    %v3866 = vpop.f32.mrb[0].mxu0
    %v3867 = vadd.f32 %v3706, %v3866
    %v3868 = vpop.f32.mrb[0].mxu0
    %v3869 = vadd.f32 %v3708, %v3868
    %v3870 = vpop.f32.mrb[0].mxu0
    %v3871 = vadd.f32 %v3710, %v3870
    %3872 = vmatprep.mubr.bf16.mxu0 %v475
    %3873 = vmatmul.mubr.bf16.gmra.mrb[0].mxu0 %v474
    %v3874 = vpop.f32.mrb[0].mxu0
    %v3875 = vadd.f32 %v3714, %v3874
    %v3876 = vpop.f32.mrb[0].mxu0
    %v3877 = vadd.f32 %v3716, %v3876
    %v3878 = vpop.f32.mrb[0].mxu0
    %v3879 = vadd.f32 %v3718, %v3878
    %v3880 = vpop.f32.mrb[0].mxu0
    %v3881 = vadd.f32 %v3720, %v3880
    %3882 = vmatprep.mubr.bf16.mxu0 %v491
    %3883 = vmatmul.mubr.bf16.gmra.mrb[0].mxu0 %v490
    %v3884 = vpop.f32.mrb[0].mxu0
    %v3885 = vadd.f32 %v3724, %v3884
    %v3886 = vpop.f32.mrb[0].mxu0
    %v3887 = vadd.f32 %v3726, %v3886
    %v3888 = vpop.f32.mrb[0].mxu0
    %v3889 = vadd.f32 %v3728, %v3888
    %v3890 = vpop.f32.mrb[0].mxu0
    %v3891 = vadd.f32 %v3730, %v3890
    %3892 = vmatprep.mubr.bf16.mxu0 %v507
    %3893 = vmatmul.mubr.bf16.gmra.mrb[0].mxu0 %v506
    %v3894 = vpop.f32.mrb[0].mxu0
    %v3895 = vadd.f32 %v3734, %v3894
    %v3896 = vpop.f32.mrb[0].mxu0
    %v3897 = vadd.f32 %v3736, %v3896
    %v3898 = vpop.f32.mrb[0].mxu0
    %v3899 = vadd.f32 %v3738, %v3898
    %v3900 = vpop.f32.mrb[0].mxu0
    %v3901 = vadd.f32 %v3740, %v3900
    %3902 = vmatprep.mubr.bf16.mxu0 %v523
    %3903 = vmatmul.mubr.bf16.gmra.mrb[0].mxu0 %v522
    %v3904 = vpop.f32.mrb[0].mxu0
    %v3905 = vadd.f32 %v3744, %v3904
    %v3906 = vpop.f32.mrb[0].mxu0
    %v3907 = vadd.f32 %v3746, %v3906
    %v3908 = vpop.f32.mrb[0].mxu0
    %v3909 = vadd.f32 %v3748, %v3908
    %v3910 = vpop.f32.mrb[0].mxu0
    %v3911 = vadd.f32 %v3750, %v3910
    %3912 = vmatprep.mubr.bf16.mxu0 %v539
    %3913 = vmatmul.mubr.bf16.gmra.mrb[0].mxu0 %v538
    %v3914 = vpop.f32.mrb[0].mxu0
    %v3915 = vadd.f32 %v3754, %v3914
    %v3916 = vpop.f32.mrb[0].mxu0
    %v3917 = vadd.f32 %v3756, %v3916
    %v3918 = vpop.f32.mrb[0].mxu0
    %v3919 = vadd.f32 %v3758, %v3918
    %v3920 = vpop.f32.mrb[0].mxu0
    %v3921 = vadd.f32 %v3760, %v3920
    %3922 = vmatprep.mubr.bf16.mxu0 %v555
    %3923 = vmatmul.mubr.bf16.gmra.mrb[0].mxu0 %v554
    %v3924 = vpop.f32.mrb[0].mxu0
    %v3925 = vadd.f32 %v3764, %v3924
    %v3926 = vpop.f32.mrb[0].mxu0
    %v3927 = vadd.f32 %v3766, %v3926
    %v3928 = vpop.f32.mrb[0].mxu0
    %v3929 = vadd.f32 %v3768, %v3928
    %v3930 = vpop.f32.mrb[0].mxu0
    %v3931 = vadd.f32 %v3770, %v3930
    %3932 = vmatprep.mubr.bf16.mxu0 %v571
    %3933 = vmatmul.mubr.bf16.gmra.mrb[0].mxu0 %v570
    %v3934 = vpop.f32.mrb[0].mxu0
    %v3935 = vadd.f32 %v3774, %v3934
    %v3936 = vpop.f32.mrb[0].mxu0
    %v3937 = vadd.f32 %v3776, %v3936
    %v3938 = vpop.f32.mrb[0].mxu0
    %v3939 = vadd.f32 %v3778, %v3938
    %v3940 = vpop.f32.mrb[0].mxu0
    %v3941 = vadd.f32 %v3780, %v3940
    %3942 = vmatprep.mubr.bf16.mxu0 %v587
    %3943 = vmatmul.mubr.bf16.gmra.mrb[0].mxu0 %v586
    %v3944 = vpop.f32.mrb[0].mxu0
    %v3945 = vadd.f32 %v3784, %v3944
    %v3946 = vpop.f32.mrb[0].mxu0
    %v3947 = vadd.f32 %v3786, %v3946
    %v3948 = vpop.f32.mrb[0].mxu0
    %v3949 = vadd.f32 %v3788, %v3948
    %v3950 = vpop.f32.mrb[0].mxu0
    %v3951 = vadd.f32 %v3790, %v3950
    %3952 = vmatprep.mubr.bf16.mxu0 %v603
    %3953 = vmatmul.mubr.bf16.gmra.mrb[0].mxu0 %v602
    %v3954 = vpop.f32.mrb[0].mxu0
    %v3955 = vadd.f32 %v3794, %v3954
    %v3956 = vpop.f32.mrb[0].mxu0
    %v3957 = vadd.f32 %v3796, %v3956
    %v3958 = vpop.f32.mrb[0].mxu0
    %v3959 = vadd.f32 %v3798, %v3958
    %v3960 = vpop.f32.mrb[0].mxu0
    %v3961 = vadd.f32 %v3800, %v3960
    %3962 = vmatprep.mubr.bf16.mxu0 %v619
    %3963 = vmatmul.mubr.bf16.gmra.mrb[0].mxu0 %v618
    %v3964 = vpop.f32.mrb[0].mxu0
    %v3965 = vadd.f32 %v3804, %v3964
    %v3966 = vpop.f32.mrb[0].mxu0
    %v3967 = vadd.f32 %v3806, %v3966
    %v3968 = vpop.f32.mrb[0].mxu0
    %v3969 = vadd.f32 %v3808, %v3968
    %v3970 = vpop.f32.mrb[0].mxu0
    %v3971 = vadd.f32 %v3810, %v3970
    %3972 = vmatprep.mubr.bf16.mxu0 %v635
    %3973 = vmatmul.mubr.bf16.gmra.mrb[0].mxu0 %v634
    %v3974 = vpop.f32.mrb[0].mxu0
    %v3975 = vadd.f32 %v3814, %v3974
    %v3976 = vpop.f32.mrb[0].mxu0
    %v3977 = vadd.f32 %v3816, %v3976
    %v3978 = vpop.f32.mrb[0].mxu0
    %v3979 = vadd.f32 %v3818, %v3978
    %v3980 = vpop.f32.mrb[0].mxu0
    %v3981 = vadd.f32 %v3820, %v3980
    %3982 = vmatprep.mubr.bf16.mxu0 %v651
    %3983 = vmatmul.mubr.bf16.gmra.mrb[0].mxu0 %v650
    %v3984 = vpop.f32.mrb[0].mxu0
    %v3985 = vadd.f32 %v3824, %v3984
    %v3986 = vpop.f32.mrb[0].mxu0
    %v3987 = vadd.f32 %v3826, %v3986
    %v3988 = vpop.f32.mrb[0].mxu0
    %v3989 = vpop.f32.mrb[0].mxu0
    %3990 = vdwg.mxu0
    %3991 = vmatprep.subr.bf16.mxu0 %v1881
    %3992 = vmatpush1.bf16.msra.mxu0 %v1880
    %3993 = vmatprep.subr.bf16.mxu0 %v1885
    %3994 = vmatpush1.bf16.msra.mxu0 %v1884
    %3995 = vmatprep.subr.bf16.mxu0 %v1889
    %3996 = vmatpush1.bf16.msra.mxu0 %v1888
    %3997 = vmatprep.subr.bf16.mxu0 %v1893
    %3998 = vmatpush1.bf16.msra.mxu0 %v1892
    %3999 = vmatprep.subr.bf16.mxu0 %v1897
    %4000 = vmatpush1.bf16.msra.mxu0 %v1896
    %4001 = vmatprep.subr.bf16.mxu0 %v1901
    %4002 = vmatpush1.bf16.msra.mxu0 %v1900
    %4003 = vmatprep.subr.bf16.mxu0 %v1905
    %4004 = vmatpush1.bf16.msra.mxu0 %v1904
    %4005 = vmatprep.subr.bf16.mxu0 %v1909
    %4006 = vmatpush1.bf16.msra.mxu0 %v1908
    %4007 = vmatprep.subr.bf16.mxu0 %v1913
    %4008 = vmatpush1.bf16.msra.mxu0 %v1912
    %4009 = vmatprep.subr.bf16.mxu0 %v1917
    %4010 = vmatpush1.bf16.msra.mxu0 %v1916
    %4011 = vmatprep.subr.bf16.mxu0 %v1921
    %4012 = vmatpush1.bf16.msra.mxu0 %v1920
    %4013 = vmatprep.subr.bf16.mxu0 %v1925
    %4014 = vmatpush1.bf16.msra.mxu0 %v1924
    %4015 = vmatprep.subr.bf16.mxu0 %v1929
    %4016 = vmatpush1.bf16.msra.mxu0 %v1928
    %4017 = vmatprep.subr.bf16.mxu0 %v1933
    %4018 = vmatpush1.bf16.msra.mxu0 %v1932
    %4019 = vmatprep.subr.bf16.mxu0 %v1937
    %4020 = vmatpush1.bf16.msra.mxu0 %v1936
    %4021 = vmatprep.subr.bf16.mxu0 %v1941
    %4022 = vmatpush1.bf16.msra.mxu0 %v1940
    %4023 = vmatprep.mubr.bf16.mxu0 %v461
    %4024 = vmatmul.mubr.bf16.gmra.mrb[0].mxu0 %v460
    %v4025 = vpop.f32.mrb[0].mxu0
    %v4026 = vadd.f32 %v3865, %v4025
    %v4027 = vpop.f32.mrb[0].mxu0
    %v4028 = vadd.f32 %v3867, %v4027
    %v4029 = vpop.f32.mrb[0].mxu0
    %v4030 = vadd.f32 %v3869, %v4029
    %v4031 = vpop.f32.mrb[0].mxu0
    %v4032 = vadd.f32 %v3871, %v4031
    %4033 = vmatprep.mubr.bf16.mxu0 %v477
    %4034 = vmatmul.mubr.bf16.gmra.mrb[0].mxu0 %v476
    %v4035 = vpop.f32.mrb[0].mxu0
    %v4036 = vadd.f32 %v3875, %v4035
    %v4037 = vpop.f32.mrb[0].mxu0
    %v4038 = vadd.f32 %v3877, %v4037
    %v4039 = vpop.f32.mrb[0].mxu0
    %v4040 = vadd.f32 %v3879, %v4039
    %v4041 = vpop.f32.mrb[0].mxu0
    %v4042 = vadd.f32 %v3881, %v4041
    %4043 = vmatprep.mubr.bf16.mxu0 %v493
    %4044 = vmatmul.mubr.bf16.gmra.mrb[0].mxu0 %v492
    %v4045 = vpop.f32.mrb[0].mxu0
    %v4046 = vadd.f32 %v3885, %v4045
    %v4047 = vpop.f32.mrb[0].mxu0
    %v4048 = vadd.f32 %v3887, %v4047
    %v4049 = vpop.f32.mrb[0].mxu0
    %v4050 = vadd.f32 %v3889, %v4049
    %v4051 = vpop.f32.mrb[0].mxu0
    %v4052 = vadd.f32 %v3891, %v4051
    %4053 = vmatprep.mubr.bf16.mxu0 %v509
    %4054 = vmatmul.mubr.bf16.gmra.mrb[0].mxu0 %v508
    %v4055 = vpop.f32.mrb[0].mxu0
    %v4056 = vadd.f32 %v3895, %v4055
    %v4057 = vpop.f32.mrb[0].mxu0
    %v4058 = vadd.f32 %v3897, %v4057
    %v4059 = vpop.f32.mrb[0].mxu0
    %v4060 = vadd.f32 %v3899, %v4059
    %v4061 = vpop.f32.mrb[0].mxu0
    %v4062 = vadd.f32 %v3901, %v4061
    %4063 = vmatprep.mubr.bf16.mxu0 %v525
    %4064 = vmatmul.mubr.bf16.gmra.mrb[0].mxu0 %v524
    %v4065 = vpop.f32.mrb[0].mxu0
    %v4066 = vadd.f32 %v3905, %v4065
    %v4067 = vpop.f32.mrb[0].mxu0
    %v4068 = vadd.f32 %v3907, %v4067
    %v4069 = vpop.f32.mrb[0].mxu0
    %v4070 = vadd.f32 %v3909, %v4069
    %v4071 = vpop.f32.mrb[0].mxu0
    %v4072 = vadd.f32 %v3911, %v4071
    %4073 = vmatprep.mubr.bf16.mxu0 %v541
    %4074 = vmatmul.mubr.bf16.gmra.mrb[0].mxu0 %v540
    %v4075 = vpop.f32.mrb[0].mxu0
    %v4076 = vadd.f32 %v3915, %v4075
    %v4077 = vpop.f32.mrb[0].mxu0
    %v4078 = vadd.f32 %v3917, %v4077
    %v4079 = vpop.f32.mrb[0].mxu0
    %v4080 = vadd.f32 %v3919, %v4079
    %v4081 = vpop.f32.mrb[0].mxu0
    %v4082 = vadd.f32 %v3921, %v4081
    %4083 = vmatprep.mubr.bf16.mxu0 %v557
    %4084 = vmatmul.mubr.bf16.gmra.mrb[0].mxu0 %v556
    %v4085 = vpop.f32.mrb[0].mxu0
    %v4086 = vadd.f32 %v3925, %v4085
    %v4087 = vpop.f32.mrb[0].mxu0
    %v4088 = vadd.f32 %v3927, %v4087
    %v4089 = vpop.f32.mrb[0].mxu0
    %v4090 = vadd.f32 %v3929, %v4089
    %v4091 = vpop.f32.mrb[0].mxu0
    %v4092 = vadd.f32 %v3931, %v4091
    %4093 = vmatprep.mubr.bf16.mxu0 %v573
    %4094 = vmatmul.mubr.bf16.gmra.mrb[0].mxu0 %v572
    %v4095 = vpop.f32.mrb[0].mxu0
    %v4096 = vadd.f32 %v3935, %v4095
    %v4097 = vpop.f32.mrb[0].mxu0
    %v4098 = vadd.f32 %v3937, %v4097
    %v4099 = vpop.f32.mrb[0].mxu0
    %v4100 = vadd.f32 %v3939, %v4099
    %v4101 = vpop.f32.mrb[0].mxu0
    %v4102 = vadd.f32 %v3941, %v4101
    %4103 = vmatprep.mubr.bf16.mxu0 %v589
    %4104 = vmatmul.mubr.bf16.gmra.mrb[0].mxu0 %v588
    %v4105 = vpop.f32.mrb[0].mxu0
    %v4106 = vadd.f32 %v3945, %v4105
    %v4107 = vpop.f32.mrb[0].mxu0
    %v4108 = vadd.f32 %v3947, %v4107
    %v4109 = vpop.f32.mrb[0].mxu0
    %v4110 = vadd.f32 %v3949, %v4109
    %v4111 = vpop.f32.mrb[0].mxu0
    %v4112 = vadd.f32 %v3951, %v4111
    %4113 = vmatprep.mubr.bf16.mxu0 %v605
    %4114 = vmatmul.mubr.bf16.gmra.mrb[0].mxu0 %v604
    %v4115 = vpop.f32.mrb[0].mxu0
    %v4116 = vadd.f32 %v3955, %v4115
    %v4117 = vpop.f32.mrb[0].mxu0
    %v4118 = vadd.f32 %v3957, %v4117
    %v4119 = vpop.f32.mrb[0].mxu0
    %v4120 = vadd.f32 %v3959, %v4119
    %v4121 = vpop.f32.mrb[0].mxu0
    %v4122 = vadd.f32 %v3961, %v4121
    %4123 = vmatprep.mubr.bf16.mxu0 %v621
    %4124 = vmatmul.mubr.bf16.gmra.mrb[0].mxu0 %v620
    %v4125 = vpop.f32.mrb[0].mxu0
    %v4126 = vadd.f32 %v3965, %v4125
    %v4127 = vpop.f32.mrb[0].mxu0
    %v4128 = vadd.f32 %v3967, %v4127
    %v4129 = vpop.f32.mrb[0].mxu0
    %v4130 = vadd.f32 %v3969, %v4129
    %v4131 = vpop.f32.mrb[0].mxu0
    %v4132 = vadd.f32 %v3971, %v4131
    %4133 = vmatprep.mubr.bf16.mxu0 %v637
    %4134 = vmatmul.mubr.bf16.gmra.mrb[0].mxu0 %v636
    %v4135 = vpop.f32.mrb[0].mxu0
    %v4136 = vadd.f32 %v3975, %v4135
    %v4137 = vpop.f32.mrb[0].mxu0
    %v4138 = vadd.f32 %v3977, %v4137
    %v4139 = vpop.f32.mrb[0].mxu0
    %v4140 = vadd.f32 %v3979, %v4139
    %v4141 = vpop.f32.mrb[0].mxu0
    %v4142 = vadd.f32 %v3981, %v4141
    %4143 = vmatprep.mubr.bf16.mxu0 %v653
    %4144 = vmatmul.mubr.bf16.gmra.mrb[0].mxu0 %v652
    %v4145 = vpop.f32.mrb[0].mxu0
    %v4146 = vadd.f32 %v3985, %v4145
    %v4147 = vpop.f32.mrb[0].mxu0
    %v4148 = vadd.f32 %v3987, %v4147
    %v4149 = vpop.f32.mrb[0].mxu0
    %v4150 = vpop.f32.mrb[0].mxu0
    %4151 = vdwg.mxu0
    %4152 = vmatprep.subr.bf16.mxu0 %v1945
    %4153 = vmatpush1.bf16.msra.mxu0 %v1944
    %4154 = vmatprep.subr.bf16.mxu0 %v1949
    %4155 = vmatpush1.bf16.msra.mxu0 %v1948
    %4156 = vmatprep.subr.bf16.mxu0 %v1953
    %4157 = vmatpush1.bf16.msra.mxu0 %v1952
    %4158 = vmatprep.subr.bf16.mxu0 %v1957
    %4159 = vmatpush1.bf16.msra.mxu0 %v1956
    %4160 = vmatprep.subr.bf16.mxu0 %v1961
    %4161 = vmatpush1.bf16.msra.mxu0 %v1960
    %4162 = vmatprep.subr.bf16.mxu0 %v1965
    %4163 = vmatpush1.bf16.msra.mxu0 %v1964
    %4164 = vmatprep.subr.bf16.mxu0 %v1969
    %4165 = vmatpush1.bf16.msra.mxu0 %v1968
    %4166 = vmatprep.subr.bf16.mxu0 %v1973
    %4167 = vmatpush1.bf16.msra.mxu0 %v1972
    %4168 = vmatprep.subr.bf16.mxu0 %v1977
    %4169 = vmatpush1.bf16.msra.mxu0 %v1976
    %4170 = vmatprep.subr.bf16.mxu0 %v1981
    %4171 = vmatpush1.bf16.msra.mxu0 %v1980
    %4172 = vmatprep.subr.bf16.mxu0 %v1985
    %4173 = vmatpush1.bf16.msra.mxu0 %v1984
    %4174 = vmatprep.subr.bf16.mxu0 %v1989
    %4175 = vmatpush1.bf16.msra.mxu0 %v1988
    %4176 = vmatprep.subr.bf16.mxu0 %v1993
    %4177 = vmatpush1.bf16.msra.mxu0 %v1992
    %4178 = vmatprep.subr.bf16.mxu0 %v1997
    %4179 = vmatpush1.bf16.msra.mxu0 %v1996
    %4180 = vmatprep.subr.bf16.mxu0 %v2001
    %4181 = vmatpush1.bf16.msra.mxu0 %v2000
    %4182 = vmatprep.subr.bf16.mxu0 %v2005
    %4183 = vmatpush1.bf16.msra.mxu0 %v2004
    %4184 = vmatprep.mubr.bf16.mxu0 %v463
    %4185 = vmatmul.mubr.bf16.gmra.mrb[0].mxu0 %v462
    %v4186 = vpop.f32.mrb[0].mxu0
    %v4187 = vadd.f32 %v4026, %v4186
    %v4188 = vpop.f32.mrb[0].mxu0
    %v4189 = vadd.f32 %v4028, %v4188
    %v4190 = vpop.f32.mrb[0].mxu0
    %v4191 = vadd.f32 %v4030, %v4190
    %v4192 = vpop.f32.mrb[0].mxu0
    %v4193 = vadd.f32 %v4032, %v4192
    %4194 = vmatprep.mubr.bf16.mxu0 %v479
    %4195 = vmatmul.mubr.bf16.gmra.mrb[0].mxu0 %v478
    %v4196 = vpop.f32.mrb[0].mxu0
    %v4197 = vadd.f32 %v4036, %v4196
    %v4198 = vpop.f32.mrb[0].mxu0
    %v4199 = vadd.f32 %v4038, %v4198
    %v4200 = vpop.f32.mrb[0].mxu0
    %v4201 = vadd.f32 %v4040, %v4200
    %v4202 = vpop.f32.mrb[0].mxu0
    %v4203 = vadd.f32 %v4042, %v4202
    %4204 = vmatprep.mubr.bf16.mxu0 %v495
    %4205 = vmatmul.mubr.bf16.gmra.mrb[0].mxu0 %v494
    %v4206 = vpop.f32.mrb[0].mxu0
    %v4207 = vadd.f32 %v4046, %v4206
    %v4208 = vpop.f32.mrb[0].mxu0
    %v4209 = vadd.f32 %v4048, %v4208
    %v4210 = vpop.f32.mrb[0].mxu0
    %v4211 = vadd.f32 %v4050, %v4210
    %v4212 = vpop.f32.mrb[0].mxu0
    %v4213 = vadd.f32 %v4052, %v4212
    %4214 = vmatprep.mubr.bf16.mxu0 %v511
    %4215 = vmatmul.mubr.bf16.gmra.mrb[0].mxu0 %v510
    %v4216 = vpop.f32.mrb[0].mxu0
    %v4217 = vadd.f32 %v4056, %v4216
    %v4218 = vpop.f32.mrb[0].mxu0
    %v4219 = vadd.f32 %v4058, %v4218
    %v4220 = vpop.f32.mrb[0].mxu0
    %v4221 = vadd.f32 %v4060, %v4220
    %v4222 = vpop.f32.mrb[0].mxu0
    %v4223 = vadd.f32 %v4062, %v4222
    %4224 = vmatprep.mubr.bf16.mxu0 %v527
    %4225 = vmatmul.mubr.bf16.gmra.mrb[0].mxu0 %v526
    %v4226 = vpop.f32.mrb[0].mxu0
    %v4227 = vadd.f32 %v4066, %v4226
    %v4228 = vpop.f32.mrb[0].mxu0
    %v4229 = vadd.f32 %v4068, %v4228
    %v4230 = vpop.f32.mrb[0].mxu0
    %v4231 = vadd.f32 %v4070, %v4230
    %v4232 = vpop.f32.mrb[0].mxu0
    %v4233 = vadd.f32 %v4072, %v4232
    %4234 = vmatprep.mubr.bf16.mxu0 %v543
    %4235 = vmatmul.mubr.bf16.gmra.mrb[0].mxu0 %v542
    %v4236 = vpop.f32.mrb[0].mxu0
    %v4237 = vadd.f32 %v4076, %v4236
    %v4238 = vpop.f32.mrb[0].mxu0
    %v4239 = vadd.f32 %v4078, %v4238
    %v4240 = vpop.f32.mrb[0].mxu0
    %v4241 = vadd.f32 %v4080, %v4240
    %v4242 = vpop.f32.mrb[0].mxu0
    %v4243 = vadd.f32 %v4082, %v4242
    %4244 = vmatprep.mubr.bf16.mxu0 %v559
    %4245 = vmatmul.mubr.bf16.gmra.mrb[0].mxu0 %v558
    %v4246 = vpop.f32.mrb[0].mxu0
    %v4247 = vadd.f32 %v4086, %v4246
    %v4248 = vpop.f32.mrb[0].mxu0
    %v4249 = vadd.f32 %v4088, %v4248
    %v4250 = vpop.f32.mrb[0].mxu0
    %v4251 = vadd.f32 %v4090, %v4250
    %v4252 = vpop.f32.mrb[0].mxu0
    %v4253 = vadd.f32 %v4092, %v4252
    %4254 = vmatprep.mubr.bf16.mxu0 %v575
    %4255 = vmatmul.mubr.bf16.gmra.mrb[0].mxu0 %v574
    %v4256 = vpop.f32.mrb[0].mxu0
    %v4257 = vadd.f32 %v4096, %v4256
    %v4258 = vpop.f32.mrb[0].mxu0
    %v4259 = vadd.f32 %v4098, %v4258
    %v4260 = vpop.f32.mrb[0].mxu0
    %v4261 = vadd.f32 %v4100, %v4260
    %v4262 = vpop.f32.mrb[0].mxu0
    %v4263 = vadd.f32 %v4102, %v4262
    %4264 = vmatprep.mubr.bf16.mxu0 %v591
    %4265 = vmatmul.mubr.bf16.gmra.mrb[0].mxu0 %v590
    %v4266 = vpop.f32.mrb[0].mxu0
    %v4267 = vadd.f32 %v4106, %v4266
    %v4268 = vpop.f32.mrb[0].mxu0
    %v4269 = vadd.f32 %v4108, %v4268
    %v4270 = vpop.f32.mrb[0].mxu0
    %v4271 = vadd.f32 %v4110, %v4270
    %v4272 = vpop.f32.mrb[0].mxu0
    %v4273 = vadd.f32 %v4112, %v4272
    %4274 = vmatprep.mubr.bf16.mxu0 %v607
    %4275 = vmatmul.mubr.bf16.gmra.mrb[0].mxu0 %v606
    %v4276 = vpop.f32.mrb[0].mxu0
    %v4277 = vadd.f32 %v4116, %v4276
    %v4278 = vpop.f32.mrb[0].mxu0
    %v4279 = vadd.f32 %v4118, %v4278
    %v4280 = vpop.f32.mrb[0].mxu0
    %v4281 = vadd.f32 %v4120, %v4280
    %v4282 = vpop.f32.mrb[0].mxu0
    %v4283 = vadd.f32 %v4122, %v4282
    %4284 = vmatprep.mubr.bf16.mxu0 %v623
    %4285 = vmatmul.mubr.bf16.gmra.mrb[0].mxu0 %v622
    %v4286 = vpop.f32.mrb[0].mxu0
    %v4287 = vadd.f32 %v4126, %v4286
    %v4288 = vpop.f32.mrb[0].mxu0
    %v4289 = vadd.f32 %v4128, %v4288
    %v4290 = vpop.f32.mrb[0].mxu0
    %v4291 = vadd.f32 %v4130, %v4290
    %v4292 = vpop.f32.mrb[0].mxu0
    %v4293 = vadd.f32 %v4132, %v4292
    %4294 = vmatprep.mubr.bf16.mxu0 %v639
    %4295 = vmatmul.mubr.bf16.gmra.mrb[0].mxu0 %v638
    %v4296 = vpop.f32.mrb[0].mxu0
    %v4297 = vadd.f32 %v4136, %v4296
    %v4298 = vpop.f32.mrb[0].mxu0
    %v4299 = vadd.f32 %v4138, %v4298
    %v4300 = vpop.f32.mrb[0].mxu0
    %v4301 = vadd.f32 %v4140, %v4300
    %v4302 = vpop.f32.mrb[0].mxu0
    %v4303 = vadd.f32 %v4142, %v4302
    %4304 = vmatprep.mubr.bf16.mxu0 %v655
    %4305 = vmatmul.mubr.bf16.gmra.mrb[0].mxu0 %v654
    %v4306 = vpop.f32.mrb[0].mxu0
    %v4307 = vadd.f32 %v4146, %v4306
    %v4308 = vpop.f32.mrb[0].mxu0
    %v4309 = vadd.f32 %v4148, %v4308
    %v4310 = vpop.f32.mrb[0].mxu0
    %v4311 = vpop.f32.mrb[0].mxu0
    %4312 = vdwg.mxu0
    %4313 = vmatprep.subr.bf16.mxu0 %v2009
    %4314 = vmatpush1.bf16.msra.mxu0 %v2008
    %4315 = vmatprep.subr.bf16.mxu0 %v2013
    %4316 = vmatpush1.bf16.msra.mxu0 %v2012
    %4317 = vmatprep.subr.bf16.mxu0 %v2017
    %4318 = vmatpush1.bf16.msra.mxu0 %v2016
    %4319 = vmatprep.subr.bf16.mxu0 %v2021
    %4320 = vmatpush1.bf16.msra.mxu0 %v2020
    %4321 = vmatprep.subr.bf16.mxu0 %v2025
    %4322 = vmatpush1.bf16.msra.mxu0 %v2024
    %4323 = vmatprep.subr.bf16.mxu0 %v2029
    %4324 = vmatpush1.bf16.msra.mxu0 %v2028
    %4325 = vmatprep.subr.bf16.mxu0 %v2033
    %4326 = vmatpush1.bf16.msra.mxu0 %v2032
    %4327 = vmatprep.subr.bf16.mxu0 %v2037
    %4328 = vmatpush1.bf16.msra.mxu0 %v2036
    %4329 = vmatprep.subr.bf16.mxu0 %v2041
    %4330 = vmatpush1.bf16.msra.mxu0 %v2040
    %4331 = vmatprep.subr.bf16.mxu0 %v2045
    %4332 = vmatpush1.bf16.msra.mxu0 %v2044
    %4333 = vmatprep.subr.bf16.mxu0 %v2049
    %4334 = vmatpush1.bf16.msra.mxu0 %v2048
    %4335 = vmatprep.subr.bf16.mxu0 %v2053
    %4336 = vmatpush1.bf16.msra.mxu0 %v2052
    %4337 = vmatprep.subr.bf16.mxu0 %v2057
    %4338 = vmatpush1.bf16.msra.mxu0 %v2056
    %4339 = vmatprep.subr.bf16.mxu0 %v2061
    %4340 = vmatpush1.bf16.msra.mxu0 %v2060
    %4341 = vmatprep.subr.bf16.mxu0 %v2065
    %4342 = vmatpush1.bf16.msra.mxu0 %v2064
    %4343 = vmatprep.subr.bf16.mxu0 %v2069
    %4344 = vmatpush1.bf16.msra.mxu0 %v2068
    %4345 = vmatprep.mubr.bf16.mxu0 %v465
    %4346 = vmatmul.mubr.bf16.gmra.mrb[0].mxu0 %v464
    %v4347 = vpop.f32.mrb[0].mxu0
    %v4348 = vadd.f32 %v4187, %v4347
    %v4349 = vpop.f32.mrb[0].mxu0
    %v4350 = vadd.f32 %v4189, %v4349
    %v4351 = vpop.f32.mrb[0].mxu0
    %v4352 = vadd.f32 %v4191, %v4351
    %v4353 = vpop.f32.mrb[0].mxu0
    %v4354 = vadd.f32 %v4193, %v4353
    %4355 = vmatprep.mubr.bf16.mxu0 %v481
    %4356 = vmatmul.mubr.bf16.gmra.mrb[0].mxu0 %v480
    %v4357 = vpop.f32.mrb[0].mxu0
    %v4358 = vadd.f32 %v4197, %v4357
    %v4359 = vpop.f32.mrb[0].mxu0
    %v4360 = vadd.f32 %v4199, %v4359
    %v4361 = vpop.f32.mrb[0].mxu0
    %v4362 = vadd.f32 %v4201, %v4361
    %v4363 = vpop.f32.mrb[0].mxu0
    %v4364 = vadd.f32 %v4203, %v4363
    %4365 = vmatprep.mubr.bf16.mxu0 %v497
    %4366 = vmatmul.mubr.bf16.gmra.mrb[0].mxu0 %v496
    %v4367 = vpop.f32.mrb[0].mxu0
    %v4368 = vadd.f32 %v4207, %v4367
    %v4369 = vpop.f32.mrb[0].mxu0
    %v4370 = vadd.f32 %v4209, %v4369
    %v4371 = vpop.f32.mrb[0].mxu0
    %v4372 = vadd.f32 %v4211, %v4371
    %v4373 = vpop.f32.mrb[0].mxu0
    %v4374 = vadd.f32 %v4213, %v4373
    %4375 = vmatprep.mubr.bf16.mxu0 %v513
    %4376 = vmatmul.mubr.bf16.gmra.mrb[0].mxu0 %v512
    %v4377 = vpop.f32.mrb[0].mxu0
    %v4378 = vadd.f32 %v4217, %v4377
    %v4379 = vpop.f32.mrb[0].mxu0
    %v4380 = vadd.f32 %v4219, %v4379
    %v4381 = vpop.f32.mrb[0].mxu0
    %v4382 = vadd.f32 %v4221, %v4381
    %v4383 = vpop.f32.mrb[0].mxu0
    %v4384 = vadd.f32 %v4223, %v4383
    %4385 = vmatprep.mubr.bf16.mxu0 %v529
    %4386 = vmatmul.mubr.bf16.gmra.mrb[0].mxu0 %v528
    %v4387 = vpop.f32.mrb[0].mxu0
    %v4388 = vadd.f32 %v4227, %v4387
    %v4389 = vpop.f32.mrb[0].mxu0
    %v4390 = vadd.f32 %v4229, %v4389
    %v4391 = vpop.f32.mrb[0].mxu0
    %v4392 = vadd.f32 %v4231, %v4391
    %v4393 = vpop.f32.mrb[0].mxu0
    %v4394 = vadd.f32 %v4233, %v4393
    %4395 = vmatprep.mubr.bf16.mxu0 %v545
    %4396 = vmatmul.mubr.bf16.gmra.mrb[0].mxu0 %v544
    %v4397 = vpop.f32.mrb[0].mxu0
    %v4398 = vadd.f32 %v4237, %v4397
    %v4399 = vpop.f32.mrb[0].mxu0
    %v4400 = vadd.f32 %v4239, %v4399
    %v4401 = vpop.f32.mrb[0].mxu0
    %v4402 = vadd.f32 %v4241, %v4401
    %v4403 = vpop.f32.mrb[0].mxu0
    %v4404 = vadd.f32 %v4243, %v4403
    %4405 = vmatprep.mubr.bf16.mxu0 %v561
    %4406 = vmatmul.mubr.bf16.gmra.mrb[0].mxu0 %v560
    %v4407 = vpop.f32.mrb[0].mxu0
    %v4408 = vadd.f32 %v4247, %v4407
    %v4409 = vpop.f32.mrb[0].mxu0
    %v4410 = vadd.f32 %v4249, %v4409
    %v4411 = vpop.f32.mrb[0].mxu0
    %v4412 = vadd.f32 %v4251, %v4411
    %v4413 = vpop.f32.mrb[0].mxu0
    %v4414 = vadd.f32 %v4253, %v4413
    %4415 = vmatprep.mubr.bf16.mxu0 %v577
    %4416 = vmatmul.mubr.bf16.gmra.mrb[0].mxu0 %v576
    %v4417 = vpop.f32.mrb[0].mxu0
    %v4418 = vadd.f32 %v4257, %v4417
    %v4419 = vpop.f32.mrb[0].mxu0
    %v4420 = vadd.f32 %v4259, %v4419
    %v4421 = vpop.f32.mrb[0].mxu0
    %v4422 = vadd.f32 %v4261, %v4421
    %v4423 = vpop.f32.mrb[0].mxu0
    %v4424 = vadd.f32 %v4263, %v4423
    %4425 = vmatprep.mubr.bf16.mxu0 %v593
    %4426 = vmatmul.mubr.bf16.gmra.mrb[0].mxu0 %v592
    %v4427 = vpop.f32.mrb[0].mxu0
    %v4428 = vadd.f32 %v4267, %v4427
    %v4429 = vpop.f32.mrb[0].mxu0
    %v4430 = vadd.f32 %v4269, %v4429
    %v4431 = vpop.f32.mrb[0].mxu0
    %v4432 = vadd.f32 %v4271, %v4431
    %v4433 = vpop.f32.mrb[0].mxu0
    %v4434 = vadd.f32 %v4273, %v4433
    %4435 = vmatprep.mubr.bf16.mxu0 %v609
    %4436 = vmatmul.mubr.bf16.gmra.mrb[0].mxu0 %v608
    %v4437 = vpop.f32.mrb[0].mxu0
    %v4438 = vadd.f32 %v4277, %v4437
    %v4439 = vpop.f32.mrb[0].mxu0
    %v4440 = vadd.f32 %v4279, %v4439
    %v4441 = vpop.f32.mrb[0].mxu0
    %v4442 = vadd.f32 %v4281, %v4441
    %v4443 = vpop.f32.mrb[0].mxu0
    %v4444 = vadd.f32 %v4283, %v4443
    %4445 = vmatprep.mubr.bf16.mxu0 %v625
    %4446 = vmatmul.mubr.bf16.gmra.mrb[0].mxu0 %v624
    %v4447 = vpop.f32.mrb[0].mxu0
    %v4448 = vadd.f32 %v4287, %v4447
    %v4449 = vpop.f32.mrb[0].mxu0
    %v4450 = vadd.f32 %v4289, %v4449
    %v4451 = vpop.f32.mrb[0].mxu0
    %v4452 = vadd.f32 %v4291, %v4451
    %v4453 = vpop.f32.mrb[0].mxu0
    %v4454 = vadd.f32 %v4293, %v4453
    %4455 = vmatprep.mubr.bf16.mxu0 %v641
    %4456 = vmatmul.mubr.bf16.gmra.mrb[0].mxu0 %v640
    %v4457 = vpop.f32.mrb[0].mxu0
    %v4458 = vadd.f32 %v4297, %v4457
    %v4459 = vpop.f32.mrb[0].mxu0
    %v4460 = vadd.f32 %v4299, %v4459
    %v4461 = vpop.f32.mrb[0].mxu0
    %v4462 = vadd.f32 %v4301, %v4461
    %v4463 = vpop.f32.mrb[0].mxu0
    %v4464 = vadd.f32 %v4303, %v4463
    %4465 = vmatprep.mubr.bf16.mxu0 %v657
    %4466 = vmatmul.mubr.bf16.gmra.mrb[0].mxu0 %v656
    %v4467 = vpop.f32.mrb[0].mxu0
    %v4468 = vadd.f32 %v4307, %v4467
    %v4469 = vpop.f32.mrb[0].mxu0
    %v4470 = vadd.f32 %v4309, %v4469
    %v4471 = vpop.f32.mrb[0].mxu0
    %v4472 = vpop.f32.mrb[0].mxu0
    %4473 = vdwg.mxu0
    %4474 = vmatprep.subr.bf16.mxu0 %v2073
    %4475 = vmatpush1.bf16.msra.mxu0 %v2072
    %4476 = vmatprep.subr.bf16.mxu0 %v2077
    %4477 = vmatpush1.bf16.msra.mxu0 %v2076
    %4478 = vmatprep.subr.bf16.mxu0 %v2081
    %4479 = vmatpush1.bf16.msra.mxu0 %v2080
    %4480 = vmatprep.subr.bf16.mxu0 %v2085
    %4481 = vmatpush1.bf16.msra.mxu0 %v2084
    %4482 = vmatprep.subr.bf16.mxu0 %v2089
    %4483 = vmatpush1.bf16.msra.mxu0 %v2088
    %4484 = vmatprep.subr.bf16.mxu0 %v2093
    %4485 = vmatpush1.bf16.msra.mxu0 %v2092
    %4486 = vmatprep.subr.bf16.mxu0 %v2097
    %4487 = vmatpush1.bf16.msra.mxu0 %v2096
    %4488 = vmatprep.subr.bf16.mxu0 %v2101
    %4489 = vmatpush1.bf16.msra.mxu0 %v2100
    %4490 = vmatprep.subr.bf16.mxu0 %v2105
    %4491 = vmatpush1.bf16.msra.mxu0 %v2104
    %4492 = vmatprep.subr.bf16.mxu0 %v2109
    %4493 = vmatpush1.bf16.msra.mxu0 %v2108
    %4494 = vmatprep.subr.bf16.mxu0 %v2113
    %4495 = vmatpush1.bf16.msra.mxu0 %v2112
    %4496 = vmatprep.subr.bf16.mxu0 %v2117
    %4497 = vmatpush1.bf16.msra.mxu0 %v2116
    %4498 = vmatprep.subr.bf16.mxu0 %v2121
    %4499 = vmatpush1.bf16.msra.mxu0 %v2120
    %4500 = vmatprep.subr.bf16.mxu0 %v2125
    %4501 = vmatpush1.bf16.msra.mxu0 %v2124
    %4502 = vmatprep.subr.bf16.mxu0 %v2129
    %4503 = vmatpush1.bf16.msra.mxu0 %v2128
    %4504 = vmatprep.subr.bf16.mxu0 %v2133
    %4505 = vmatpush1.bf16.msra.mxu0 %v2132
    %4506 = vmatprep.mubr.bf16.mxu0 %v467
    %4507 = vmatmul.mubr.bf16.gmra.mrb[0].mxu0 %v466
    %v4508 = vpop.f32.mrb[0].mxu0
    %v4509 = vadd.f32 %v4348, %v4508
    %v4510 = vpop.f32.mrb[0].mxu0
    %v4511 = vadd.f32 %v4350, %v4510
    %v4512 = vpop.f32.mrb[0].mxu0
    %v4513 = vadd.f32 %v4352, %v4512
    %v4514 = vpop.f32.mrb[0].mxu0
    %v4515 = vadd.f32 %v4354, %v4514
    %4516 = vmatprep.mubr.bf16.mxu0 %v483
    %4517 = vmatmul.mubr.bf16.gmra.mrb[0].mxu0 %v482
    %v4518 = vpop.f32.mrb[0].mxu0
    %v4519 = vadd.f32 %v4358, %v4518
    %v4520 = vpop.f32.mrb[0].mxu0
    %v4521 = vadd.f32 %v4360, %v4520
    %v4522 = vpop.f32.mrb[0].mxu0
    %v4523 = vadd.f32 %v4362, %v4522
    %v4524 = vpop.f32.mrb[0].mxu0
    %v4525 = vadd.f32 %v4364, %v4524
    %4526 = vmatprep.mubr.bf16.mxu0 %v499
    %4527 = vmatmul.mubr.bf16.gmra.mrb[0].mxu0 %v498
    %v4528 = vpop.f32.mrb[0].mxu0
    %v4529 = vadd.f32 %v4368, %v4528
    %v4530 = vpop.f32.mrb[0].mxu0
    %v4531 = vadd.f32 %v4370, %v4530
    %v4532 = vpop.f32.mrb[0].mxu0
    %v4533 = vadd.f32 %v4372, %v4532
    %v4534 = vpop.f32.mrb[0].mxu0
    %v4535 = vadd.f32 %v4374, %v4534
    %4536 = vmatprep.mubr.bf16.mxu0 %v515
    %4537 = vmatmul.mubr.bf16.gmra.mrb[0].mxu0 %v514
    %v4538 = vpop.f32.mrb[0].mxu0
    %v4539 = vadd.f32 %v4378, %v4538
    %v4540 = vpop.f32.mrb[0].mxu0
    %v4541 = vadd.f32 %v4380, %v4540
    %v4542 = vpop.f32.mrb[0].mxu0
    %v4543 = vadd.f32 %v4382, %v4542
    %v4544 = vpop.f32.mrb[0].mxu0
    %v4545 = vadd.f32 %v4384, %v4544
    %4546 = vmatprep.mubr.bf16.mxu0 %v531
    %4547 = vmatmul.mubr.bf16.gmra.mrb[0].mxu0 %v530
    %v4548 = vpop.f32.mrb[0].mxu0
    %v4549 = vadd.f32 %v4388, %v4548
    %v4550 = vpop.f32.mrb[0].mxu0
    %v4551 = vadd.f32 %v4390, %v4550
    %v4552 = vpop.f32.mrb[0].mxu0
    %v4553 = vadd.f32 %v4392, %v4552
    %v4554 = vpop.f32.mrb[0].mxu0
    %v4555 = vadd.f32 %v4394, %v4554
    %4556 = vmatprep.mubr.bf16.mxu0 %v547
    %4557 = vmatmul.mubr.bf16.gmra.mrb[0].mxu0 %v546
    %v4558 = vpop.f32.mrb[0].mxu0
    %v4559 = vadd.f32 %v4398, %v4558
    %v4560 = vpop.f32.mrb[0].mxu0
    %v4561 = vadd.f32 %v4400, %v4560
    %v4562 = vpop.f32.mrb[0].mxu0
    %v4563 = vadd.f32 %v4402, %v4562
    %v4564 = vpop.f32.mrb[0].mxu0
    %v4565 = vadd.f32 %v4404, %v4564
    %4566 = vmatprep.mubr.bf16.mxu0 %v563
    %4567 = vmatmul.mubr.bf16.gmra.mrb[0].mxu0 %v562
    %v4568 = vpop.f32.mrb[0].mxu0
    %v4569 = vadd.f32 %v4408, %v4568
    %v4570 = vpop.f32.mrb[0].mxu0
    %v4571 = vadd.f32 %v4410, %v4570
    %v4572 = vpop.f32.mrb[0].mxu0
    %v4573 = vadd.f32 %v4412, %v4572
    %v4574 = vpop.f32.mrb[0].mxu0
    %v4575 = vadd.f32 %v4414, %v4574
    %4576 = vmatprep.mubr.bf16.mxu0 %v579
    %4577 = vmatmul.mubr.bf16.gmra.mrb[0].mxu0 %v578
    %v4578 = vpop.f32.mrb[0].mxu0
    %v4579 = vadd.f32 %v4418, %v4578
    %v4580 = vpop.f32.mrb[0].mxu0
    %v4581 = vadd.f32 %v4420, %v4580
    %v4582 = vpop.f32.mrb[0].mxu0
    %v4583 = vadd.f32 %v4422, %v4582
    %v4584 = vpop.f32.mrb[0].mxu0
    %v4585 = vadd.f32 %v4424, %v4584
    %4586 = vmatprep.mubr.bf16.mxu0 %v595
    %4587 = vmatmul.mubr.bf16.gmra.mrb[0].mxu0 %v594
    %v4588 = vpop.f32.mrb[0].mxu0
    %v4589 = vadd.f32 %v4428, %v4588
    %v4590 = vpop.f32.mrb[0].mxu0
    %v4591 = vadd.f32 %v4430, %v4590
    %v4592 = vpop.f32.mrb[0].mxu0
    %v4593 = vadd.f32 %v4432, %v4592
    %v4594 = vpop.f32.mrb[0].mxu0
    %v4595 = vadd.f32 %v4434, %v4594
    %4596 = vmatprep.mubr.bf16.mxu0 %v611
    %4597 = vmatmul.mubr.bf16.gmra.mrb[0].mxu0 %v610
    %v4598 = vpop.f32.mrb[0].mxu0
    %v4599 = vadd.f32 %v4438, %v4598
    %v4600 = vpop.f32.mrb[0].mxu0
    %v4601 = vadd.f32 %v4440, %v4600
    %v4602 = vpop.f32.mrb[0].mxu0
    %v4603 = vadd.f32 %v4442, %v4602
    %v4604 = vpop.f32.mrb[0].mxu0
    %v4605 = vadd.f32 %v4444, %v4604
    %4606 = vmatprep.mubr.bf16.mxu0 %v627
    %4607 = vmatmul.mubr.bf16.gmra.mrb[0].mxu0 %v626
    %v4608 = vpop.f32.mrb[0].mxu0
    %v4609 = vadd.f32 %v4448, %v4608
    %v4610 = vpop.f32.mrb[0].mxu0
    %v4611 = vadd.f32 %v4450, %v4610
    %v4612 = vpop.f32.mrb[0].mxu0
    %v4613 = vadd.f32 %v4452, %v4612
    %v4614 = vpop.f32.mrb[0].mxu0
    %v4615 = vadd.f32 %v4454, %v4614
    %4616 = vmatprep.mubr.bf16.mxu0 %v643
    %4617 = vmatmul.mubr.bf16.gmra.mrb[0].mxu0 %v642
    %v4618 = vpop.f32.mrb[0].mxu0
    %v4619 = vadd.f32 %v4458, %v4618
    %v4620 = vpop.f32.mrb[0].mxu0
    %v4621 = vadd.f32 %v4460, %v4620
    %v4622 = vpop.f32.mrb[0].mxu0
    %v4623 = vadd.f32 %v4462, %v4622
    %v4624 = vpop.f32.mrb[0].mxu0
    %v4625 = vadd.f32 %v4464, %v4624
    %4626 = vmatprep.mubr.bf16.mxu0 %v659
    %4627 = vmatmul.mubr.bf16.gmra.mrb[0].mxu0 %v658
    %v4628 = vpop.f32.mrb[0].mxu0
    %v4629 = vadd.f32 %v4468, %v4628
    %v4630 = vpop.f32.mrb[0].mxu0
    %v4631 = vadd.f32 %v4470, %v4630
    %v4632 = vpop.f32.mrb[0].mxu0
    %v4633 = vpop.f32.mrb[0].mxu0
    %4634 = vdwg.mxu0
    %4635 = vmatprep.subr.bf16.mxu0 %v2137
    %4636 = vmatpush1.bf16.msra.mxu0 %v2136
    %4637 = vmatprep.subr.bf16.mxu0 %v2141
    %4638 = vmatpush1.bf16.msra.mxu0 %v2140
    %4639 = vmatprep.subr.bf16.mxu0 %v2145
    %4640 = vmatpush1.bf16.msra.mxu0 %v2144
    %4641 = vmatprep.subr.bf16.mxu0 %v2149
    %4642 = vmatpush1.bf16.msra.mxu0 %v2148
    %4643 = vmatprep.subr.bf16.mxu0 %v2153
    %4644 = vmatpush1.bf16.msra.mxu0 %v2152
    %4645 = vmatprep.subr.bf16.mxu0 %v2157
    %4646 = vmatpush1.bf16.msra.mxu0 %v2156
    %4647 = vmatprep.subr.bf16.mxu0 %v2161
    %4648 = vmatpush1.bf16.msra.mxu0 %v2160
    %4649 = vmatprep.subr.bf16.mxu0 %v2165
    %4650 = vmatpush1.bf16.msra.mxu0 %v2164
    %4651 = vmatprep.subr.bf16.mxu0 %v2169
    %4652 = vmatpush1.bf16.msra.mxu0 %v2168
    %4653 = vmatprep.subr.bf16.mxu0 %v2173
    %4654 = vmatpush1.bf16.msra.mxu0 %v2172
    %4655 = vmatprep.subr.bf16.mxu0 %v2177
    %4656 = vmatpush1.bf16.msra.mxu0 %v2176
    %4657 = vmatprep.subr.bf16.mxu0 %v2181
    %4658 = vmatpush1.bf16.msra.mxu0 %v2180
    %4659 = vmatprep.subr.bf16.mxu0 %v2185
    %4660 = vmatpush1.bf16.msra.mxu0 %v2184
    %4661 = vmatprep.subr.bf16.mxu0 %v2189
    %4662 = vmatpush1.bf16.msra.mxu0 %v2188
    %4663 = vmatprep.subr.bf16.mxu0 %v2193
    %4664 = vmatpush1.bf16.msra.mxu0 %v2192
    %4665 = vmatprep.subr.bf16.mxu0 %v2197
    %4666 = vmatpush1.bf16.msra.mxu0 %v2196
    %4667 = vmatprep.mubr.bf16.mxu0 %v469
    %4668 = vmatmul.mubr.bf16.gmra.mrb[0].mxu0 %v468
    %v4669 = vpop.f32.mrb[0].mxu0
    %v4670 = vadd.f32 %v4509, %v4669
    %v4671 = vpop.f32.mrb[0].mxu0
    %v4672 = vadd.f32 %v4511, %v4671
    %v4673 = vpop.f32.mrb[0].mxu0
    %v4674 = vadd.f32 %v4513, %v4673
    %v4675 = vpop.f32.mrb[0].mxu0
    %v4676 = vadd.f32 %v4515, %v4675
    %4677 = vmatprep.mubr.bf16.mxu0 %v485
    %4678 = vmatmul.mubr.bf16.gmra.mrb[0].mxu0 %v484
    %v4679 = vpop.f32.mrb[0].mxu0
    %v4680 = vadd.f32 %v4519, %v4679
    %v4681 = vpop.f32.mrb[0].mxu0
    %v4682 = vadd.f32 %v4521, %v4681
    %v4683 = vpop.f32.mrb[0].mxu0
    %v4684 = vadd.f32 %v4523, %v4683
    %v4685 = vpop.f32.mrb[0].mxu0
    %v4686 = vadd.f32 %v4525, %v4685
    %4687 = vmatprep.mubr.bf16.mxu0 %v501
    %4688 = vmatmul.mubr.bf16.gmra.mrb[0].mxu0 %v500
    %v4689 = vpop.f32.mrb[0].mxu0
    %v4690 = vadd.f32 %v4529, %v4689
    %v4691 = vpop.f32.mrb[0].mxu0
    %v4692 = vadd.f32 %v4531, %v4691
    %v4693 = vpop.f32.mrb[0].mxu0
    %v4694 = vadd.f32 %v4533, %v4693
    %v4695 = vpop.f32.mrb[0].mxu0
    %v4696 = vadd.f32 %v4535, %v4695
    %4697 = vmatprep.mubr.bf16.mxu0 %v517
    %4698 = vmatmul.mubr.bf16.gmra.mrb[0].mxu0 %v516
    %v4699 = vpop.f32.mrb[0].mxu0
    %v4700 = vadd.f32 %v4539, %v4699
    %v4701 = vpop.f32.mrb[0].mxu0
    %v4702 = vadd.f32 %v4541, %v4701
    %v4703 = vpop.f32.mrb[0].mxu0
    %v4704 = vadd.f32 %v4543, %v4703
    %v4705 = vpop.f32.mrb[0].mxu0
    %v4706 = vadd.f32 %v4545, %v4705
    %4707 = vmatprep.mubr.bf16.mxu0 %v533
    %4708 = vmatmul.mubr.bf16.gmra.mrb[0].mxu0 %v532
    %v4709 = vpop.f32.mrb[0].mxu0
    %v4710 = vadd.f32 %v4549, %v4709
    %v4711 = vpop.f32.mrb[0].mxu0
    %v4712 = vadd.f32 %v4551, %v4711
    %v4713 = vpop.f32.mrb[0].mxu0
    %v4714 = vadd.f32 %v4553, %v4713
    %v4715 = vpop.f32.mrb[0].mxu0
    %v4716 = vadd.f32 %v4555, %v4715
    %4717 = vmatprep.mubr.bf16.mxu0 %v549
    %4718 = vmatmul.mubr.bf16.gmra.mrb[0].mxu0 %v548
    %v4719 = vpop.f32.mrb[0].mxu0
    %v4720 = vadd.f32 %v4559, %v4719
    %v4721 = vpop.f32.mrb[0].mxu0
    %v4722 = vadd.f32 %v4561, %v4721
    %v4723 = vpop.f32.mrb[0].mxu0
    %v4724 = vadd.f32 %v4563, %v4723
    %v4725 = vpop.f32.mrb[0].mxu0
    %v4726 = vadd.f32 %v4565, %v4725
    %4727 = vmatprep.mubr.bf16.mxu0 %v565
    %4728 = vmatmul.mubr.bf16.gmra.mrb[0].mxu0 %v564
    %v4729 = vpop.f32.mrb[0].mxu0
    %v4730 = vadd.f32 %v4569, %v4729
    %v4731 = vpop.f32.mrb[0].mxu0
    %v4732 = vadd.f32 %v4571, %v4731
    %v4733 = vpop.f32.mrb[0].mxu0
    %v4734 = vadd.f32 %v4573, %v4733
    %v4735 = vpop.f32.mrb[0].mxu0
    %v4736 = vadd.f32 %v4575, %v4735
    %4737 = vmatprep.mubr.bf16.mxu0 %v581
    %4738 = vmatmul.mubr.bf16.gmra.mrb[0].mxu0 %v580
    %v4739 = vpop.f32.mrb[0].mxu0
    %v4740 = vadd.f32 %v4579, %v4739
    %v4741 = vpop.f32.mrb[0].mxu0
    %v4742 = vadd.f32 %v4581, %v4741
    %v4743 = vpop.f32.mrb[0].mxu0
    %v4744 = vadd.f32 %v4583, %v4743
    %v4745 = vpop.f32.mrb[0].mxu0
    %v4746 = vadd.f32 %v4585, %v4745
    %4747 = vmatprep.mubr.bf16.mxu0 %v597
    %4748 = vmatmul.mubr.bf16.gmra.mrb[0].mxu0 %v596
    %v4749 = vpop.f32.mrb[0].mxu0
    %v4750 = vadd.f32 %v4589, %v4749
    %v4751 = vpop.f32.mrb[0].mxu0
    %v4752 = vadd.f32 %v4591, %v4751
    %v4753 = vpop.f32.mrb[0].mxu0
    %v4754 = vadd.f32 %v4593, %v4753
    %v4755 = vpop.f32.mrb[0].mxu0
    %v4756 = vadd.f32 %v4595, %v4755
    %4757 = vmatprep.mubr.bf16.mxu0 %v613
    %4758 = vmatmul.mubr.bf16.gmra.mrb[0].mxu0 %v612
    %v4759 = vpop.f32.mrb[0].mxu0
    %v4760 = vadd.f32 %v4599, %v4759
    %v4761 = vpop.f32.mrb[0].mxu0
    %v4762 = vadd.f32 %v4601, %v4761
    %v4763 = vpop.f32.mrb[0].mxu0
    %v4764 = vadd.f32 %v4603, %v4763
    %v4765 = vpop.f32.mrb[0].mxu0
    %v4766 = vadd.f32 %v4605, %v4765
    %4767 = vmatprep.mubr.bf16.mxu0 %v629
    %4768 = vmatmul.mubr.bf16.gmra.mrb[0].mxu0 %v628
    %v4769 = vpop.f32.mrb[0].mxu0
    %v4770 = vadd.f32 %v4609, %v4769
    %v4771 = vpop.f32.mrb[0].mxu0
    %v4772 = vadd.f32 %v4611, %v4771
    %v4773 = vpop.f32.mrb[0].mxu0
    %v4774 = vadd.f32 %v4613, %v4773
    %v4775 = vpop.f32.mrb[0].mxu0
    %v4776 = vadd.f32 %v4615, %v4775
    %4777 = vmatprep.mubr.bf16.mxu0 %v645
    %4778 = vmatmul.mubr.bf16.gmra.mrb[0].mxu0 %v644
    %v4779 = vpop.f32.mrb[0].mxu0
    %v4780 = vadd.f32 %v4619, %v4779
    %v4781 = vpop.f32.mrb[0].mxu0
    %v4782 = vadd.f32 %v4621, %v4781
    %v4783 = vpop.f32.mrb[0].mxu0
    %v4784 = vadd.f32 %v4623, %v4783
    %v4785 = vpop.f32.mrb[0].mxu0
    %v4786 = vadd.f32 %v4625, %v4785
    %4787 = vmatprep.mubr.bf16.mxu0 %v661
    %4788 = vmatmul.mubr.bf16.gmra.mrb[0].mxu0 %v660
    %v4789 = vpop.f32.mrb[0].mxu0
    %v4790 = vadd.f32 %v4629, %v4789
    %v4791 = vpop.f32.mrb[0].mxu0
    %v4792 = vadd.f32 %v4631, %v4791
    %v4793 = vpop.f32.mrb[0].mxu0
    %v4794 = vpop.f32.mrb[0].mxu0
    %4795 = vdwg.mxu0
    %4796 = vst [vmem:[#allocation8] sm:$0xff] %v3382
    %4797 = vst [vmem:[#allocation8 + $0x8] sm:$0xff] %v3384
    %4798 = vst [vmem:[#allocation8 + $0x10] sm:$0xff] %v4670
    %4799 = vst [vmem:[#allocation8 + $0x18] sm:$0xff] %v4672
    %4800 = vst [vmem:[#allocation8 + $0x20] sm:$0xff] %v3386
    %4801 = vst [vmem:[#allocation8 + $0x28] sm:$0xff] %v3388
    %4802 = vst [vmem:[#allocation8 + $0x30] sm:$0xff] %v4674
    %4803 = vst [vmem:[#allocation8 + $0x38] sm:$0xff] %v4676
    %4804 = vst [vmem:[#allocation8 + $0x40] sm:$0xff] %v3392
    %4805 = vst [vmem:[#allocation8 + $0x48] sm:$0xff] %v3394
    %4806 = vst [vmem:[#allocation8 + $0x50] sm:$0xff] %v4680
    %4807 = vst [vmem:[#allocation8 + $0x58] sm:$0xff] %v4682
    %4808 = vst [vmem:[#allocation8 + $0x60] sm:$0xff] %v3396
    %4809 = vst [vmem:[#allocation8 + $0x68] sm:$0xff] %v3398
    %4810 = vst [vmem:[#allocation8 + $0x70] sm:$0xff] %v4684
    %4811 = vst [vmem:[#allocation8 + $0x78] sm:$0xff] %v4686
    %4812 = vst [vmem:[#allocation8 + $0x80] sm:$0xff] %v3402
    %4813 = vst [vmem:[#allocation8 + $0x88] sm:$0xff] %v3404
    %4814 = vst [vmem:[#allocation8 + $0x90] sm:$0xff] %v4690
    %4815 = vst [vmem:[#allocation8 + $0x98] sm:$0xff] %v4692
    %4816 = vst [vmem:[#allocation8 + $0xa0] sm:$0xff] %v3406
    %4817 = vst [vmem:[#allocation8 + $0xa8] sm:$0xff] %v3408
    %4818 = vst [vmem:[#allocation8 + $0xb0] sm:$0xff] %v4694
    %4819 = vst [vmem:[#allocation8 + $0xb8] sm:$0xff] %v4696
    %4820 = vst [vmem:[#allocation8 + $0xc0] sm:$0xff] %v3412
    %4821 = vst [vmem:[#allocation8 + $0xc8] sm:$0xff] %v3414
    %4822 = vst [vmem:[#allocation8 + $0xd0] sm:$0xff] %v4700
    %4823 = vst [vmem:[#allocation8 + $0xd8] sm:$0xff] %v4702
    %4824 = vst [vmem:[#allocation8 + $0xe0] sm:$0xff] %v3416
    %4825 = vst [vmem:[#allocation8 + $0xe8] sm:$0xff] %v3418
    %4826 = vst [vmem:[#allocation8 + $0xf0] sm:$0xff] %v4704
    %4827 = vst [vmem:[#allocation8 + $0xf8] sm:$0xff] %v4706
    %4828 = vst [vmem:[#allocation8 + $0x100] sm:$0xff] %v3422
    %4829 = vst [vmem:[#allocation8 + $0x108] sm:$0xff] %v3424
    %4830 = vst [vmem:[#allocation8 + $0x110] sm:$0xff] %v4710
    %4831 = vst [vmem:[#allocation8 + $0x118] sm:$0xff] %v4712
    %4832 = vst [vmem:[#allocation8 + $0x120] sm:$0xff] %v3426
    %4833 = vst [vmem:[#allocation8 + $0x128] sm:$0xff] %v3428
    %4834 = vst [vmem:[#allocation8 + $0x130] sm:$0xff] %v4714
    %4835 = vst [vmem:[#allocation8 + $0x138] sm:$0xff] %v4716
    %4836 = vst [vmem:[#allocation8 + $0x140] sm:$0xff] %v3432
    %4837 = vst [vmem:[#allocation8 + $0x148] sm:$0xff] %v3434
    %4838 = vst [vmem:[#allocation8 + $0x150] sm:$0xff] %v4720
    %4839 = vst [vmem:[#allocation8 + $0x158] sm:$0xff] %v4722
    %4840 = vst [vmem:[#allocation8 + $0x160] sm:$0xff] %v3436
    %4841 = vst [vmem:[#allocation8 + $0x168] sm:$0xff] %v3438
    %4842 = vst [vmem:[#allocation8 + $0x170] sm:$0xff] %v4724
    %4843 = vst [vmem:[#allocation8 + $0x178] sm:$0xff] %v4726
    %4844 = vst [vmem:[#allocation8 + $0x180] sm:$0xff] %v3442
    %4845 = vst [vmem:[#allocation8 + $0x188] sm:$0xff] %v3444
    %4846 = vst [vmem:[#allocation8 + $0x190] sm:$0xff] %v4730
    %4847 = vst [vmem:[#allocation8 + $0x198] sm:$0xff] %v4732
    %4848 = vst [vmem:[#allocation8 + $0x1a0] sm:$0xff] %v3446
    %4849 = vst [vmem:[#allocation8 + $0x1a8] sm:$0xff] %v3448
    %4850 = vst [vmem:[#allocation8 + $0x1b0] sm:$0xff] %v4734
    %4851 = vst [vmem:[#allocation8 + $0x1b8] sm:$0xff] %v4736
    %4852 = vst [vmem:[#allocation8 + $0x1c0] sm:$0xff] %v3452
    %4853 = vst [vmem:[#allocation8 + $0x1c8] sm:$0xff] %v3454
    %4854 = vst [vmem:[#allocation8 + $0x1d0] sm:$0xff] %v4740
    %4855 = vst [vmem:[#allocation8 + $0x1d8] sm:$0xff] %v4742
    %4856 = vst [vmem:[#allocation8 + $0x1e0] sm:$0xff] %v3456
    %4857 = vst [vmem:[#allocation8 + $0x1e8] sm:$0xff] %v3458
    %4858 = vst [vmem:[#allocation8 + $0x1f0] sm:$0xff] %v4744
    %4859 = vst [vmem:[#allocation8 + $0x1f8] sm:$0xff] %v4746
    %4860 = vst [vmem:[#allocation8 + $0x200] sm:$0xff] %v3462
    %4861 = vst [vmem:[#allocation8 + $0x208] sm:$0xff] %v3464
    %4862 = vst [vmem:[#allocation8 + $0x210] sm:$0xff] %v4750
    %4863 = vst [vmem:[#allocation8 + $0x218] sm:$0xff] %v4752
    %4864 = vst [vmem:[#allocation8 + $0x220] sm:$0xff] %v3466
    %4865 = vst [vmem:[#allocation8 + $0x228] sm:$0xff] %v3468
    %4866 = vst [vmem:[#allocation8 + $0x230] sm:$0xff] %v4754
    %4867 = vst [vmem:[#allocation8 + $0x238] sm:$0xff] %v4756
    %4868 = vst [vmem:[#allocation8 + $0x240] sm:$0xff] %v3472
    %4869 = vst [vmem:[#allocation8 + $0x248] sm:$0xff] %v3474
    %4870 = vst [vmem:[#allocation8 + $0x250] sm:$0xff] %v4760
    %4871 = vst [vmem:[#allocation8 + $0x258] sm:$0xff] %v4762
    %4872 = vst [vmem:[#allocation8 + $0x260] sm:$0xff] %v3476
    %4873 = vst [vmem:[#allocation8 + $0x268] sm:$0xff] %v3478
    %4874 = vst [vmem:[#allocation8 + $0x270] sm:$0xff] %v4764
    %4875 = vst [vmem:[#allocation8 + $0x278] sm:$0xff] %v4766
    %4876 = vst [vmem:[#allocation8 + $0x280] sm:$0xff] %v3482
    %4877 = vst [vmem:[#allocation8 + $0x288] sm:$0xff] %v3484
    %4878 = vst [vmem:[#allocation8 + $0x290] sm:$0xff] %v4770
    %4879 = vst [vmem:[#allocation8 + $0x298] sm:$0xff] %v4772
    %4880 = vst [vmem:[#allocation8 + $0x2a0] sm:$0xff] %v3486
    %4881 = vst [vmem:[#allocation8 + $0x2a8] sm:$0xff] %v3488
    %4882 = vst [vmem:[#allocation8 + $0x2b0] sm:$0xff] %v4774
    %4883 = vst [vmem:[#allocation8 + $0x2b8] sm:$0xff] %v4776
    %4884 = vst [vmem:[#allocation8 + $0x2c0] sm:$0xff] %v3492
    %4885 = vst [vmem:[#allocation8 + $0x2c8] sm:$0xff] %v3494
    %4886 = vst [vmem:[#allocation8 + $0x2d0] sm:$0xff] %v4780
    %4887 = vst [vmem:[#allocation8 + $0x2d8] sm:$0xff] %v4782
    %4888 = vst [vmem:[#allocation8 + $0x2e0] sm:$0xff] %v3496
    %4889 = vst [vmem:[#allocation8 + $0x2e8] sm:$0xff] %v3498
    %4890 = vst [vmem:[#allocation8 + $0x2f0] sm:$0xff] %v4784
    %4891 = vst [vmem:[#allocation8 + $0x2f8] sm:$0xff] %v4786
    %4892 = vst [vmem:[#allocation8 + $0x300] sm:$0xf] %v3502
    %4893 = vst [vmem:[#allocation8 + $0x308] sm:$0xf] %v3504
    %4894 = vst [vmem:[#allocation8 + $0x310] sm:$0xf] %v4790
    %4895 = vst [vmem:[#allocation8 + $0x318] sm:$0xf] %v4792
    // Predicated region
    $region26: #{tpu_custom_call.1} parent=1 // pred_check
      _
    $region27: #{tpu_custom_call.1} parent=1 // pred_check_branch
      %4897 = sbr.rel (0) target = $region29
    $region28: #{tpu_custom_call.1} parent=1 // pred_region
      %s4899 = ssub.s32 12800, 12800
      %4900 = vsyncadd [#allocation4], %s4899
      %s4901 = sshll.u32 [#allocation8], 4
      %s4902 = int_to_ptr.vmem [resolvable:$true] %s4901
      %4907 = dma.vmem_to_hbm [thread:$0]  %s4902, 12800, %s3, [#allocation4], 512, 512, 32
    $region29: #{tpu_custom_call.1} parent=1 // pred_fallthru
      _
    // Predicated region
    $region30: #{tpu_custom_call.1} parent=1 // pred_check
      _
    $region31: #{tpu_custom_call.1} parent=1 // pred_check_branch
      %4909 = sbr.rel (0) target = $region33
    $region32: #{tpu_custom_call.1} parent=1 // pred_region
      %4910 = dma.done [#allocation4], 12800
    $region33: #{tpu_custom_call.1} parent=1 // pred_fallthru
      _
    %4911 = vsyncpa [#allocation3], 1
    %4912 = vsyncpa [#allocation6], 1
    %4913 = vsyncpa [#allocation4], 1

</llo_original>
